<compile_context>
chip_gen: v7x
topology: tpu7x:2x2x1
jax: 0.10.0
libtpu: 0.0.40
codegen_flags: <defaults>
</compile_context>

<pallas_src>
import functools

import jax
import jax.numpy as jnp
from jax import lax
from jax.experimental import pallas as pl
from jax.experimental.pallas import tpu as pltpu

MODEL_DIM = 64          # H
STATE_DIM = 128         # N (LRU state size)
NUM_CLASSES = 202
CLS_PAD = 256           # classifier output padded to a lane-dense width
STAGES = 5
IN_DIM = 2048
LN_EPS = 1e-5
ROW_TILE = 1024         # row tile for norm+embed (8 MiB/buffer f32)
BATCH_TILE = 8          # recurrence batch tile = one f32 sublane tile
SUB = 8


def _vmem_limit_bytes():
    """Generation-aware scoped-VMEM limit (v7x has only 64 MiB physical)."""
    cap = 128 * 1024 * 1024
    try:
        info = pltpu.get_tpu_info()
        cap = int(getattr(info, "vmem_capacity_bytes", cap) or cap)
    except Exception:
        pass
    return int(min((cap * 5) // 8, 48 * 1024 * 1024))


# --------------------------------------------------------------------------
# Kernel 1: fused LayerNorm(2048) + Linear(2048 -> 64), row-tiled + pipelined
# --------------------------------------------------------------------------
def _norm_embed_kernel(x_ref, g_ref, b_ref, w_ref, bias_ref, o_ref):
    x = x_ref[...].astype(jnp.float32)                        # [tile, 2048]
    # One-pass statistics: var = E[x^2] - E[x]^2 (single sweep over the vregs).
    mean = jnp.mean(x, axis=-1, keepdims=True)
    mean_sq = jnp.mean(x * x, axis=-1, keepdims=True)
    var = mean_sq - mean * mean
    xn = (x - mean) * lax.rsqrt(var + LN_EPS)
    xn = xn * g_ref[...] + b_ref[...]                          # LayerNorm affine
    # bf16 MXU operands, f32 accumulation.
    o_ref[...] = (
        jnp.dot(xn.astype(jnp.bfloat16), w_ref[...],
                preferred_element_type=jnp.float32)
        + bias_ref[...]
    )


def norm_embed(x2d, ln_g, ln_b, w_bf16, b):
    n = x2d.shape[0]
    tile = min(ROW_TILE, max(SUB, pl.cdiv(n, SUB) * SUB))
    n_pad = pl.cdiv(n, tile) * tile
    if n_pad != n:
        x2d = jnp.pad(x2d, ((0, n_pad - n), (0, 0)))
    out = pl.pallas_call(
        _norm_embed_kernel,
        out_shape=jax.ShapeDtypeStruct((n_pad, MODEL_DIM), jnp.float32),
        grid=(n_pad // tile,),
        in_specs=[
            pl.BlockSpec((tile, IN_DIM), lambda i: (i, 0)),        # x rows
            pl.BlockSpec((1, IN_DIM), lambda i: (0, 0)),           # ln gamma
            pl.BlockSpec((1, IN_DIM), lambda i: (0, 0)),           # ln beta
            pl.BlockSpec((IN_DIM, MODEL_DIM), lambda i: (0, 0)),   # emb W (bf16)
            pl.BlockSpec((1, MODEL_DIM), lambda i: (0, 0)),        # emb bias
        ],
        out_specs=pl.BlockSpec((tile, MODEL_DIM), lambda i: (i, 0)),
        compiler_params=pltpu.CompilerParams(
            dimension_semantics=("parallel",),
            vmem_limit_bytes=_vmem_limit_bytes()),
    )(x2d, ln_g, ln_b, w_bf16, b)
    return out[:n] if n_pad != n else out


# --------------------------------------------------------------------------
# Kernel 2: 5 LRU stages + classifiers fused; grid = (batch_tiles, STAGES).
#   - h resident in VMEM scratch across the (sequential) stage axis
#   - fwd/bwd recurrences fused into ONE unrolled fori_loop; batch on sublanes
#     (BATCH_TILE=8 -> full-tile unmasked vst/vld every step)
#   - bf16 MXU operands everywhere (weights stored bf16; activations cast once)
# --------------------------------------------------------------------------
def _lru_stages_kernel(h0_ref, bcat_ref, lre_ref, lim_ref, call_ref, d_ref,
                       clsw_ref, clsb_ref, o_ref,
                       h_res, bu_ref, hs_ref, *, bt, t_len):
    s = pl.program_id(1)
    n = STATE_DIM

    @pl.when(s == 0)
    def _():
        h_res[...] = h0_ref[0]                                 # [T*bt, 64] f32

    u = h_res[...]                                             # [T*bt, 64] f32

    # Input projection: Bu (complex), gamma pre-folded into the bf16 weights.
    # bu lanes: [bu_re (0:128) | bu_im (128:256)]
    bu_ref[...] = jnp.dot(u.astype(jnp.bfloat16), bcat_ref[0],
                          preferred_element_type=jnp.float32)

    # Hoisted sublane broadcasts (loop constants).
    lre = jnp.broadcast_to(lre_ref[0], (bt, n))
    lim = jnp.broadcast_to(lim_ref[0], (bt, n))
    zero = jnp.zeros((bt, n), jnp.float32)

    # Forward step at time t and backward step at time t_len-1-t fused into one
    # iteration (independent work -> co-issues VPU/vld/vst with scalar slots).
    def step_pair(t, carry):
        hf_re, hf_im, hb_re, hb_im = carry
        off_f = pl.multiple_of(t * bt, bt)
        off_b = pl.multiple_of((t_len - 1 - t) * bt, bt)
        bfr = bu_ref[pl.ds(off_f, bt), 0:n]
        bfi = bu_ref[pl.ds(off_f, bt), n:2 * n]
        bbr = bu_ref[pl.ds(off_b, bt), 0:n]
        bbi = bu_ref[pl.ds(off_b, bt), n:2 * n]
        nf_re = lre * hf_re - lim * hf_im + bfr
        nf_im = lre * hf_im + lim * hf_re + bfi
        nb_re = lre * hb_re - lim * hb_im + bbr
        nb_im = lre * hb_im + lim * hb_re + bbi
        hs_ref[pl.ds(off_f, bt), 0:n] = nf_re
        hs_ref[pl.ds(off_f, bt), n:2 * n] = nf_im
        hs_ref[pl.ds(off_b, bt), 2 * n:3 * n] = nb_re
        hs_ref[pl.ds(off_b, bt), 3 * n:4 * n] = nb_im
        return (nf_re, nf_im, nb_re, nb_im)

    unroll = t_len if t_len <= 8 else 4
    lax.fori_loop(0, t_len, step_pair, (zero, zero, zero, zero), unroll=unroll)

    # y = Re(Cf hf) + Re(Cb hb) + D*u  (minus signs folded into C_all rows).
    y = (jnp.dot(hs_ref[...].astype(jnp.bfloat16), call_ref[0],
                 preferred_element_type=jnp.float32)
         + u * d_ref[0])
    # TODO(synk): PyTorch nn.GELU defaults to exact erf; tanh approximation used.
    h_new = jax.nn.gelu(y, approximate=True) + u               # residual
    h_res[...] = h_new                                         # carried to next stage

    # Fused per-stage classifier (lane-dense 256-wide output, sliced outside).
    o_ref[0, 0] = (jnp.dot(h_new.astype(jnp.bfloat16), clsw_ref[0],
                           preferred_element_type=jnp.float32)
                   + clsb_ref[0])


def lru_stages(h0, p, *, bt, t_len, num_bt):
    tb = t_len * bt
    h = MODEL_DIM
    n2 = 2 * STATE_DIM
    kernel = functools.partial(_lru_stages_kernel, bt=bt, t_len=t_len)
    return pl.pallas_call(
        kernel,
        out_shape=jax.ShapeDtypeStruct((num_bt, STAGES, tb, CLS_PAD),
                                       jnp.float32),
        grid=(num_bt, STAGES),
        in_specs=[
            pl.BlockSpec((1, tb, h), lambda b, s: (b, 0, 0)),           # h0
            pl.BlockSpec((1, h, n2), lambda b, s: (s, 0, 0)),           # B_cat (bf16)
            pl.BlockSpec((1, 1, STATE_DIM), lambda b, s: (s, 0, 0)),    # lambda_re
            pl.BlockSpec((1, 1, STATE_DIM), lambda b, s: (s, 0, 0)),    # lambda_im
            pl.BlockSpec((1, 2 * n2, h), lambda b, s: (s, 0, 0)),       # C_all (bf16)
            pl.BlockSpec((1, 1, h), lambda b, s: (s, 0, 0)),            # D
            pl.BlockSpec((1, h, CLS_PAD), lambda b, s: (s, 0, 0)),      # cls W (bf16)
            pl.BlockSpec((1, 1, CLS_PAD), lambda b, s: (s, 0, 0)),      # cls b
        ],
        out_specs=pl.BlockSpec((1, 1, tb, CLS_PAD), lambda b, s: (b, s, 0, 0)),
        scratch_shapes=[
            pltpu.VMEM((tb, h), jnp.float32),        # resident h across stages
            pltpu.VMEM((tb, n2), jnp.float32),       # Bu
            pltpu.VMEM((tb, 2 * n2), jnp.float32),   # [hf_re|hf_im|hb_re|hb_im]
        ],
        compiler_params=pltpu.CompilerParams(
            dimension_semantics=("parallel", "arbitrary"),
            vmem_limit_bytes=_vmem_limit_bytes()),
    )(h0, p["B_cat"], p["lam_re"], p["lam_im"], p["C_all"], p["D"],
      p["cls_w"], p["cls_b"])


# --------------------------------------------------------------------------
# Parameter initialization (deterministic, synthetic) with fused weight layouts
# --------------------------------------------------------------------------
def init_params(key):
    params = {
        "ln_g": jnp.ones((1, IN_DIM), jnp.float32),
        "ln_b": jnp.zeros((1, IN_DIM), jnp.float32),
    }
    k_emb, key = jax.random.split(key)
    params["emb_w"] = (jax.random.normal(k_emb, (IN_DIM, MODEL_DIM), jnp.float32)
                       * 0.02).astype(jnp.bfloat16)
    params["emb_b"] = jnp.zeros((1, MODEL_DIM), jnp.float32)

    b_cat, lam_re, lam_im, c_all, d_vec, cls_w, cls_b = [], [], [], [], [], [], []
    for s in range(STAGES):
        ks = jax.random.fold_in(key, s)
        k = jax.random.split(ks, 9)
        r = jax.random.uniform(k[0], (STATE_DIM,), minval=0.9, maxval=0.999)
        theta = jax.random.uniform(k[1], (STATE_DIM,), minval=0.0, maxval=jnp.pi / 10)
        gamma = jnp.sqrt(1.0 - r * r)
        B_re = jax.random.normal(k[2], (MODEL_DIM, STATE_DIM)) / jnp.sqrt(2.0 * MODEL_DIM)
        B_im = jax.random.normal(k[3], (MODEL_DIM, STATE_DIM)) / jnp.sqrt(2.0 * MODEL_DIM)
        Cf_re = jax.random.normal(k[4], (STATE_DIM, MODEL_DIM)) / jnp.sqrt(STATE_DIM)
        Cf_im = jax.random.normal(k[5], (STATE_DIM, MODEL_DIM)) / jnp.sqrt(STATE_DIM)
        Cb_re = jax.random.normal(k[6], (STATE_DIM, MODEL_DIM)) / jnp.sqrt(STATE_DIM)
        Cb_im = jax.random.normal(k[7], (STATE_DIM, MODEL_DIM)) / jnp.sqrt(STATE_DIM)

        lam_re.append((r * jnp.cos(theta)).reshape(1, STATE_DIM))
        lam_im.append((r * jnp.sin(theta)).reshape(1, STATE_DIM))
        # gamma folded into the input projection: bu = u @ [B_re*g | B_im*g]
        b_cat.append(jnp.concatenate([B_re * gamma, B_im * gamma], axis=1))
        # output-projection signs folded: y = [hf_re|hf_im|hb_re|hb_im] @ C_all
        c_all.append(jnp.concatenate([Cf_re, -Cf_im, Cb_re, -Cb_im], axis=0))
        d_vec.append(jax.random.normal(k[8], (1, MODEL_DIM)))

        w = (jax.random.normal(jax.random.fold_in(ks, 100),
                               (MODEL_DIM, NUM_CLASSES)) / jnp.sqrt(MODEL_DIM))
        cls_w.append(jnp.pad(w, ((0, 0), (0, CLS_PAD - NUM_CLASSES))))
        cls_b.append(jnp.zeros((1, CLS_PAD)))

    params["stages"] = {
        "B_cat": jnp.stack(b_cat).astype(jnp.bfloat16),    # [S, 64, 256]  bf16
        "lam_re": jnp.stack(lam_re).astype(jnp.float32),   # [S, 1, 128]
        "lam_im": jnp.stack(lam_im).astype(jnp.float32),   # [S, 1, 128]
        "C_all": jnp.stack(c_all).astype(jnp.bfloat16),    # [S, 512, 64]  bf16
        "D": jnp.stack(d_vec).astype(jnp.float32),         # [S, 1, 64]
        "cls_w": jnp.stack(cls_w).astype(jnp.bfloat16),    # [S, 64, 256]  bf16
        "cls_b": jnp.stack(cls_b).astype(jnp.float32),     # [S, 1, 256]
    }
    return params


# --------------------------------------------------------------------------
# Full forward pass (mirrors TSMLRTAS.forward)
# --------------------------------------------------------------------------
@jax.jit
def tsmlrtas_forward(x, params):
    B, T, D = x.shape
    x2d = x.reshape(B * T, D)
    h = norm_embed(x2d, params["ln_g"], params["ln_b"],
                   params["emb_w"], params["emb_b"])             # [B*T, 64] f32

    # Pad the batch to a multiple of BATCH_TILE (f32 sublane tile) and lay out
    # as [num_bt, T*bt, H], time-major within each batch tile (row = t*bt + b).
    # Padded rows are zeros and stay in their own sublanes through the
    # batch-independent recurrence/classifier, then get sliced away.
    bt = BATCH_TILE
    b_pad = pl.cdiv(B, bt) * bt
    num_bt = b_pad // bt
    hb = h.reshape(B, T, MODEL_DIM)
    if b_pad != B:
        hb = jnp.pad(hb, ((0, b_pad - B), (0, 0), (0, 0)))
    h0 = (hb.reshape(num_bt, bt, T, MODEL_DIM)
             .transpose(0, 2, 1, 3)                      # [num_bt, T, bt, H]
             .reshape(num_bt, T * bt, MODEL_DIM))

    logits = lru_stages(h0, params["stages"], bt=bt, t_len=T, num_bt=num_bt)
    # [num_bt, S, T*bt, CLS_PAD] -> [S, B, T, 202]
    out = (logits.reshape(num_bt, STAGES, T, bt, CLS_PAD)
                 .transpose(1, 0, 3, 2, 4)               # [S, num_bt, bt, T, C]
                 .reshape(STAGES, b_pad, T, CLS_PAD))
    return out[:, :B, :, :NUM_CLASSES]                   # [S, B, T, 202]


if __name__ == "__main__":
    key = jax.random.PRNGKey(0)
    k_x, k_p = jax.random.split(key)

    B, T = 2, 8
    x = jax.random.normal(k_x, (B, T, IN_DIM), jnp.float32)
    params = init_params(k_p)

    out = tsmlrtas_forward(x, params)
    out = jax.block_until_ready(out)
    assert out.shape == (STAGES, B, T, NUM_CLASSES), out.shape
    assert out.dtype == jnp.float32
    assert bool(jnp.all(jnp.isfinite(out)))
    print("KERNEL_OK")
</pallas_src>

<mosaic_0001>
module attributes {stable_mosaic.version = 11 : i64} {
  func.func @_norm_embed_kernel(%arg0: i32, %arg1: memref<16x2048xf32, #tpu.memory_space<vmem>>, %arg2: memref<1x2048xf32, #tpu.memory_space<vmem>>, %arg3: memref<1x2048xf32, #tpu.memory_space<vmem>>, %arg4: memref<2048x64xbf16, #tpu.memory_space<vmem>>, %arg5: memref<1x64xf32, #tpu.memory_space<vmem>>, %arg6: memref<16x64xf32, #tpu.memory_space<vmem>>) attributes {dimension_semantics = [#tpu.dimension_semantics<parallel>], iteration_bounds = array<i64: 1>, scalar_prefetch = 0 : i64, scratch_operands = 0 : i64, tpu.core_type = #tpu.core_type<tc>, window_params = [{transform_indices = @transform_0, window_bounds = array<i64: 16, 2048>}, {pipeline_mode = #tpu.pipeline_mode<synchronous>, transform_indices = @transform_1, window_bounds = array<i64: 1, 2048>}, {pipeline_mode = #tpu.pipeline_mode<synchronous>, transform_indices = @transform_2, window_bounds = array<i64: 1, 2048>}, {pipeline_mode = #tpu.pipeline_mode<synchronous>, transform_indices = @transform_3, window_bounds = array<i64: 2048, 64>}, {pipeline_mode = #tpu.pipeline_mode<synchronous>, transform_indices = @transform_4, window_bounds = array<i64: 1, 64>}, {transform_indices = @transform_5, window_bounds = array<i64: 16, 64>}]} {
    %c0 = arith.constant 0 : index
    %c0_0 = arith.constant 0 : index
    %0 = vector.load %arg1[%c0, %c0_0] : memref<16x2048xf32, #tpu.memory_space<vmem>>, vector<16x2048xf32>
    %cst = arith.constant dense<0.000000e+00> : vector<16xf32>
    %1 = vector.multi_reduction <add>, %0, %cst [1] : vector<16x2048xf32> to vector<16xf32>
    %2 = vector.shape_cast %1 : vector<16xf32> to vector<16x1xf32>
    %cst_1 = arith.constant 2.048000e+03 : f32
    %3 = vector.broadcast %cst_1 : f32 to vector<16x1xf32>
    %4 = arith.divf %2, %3 : vector<16x1xf32>
    %5 = arith.mulf %0, %0 : vector<16x2048xf32>
    %cst_2 = arith.constant dense<0.000000e+00> : vector<16xf32>
    %6 = vector.multi_reduction <add>, %5, %cst_2 [1] : vector<16x2048xf32> to vector<16xf32>
    %7 = vector.shape_cast %6 : vector<16xf32> to vector<16x1xf32>
    %cst_3 = arith.constant 2.048000e+03 : f32
    %8 = vector.broadcast %cst_3 : f32 to vector<16x1xf32>
    %9 = arith.divf %7, %8 : vector<16x1xf32>
    %10 = arith.mulf %4, %4 : vector<16x1xf32>
    %11 = arith.subf %9, %10 : vector<16x1xf32>
    %12 = vector.broadcast %4 : vector<16x1xf32> to vector<16x2048xf32>
    %13 = arith.subf %0, %12 : vector<16x2048xf32>
    %cst_4 = arith.constant 9.99999974E-6 : f32
    %14 = vector.broadcast %cst_4 : f32 to vector<16x1xf32>
    %15 = arith.addf %11, %14 : vector<16x1xf32>
    %16 = math.rsqrt %15 : vector<16x1xf32>
    %17 = vector.broadcast %16 : vector<16x1xf32> to vector<16x2048xf32>
    %18 = arith.mulf %13, %17 : vector<16x2048xf32>
    %c0_5 = arith.constant 0 : index
    %c0_6 = arith.constant 0 : index
    %19 = vector.load %arg2[%c0_5, %c0_6] : memref<1x2048xf32, #tpu.memory_space<vmem>>, vector<1x2048xf32>
    %20 = vector.broadcast %19 : vector<1x2048xf32> to vector<16x2048xf32>
    %21 = arith.mulf %18, %20 : vector<16x2048xf32>
    %c0_7 = arith.constant 0 : index
    %c0_8 = arith.constant 0 : index
    %22 = vector.load %arg3[%c0_7, %c0_8] : memref<1x2048xf32, #tpu.memory_space<vmem>>, vector<1x2048xf32>
    %23 = vector.broadcast %22 : vector<1x2048xf32> to vector<16x2048xf32>
    %24 = arith.addf %21, %23 : vector<16x2048xf32>
    %25 = arith.truncf %24 : vector<16x2048xf32> to vector<16x2048xbf16>
    %c0_9 = arith.constant 0 : index
    %c0_10 = arith.constant 0 : index
    %26 = vector.load %arg4[%c0_9, %c0_10] : memref<2048x64xbf16, #tpu.memory_space<vmem>>, vector<2048x64xbf16>
    %cst_11 = arith.constant dense<0.000000e+00> : vector<16x64xf32>
    %27 = tpu.matmul %25, %26, %cst_11 {dimension_numbers = #tpu.dot_dimension_numbers<[1], [0], [0], [1], [0, 0, 1, 1], [], []>} : vector<16x2048xbf16>, vector<2048x64xbf16>, vector<16x64xf32> -> vector<16x64xf32>
    %c0_12 = arith.constant 0 : index
    %c0_13 = arith.constant 0 : index
    %28 = vector.load %arg5[%c0_12, %c0_13] : memref<1x64xf32, #tpu.memory_space<vmem>>, vector<1x64xf32>
    %29 = vector.broadcast %28 : vector<1x64xf32> to vector<16x64xf32>
    %30 = arith.addf %27, %29 : vector<16x64xf32>
    %c0_14 = arith.constant 0 : index
    %c0_15 = arith.constant 0 : index
    %31 = vector.load %arg6[%c0_14, %c0_15] : memref<16x64xf32, #tpu.memory_space<vmem>>, vector<16x64xf32>
    tpu.vector_store %arg6[%c0_14, %c0_15], %30 {strides = array<i32>} : memref<16x64xf32, #tpu.memory_space<vmem>>, vector<16x64xf32>,
    return
  }
  func.func @transform_0(%arg0: i32) -> (i32, i32) {
    %c0_i32 = arith.constant 0 : i32
    %c0_i32_0 = arith.constant 0 : i32
    return %arg0, %c0_i32 : i32, i32
  }
  func.func @transform_1(%arg0: i32) -> (i32, i32) {
    %c0_i32 = arith.constant 0 : i32
    %c0_i32_0 = arith.constant 0 : i32
    %c0_i32_1 = arith.constant 0 : i32
    return %c0_i32, %c0_i32_0 : i32, i32
  }
  func.func @transform_2(%arg0: i32) -> (i32, i32) {
    %c0_i32 = arith.constant 0 : i32
    %c0_i32_0 = arith.constant 0 : i32
    %c0_i32_1 = arith.constant 0 : i32
    return %c0_i32, %c0_i32_0 : i32, i32
  }
  func.func @transform_3(%arg0: i32) -> (i32, i32) {
    %c0_i32 = arith.constant 0 : i32
    %c0_i32_0 = arith.constant 0 : i32
    %c0_i32_1 = arith.constant 0 : i32
    return %c0_i32, %c0_i32_0 : i32, i32
  }
  func.func @transform_4(%arg0: i32) -> (i32, i32) {
    %c0_i32 = arith.constant 0 : i32
    %c0_i32_0 = arith.constant 0 : i32
    %c0_i32_1 = arith.constant 0 : i32
    return %c0_i32, %c0_i32_0 : i32, i32
  }
  func.func @transform_5(%arg0: i32) -> (i32, i32) {
    %c0_i32 = arith.constant 0 : i32
    %c0_i32_0 = arith.constant 0 : i32
    return %arg0, %c0_i32 : i32, i32
  }
}

module attributes {stable_mosaic.version = 11 : i64} {
  func.func @_lru_stages_kernel(%arg0: i32, %arg1: i32, %arg2: memref<1x64x64xf32, #tpu.memory_space<vmem>>, %arg3: memref<1x64x256xbf16, #tpu.memory_space<vmem>>, %arg4: memref<1x1x128xf32, #tpu.memory_space<vmem>>, %arg5: memref<1x1x128xf32, #tpu.memory_space<vmem>>, %arg6: memref<1x512x64xbf16, #tpu.memory_space<vmem>>, %arg7: memref<1x1x64xf32, #tpu.memory_space<vmem>>, %arg8: memref<1x64x256xbf16, #tpu.memory_space<vmem>>, %arg9: memref<1x1x256xf32, #tpu.memory_space<vmem>>, %arg10: memref<1x1x64x256xf32, #tpu.memory_space<vmem>>, %arg11: memref<64x64xf32, #tpu.memory_space<vmem>>, %arg12: memref<64x256xf32, #tpu.memory_space<vmem>>, %arg13: memref<64x512xf32, #tpu.memory_space<vmem>>) attributes {dimension_semantics = [#tpu.dimension_semantics<parallel>, #tpu.dimension_semantics<arbitrary>], iteration_bounds = array<i64: 1, 5>, scalar_prefetch = 0 : i64, scratch_operands = 3 : i64, tpu.core_type = #tpu.core_type<tc>, window_params = [{transform_indices = @transform_0, window_bounds = array<i64: 1, 64, 64>}, {transform_indices = @transform_1, window_bounds = array<i64: 1, 64, 256>}, {transform_indices = @transform_2, window_bounds = array<i64: 1, 1, 128>}, {transform_indices = @transform_3, window_bounds = array<i64: 1, 1, 128>}, {transform_indices = @transform_4, window_bounds = array<i64: 1, 512, 64>}, {transform_indices = @transform_5, window_bounds = array<i64: 1, 1, 64>}, {transform_indices = @transform_6, window_bounds = array<i64: 1, 64, 256>}, {transform_indices = @transform_7, window_bounds = array<i64: 1, 1, 256>}, {transform_indices = @transform_8, window_bounds = array<i64: 1, 1, 64, 256>}]} {
    %c0_i32 = arith.constant 0 : i32
    %0 = arith.cmpi eq, %arg1, %c0_i32 : i32
    %1 = arith.extui %0 : i1 to i32
    %c0_i32_0 = arith.constant 0 : i32
    %2 = arith.cmpi ne, %1, %c0_i32_0 : i32
    scf.if %2 {
      %c0_126 = arith.constant 0 : index
      %c0_127 = arith.constant 0 : index
      %c0_128 = arith.constant 0 : index
      %350 = vector.load %arg2[%c0_126, %c0_127, %c0_128] : memref<1x64x64xf32, #tpu.memory_space<vmem>>, vector<1x64x64xf32>
      %351 = vector.shape_cast %350 : vector<1x64x64xf32> to vector<64x64xf32>
      %c0_129 = arith.constant 0 : index
      %c0_130 = arith.constant 0 : index
      %352 = vector.load %arg11[%c0_129, %c0_130] : memref<64x64xf32, #tpu.memory_space<vmem>>, vector<64x64xf32>
      tpu.vector_store %arg11[%c0_129, %c0_130], %351 {strides = array<i32>} : memref<64x64xf32, #tpu.memory_space<vmem>>, vector<64x64xf32>,
    } else {
    }
    %c0 = arith.constant 0 : index
    %c0_1 = arith.constant 0 : index
    %3 = vector.load %arg11[%c0, %c0_1] : memref<64x64xf32, #tpu.memory_space<vmem>>, vector<64x64xf32>
    %4 = arith.truncf %3 : vector<64x64xf32> to vector<64x64xbf16>
    %c0_2 = arith.constant 0 : index
    %c0_3 = arith.constant 0 : index
    %c0_4 = arith.constant 0 : index
    %5 = vector.load %arg3[%c0_2, %c0_3, %c0_4] : memref<1x64x256xbf16, #tpu.memory_space<vmem>>, vector<1x64x256xbf16>
    %6 = vector.shape_cast %5 : vector<1x64x256xbf16> to vector<64x256xbf16>
    %cst = arith.constant dense<0.000000e+00> : vector<64x256xf32>
    %7 = tpu.matmul %4, %6, %cst {dimension_numbers = #tpu.dot_dimension_numbers<[1], [0], [0], [1], [0, 0, 1, 1], [], []>} : vector<64x64xbf16>, vector<64x256xbf16>, vector<64x256xf32> -> vector<64x256xf32>
    %c0_5 = arith.constant 0 : index
    %c0_6 = arith.constant 0 : index
    %8 = vector.load %arg12[%c0_5, %c0_6] : memref<64x256xf32, #tpu.memory_space<vmem>>, vector<64x256xf32>
    tpu.vector_store %arg12[%c0_5, %c0_6], %7 {strides = array<i32>} : memref<64x256xf32, #tpu.memory_space<vmem>>, vector<64x256xf32>,
    %c0_7 = arith.constant 0 : index
    %c0_8 = arith.constant 0 : index
    %c0_9 = arith.constant 0 : index
    %9 = vector.load %arg4[%c0_7, %c0_8, %c0_9] : memref<1x1x128xf32, #tpu.memory_space<vmem>>, vector<1x1x128xf32>
    %10 = vector.shape_cast %9 : vector<1x1x128xf32> to vector<1x128xf32>
    %11 = vector.shape_cast %10 : vector<1x128xf32> to vector<1x128xf32>
    %12 = vector.broadcast %11 : vector<1x128xf32> to vector<8x128xf32>
    %c0_10 = arith.constant 0 : index
    %c0_11 = arith.constant 0 : index
    %c0_12 = arith.constant 0 : index
    %13 = vector.load %arg5[%c0_10, %c0_11, %c0_12] : memref<1x1x128xf32, #tpu.memory_space<vmem>>, vector<1x1x128xf32>
    %14 = vector.shape_cast %13 : vector<1x1x128xf32> to vector<1x128xf32>
    %15 = vector.shape_cast %14 : vector<1x128xf32> to vector<1x128xf32>
    %16 = vector.broadcast %15 : vector<1x128xf32> to vector<8x128xf32>
    %cst_13 = arith.constant 0.000000e+00 : f32
    %17 = vector.broadcast %cst_13 : f32 to vector<8x128xf32>
    %c0_i32_14 = arith.constant 0 : i32
    %c8_i32 = arith.constant 8 : i32
    %18 = arith.muli %c0_i32_14, %c8_i32 : i32
    %19 = tpu.assume_multiple %18, 8 : i32
    %c7_i32 = arith.constant 7 : i32
    %20 = arith.subi %c7_i32, %c0_i32_14 : i32
    %c8_i32_15 = arith.constant 8 : i32
    %21 = arith.muli %20, %c8_i32_15 : i32
    %22 = tpu.assume_multiple %21, 8 : i32
    %23 = arith.index_cast %19 : i32 to index
    %c0_16 = arith.constant 0 : index
    %24 = vector.load %arg12[%23, %c0_16] : memref<64x256xf32, #tpu.memory_space<vmem>>, vector<8x128xf32>
    %25 = arith.index_cast %19 : i32 to index
    %c128 = arith.constant 128 : index
    %26 = vector.load %arg12[%25, %c128] : memref<64x256xf32, #tpu.memory_space<vmem>>, vector<8x128xf32>
    %27 = arith.index_cast %22 : i32 to index
    %c0_17 = arith.constant 0 : index
    %28 = vector.load %arg12[%27, %c0_17] : memref<64x256xf32, #tpu.memory_space<vmem>>, vector<8x128xf32>
    %29 = arith.index_cast %22 : i32 to index
    %c128_18 = arith.constant 128 : index
    %30 = vector.load %arg12[%29, %c128_18] : memref<64x256xf32, #tpu.memory_space<vmem>>, vector<8x128xf32>
    %31 = arith.mulf %12, %17 : vector<8x128xf32>
    %32 = arith.mulf %16, %17 : vector<8x128xf32>
    %33 = arith.subf %31, %32 : vector<8x128xf32>
    %34 = arith.addf %33, %24 : vector<8x128xf32>
    %35 = arith.mulf %12, %17 : vector<8x128xf32>
    %36 = arith.mulf %16, %17 : vector<8x128xf32>
    %37 = arith.addf %35, %36 : vector<8x128xf32>
    %38 = arith.addf %37, %26 : vector<8x128xf32>
    %39 = arith.mulf %12, %17 : vector<8x128xf32>
    %40 = arith.mulf %16, %17 : vector<8x128xf32>
    %41 = arith.subf %39, %40 : vector<8x128xf32>
    %42 = arith.addf %41, %28 : vector<8x128xf32>
    %43 = arith.mulf %12, %17 : vector<8x128xf32>
    %44 = arith.mulf %16, %17 : vector<8x128xf32>
    %45 = arith.addf %43, %44 : vector<8x128xf32>
    %46 = arith.addf %45, %30 : vector<8x128xf32>
    %47 = arith.index_cast %19 : i32 to index
    %c0_19 = arith.constant 0 : index
    %48 = vector.load %arg13[%47, %c0_19] : memref<64x512xf32, #tpu.memory_space<vmem>>, vector<8x128xf32>
    tpu.vector_store %arg13[%47, %c0_19], %34 {strides = array<i32>} : memref<64x512xf32, #tpu.memory_space<vmem>>, vector<8x128xf32>,
    %49 = arith.index_cast %19 : i32 to index
    %c128_20 = arith.constant 128 : index
    %50 = vector.load %arg13[%49, %c128_20] : memref<64x512xf32, #tpu.memory_space<vmem>>, vector<8x128xf32>
    tpu.vector_store %arg13[%49, %c128_20], %38 {strides = array<i32>} : memref<64x512xf32, #tpu.memory_space<vmem>>, vector<8x128xf32>,
    %51 = arith.index_cast %22 : i32 to index
    %c256 = arith.constant 256 : index
    %52 = vector.load %arg13[%51, %c256] : memref<64x512xf32, #tpu.memory_space<vmem>>, vector<8x128xf32>
    tpu.vector_store %arg13[%51, %c256], %42 {strides = array<i32>} : memref<64x512xf32, #tpu.memory_space<vmem>>, vector<8x128xf32>,
    %53 = arith.index_cast %22 : i32 to index
    %c384 = arith.constant 384 : index
    %54 = vector.load %arg13[%53, %c384] : memref<64x512xf32, #tpu.memory_space<vmem>>, vector<8x128xf32>
    tpu.vector_store %arg13[%53, %c384], %46 {strides = array<i32>} : memref<64x512xf32, #tpu.memory_space<vmem>>, vector<8x128xf32>,
    %c1_i32 = arith.constant 1 : i32
    %c8_i32_21 = arith.constant 8 : i32
    %55 = arith.muli %c1_i32, %c8_i32_21 : i32
    %56 = tpu.assume_multiple %55, 8 : i32
    %c7_i32_22 = arith.constant 7 : i32
    %57 = arith.subi %c7_i32_22, %c1_i32 : i32
    %c8_i32_23 = arith.constant 8 : i32
    %58 = arith.muli %57, %c8_i32_23 : i32
    %59 = tpu.assume_multiple %58, 8 : i32
    %60 = arith.index_cast %56 : i32 to index
    %c0_24 = arith.constant 0 : index
    %61 = vector.load %arg12[%60, %c0_24] : memref<64x256xf32, #tpu.memory_space<vmem>>, vector<8x128xf32>
    %62 = arith.index_cast %56 : i32 to index
    %c128_25 = arith.constant 128 : index
    %63 = vector.load %arg12[%62, %c128_25] : memref<64x256xf32, #tpu.memory_space<vmem>>, vector<8x128xf32>
    %64 = arith.index_cast %59 : i32 to index
    %c0_26 = arith.constant 0 : index
    %65 = vector.load %arg12[%64, %c0_26] : memref<64x256xf32, #tpu.memory_space<vmem>>, vector<8x128xf32>
    %66 = arith.index_cast %59 : i32 to index
    %c128_27 = arith.constant 128 : index
    %67 = vector.load %arg12[%66, %c128_27] : memref<64x256xf32, #tpu.memory_space<vmem>>, vector<8x128xf32>
    %68 = arith.mulf %12, %34 : vector<8x128xf32>
    %69 = arith.mulf %16, %38 : vector<8x128xf32>
    %70 = arith.subf %68, %69 : vector<8x128xf32>
    %71 = arith.addf %70, %61 : vector<8x128xf32>
    %72 = arith.mulf %12, %38 : vector<8x128xf32>
    %73 = arith.mulf %16, %34 : vector<8x128xf32>
    %74 = arith.addf %72, %73 : vector<8x128xf32>
    %75 = arith.addf %74, %63 : vector<8x128xf32>
    %76 = arith.mulf %12, %42 : vector<8x128xf32>
    %77 = arith.mulf %16, %46 : vector<8x128xf32>
    %78 = arith.subf %76, %77 : vector<8x128xf32>
    %79 = arith.addf %78, %65 : vector<8x128xf32>
    %80 = arith.mulf %12, %46 : vector<8x128xf32>
    %81 = arith.mulf %16, %42 : vector<8x128xf32>
    %82 = arith.addf %80, %81 : vector<8x128xf32>
    %83 = arith.addf %82, %67 : vector<8x128xf32>
    %84 = arith.index_cast %56 : i32 to index
    %c0_28 = arith.constant 0 : index
    %85 = vector.load %arg13[%84, %c0_28] : memref<64x512xf32, #tpu.memory_space<vmem>>, vector<8x128xf32>
    tpu.vector_store %arg13[%84, %c0_28], %71 {strides = array<i32>} : memref<64x512xf32, #tpu.memory_space<vmem>>, vector<8x128xf32>,
    %86 = arith.index_cast %56 : i32 to index
    %c128_29 = arith.constant 128 : index
    %87 = vector.load %arg13[%86, %c128_29] : memref<64x512xf32, #tpu.memory_space<vmem>>, vector<8x128xf32>
    tpu.vector_store %arg13[%86, %c128_29], %75 {strides = array<i32>} : memref<64x512xf32, #tpu.memory_space<vmem>>, vector<8x128xf32>,
    %88 = arith.index_cast %59 : i32 to index
    %c256_30 = arith.constant 256 : index
    %89 = vector.load %arg13[%88, %c256_30] : memref<64x512xf32, #tpu.memory_space<vmem>>, vector<8x128xf32>
    tpu.vector_store %arg13[%88, %c256_30], %79 {strides = array<i32>} : memref<64x512xf32, #tpu.memory_space<vmem>>, vector<8x128xf32>,
    %90 = arith.index_cast %59 : i32 to index
    %c384_31 = arith.constant 384 : index
    %91 = vector.load %arg13[%90, %c384_31] : memref<64x512xf32, #tpu.memory_space<vmem>>, vector<8x128xf32>
    tpu.vector_store %arg13[%90, %c384_31], %83 {strides = array<i32>} : memref<64x512xf32, #tpu.memory_space<vmem>>, vector<8x128xf32>,
    %c2_i32 = arith.constant 2 : i32
    %c8_i32_32 = arith.constant 8 : i32
    %92 = arith.muli %c2_i32, %c8_i32_32 : i32
    %93 = tpu.assume_multiple %92, 8 : i32
    %c7_i32_33 = arith.constant 7 : i32
    %94 = arith.subi %c7_i32_33, %c2_i32 : i32
    %c8_i32_34 = arith.constant 8 : i32
    %95 = arith.muli %94, %c8_i32_34 : i32
    %96 = tpu.assume_multiple %95, 8 : i32
    %97 = arith.index_cast %93 : i32 to index
    %c0_35 = arith.constant 0 : index
    %98 = vector.load %arg12[%97, %c0_35] : memref<64x256xf32, #tpu.memory_space<vmem>>, vector<8x128xf32>
    %99 = arith.index_cast %93 : i32 to index
    %c128_36 = arith.constant 128 : index
    %100 = vector.load %arg12[%99, %c128_36] : memref<64x256xf32, #tpu.memory_space<vmem>>, vector<8x128xf32>
    %101 = arith.index_cast %96 : i32 to index
    %c0_37 = arith.constant 0 : index
    %102 = vector.load %arg12[%101, %c0_37] : memref<64x256xf32, #tpu.memory_space<vmem>>, vector<8x128xf32>
    %103 = arith.index_cast %96 : i32 to index
    %c128_38 = arith.constant 128 : index
    %104 = vector.load %arg12[%103, %c128_38] : memref<64x256xf32, #tpu.memory_space<vmem>>, vector<8x128xf32>
    %105 = arith.mulf %12, %71 : vector<8x128xf32>
    %106 = arith.mulf %16, %75 : vector<8x128xf32>
    %107 = arith.subf %105, %106 : vector<8x128xf32>
    %108 = arith.addf %107, %98 : vector<8x128xf32>
    %109 = arith.mulf %12, %75 : vector<8x128xf32>
    %110 = arith.mulf %16, %71 : vector<8x128xf32>
    %111 = arith.addf %109, %110 : vector<8x128xf32>
    %112 = arith.addf %111, %100 : vector<8x128xf32>
    %113 = arith.mulf %12, %79 : vector<8x128xf32>
    %114 = arith.mulf %16, %83 : vector<8x128xf32>
    %115 = arith.subf %113, %114 : vector<8x128xf32>
    %116 = arith.addf %115, %102 : vector<8x128xf32>
    %117 = arith.mulf %12, %83 : vector<8x128xf32>
    %118 = arith.mulf %16, %79 : vector<8x128xf32>
    %119 = arith.addf %117, %118 : vector<8x128xf32>
    %120 = arith.addf %119, %104 : vector<8x128xf32>
    %121 = arith.index_cast %93 : i32 to index
    %c0_39 = arith.constant 0 : index
    %122 = vector.load %arg13[%121, %c0_39] : memref<64x512xf32, #tpu.memory_space<vmem>>, vector<8x128xf32>
    tpu.vector_store %arg13[%121, %c0_39], %108 {strides = array<i32>} : memref<64x512xf32, #tpu.memory_space<vmem>>, vector<8x128xf32>,
    %123 = arith.index_cast %93 : i32 to index
    %c128_40 = arith.constant 128 : index
    %124 = vector.load %arg13[%123, %c128_40] : memref<64x512xf32, #tpu.memory_space<vmem>>, vector<8x128xf32>
    tpu.vector_store %arg13[%123, %c128_40], %112 {strides = array<i32>} : memref<64x512xf32, #tpu.memory_space<vmem>>, vector<8x128xf32>,
    %125 = arith.index_cast %96 : i32 to index
    %c256_41 = arith.constant 256 : index
    %126 = vector.load %arg13[%125, %c256_41] : memref<64x512xf32, #tpu.memory_space<vmem>>, vector<8x128xf32>
    tpu.vector_store %arg13[%125, %c256_41], %116 {strides = array<i32>} : memref<64x512xf32, #tpu.memory_space<vmem>>, vector<8x128xf32>,
    %127 = arith.index_cast %96 : i32 to index
    %c384_42 = arith.constant 384 : index
    %128 = vector.load %arg13[%127, %c384_42] : memref<64x512xf32, #tpu.memory_space<vmem>>, vector<8x128xf32>
    tpu.vector_store %arg13[%127, %c384_42], %120 {strides = array<i32>} : memref<64x512xf32, #tpu.memory_space<vmem>>, vector<8x128xf32>,
    %c3_i32 = arith.constant 3 : i32
    %c8_i32_43 = arith.constant 8 : i32
    %129 = arith.muli %c3_i32, %c8_i32_43 : i32
    %130 = tpu.assume_multiple %129, 8 : i32
    %c7_i32_44 = arith.constant 7 : i32
    %131 = arith.subi %c7_i32_44, %c3_i32 : i32
    %c8_i32_45 = arith.constant 8 : i32
    %132 = arith.muli %131, %c8_i32_45 : i32
    %133 = tpu.assume_multiple %132, 8 : i32
    %134 = arith.index_cast %130 : i32 to index
    %c0_46 = arith.constant 0 : index
    %135 = vector.load %arg12[%134, %c0_46] : memref<64x256xf32, #tpu.memory_space<vmem>>, vector<8x128xf32>
    %136 = arith.index_cast %130 : i32 to index
    %c128_47 = arith.constant 128 : index
    %137 = vector.load %arg12[%136, %c128_47] : memref<64x256xf32, #tpu.memory_space<vmem>>, vector<8x128xf32>
    %138 = arith.index_cast %133 : i32 to index
    %c0_48 = arith.constant 0 : index
    %139 = vector.load %arg12[%138, %c0_48] : memref<64x256xf32, #tpu.memory_space<vmem>>, vector<8x128xf32>
    %140 = arith.index_cast %133 : i32 to index
    %c128_49 = arith.constant 128 : index
    %141 = vector.load %arg12[%140, %c128_49] : memref<64x256xf32, #tpu.memory_space<vmem>>, vector<8x128xf32>
    %142 = arith.mulf %12, %108 : vector<8x128xf32>
    %143 = arith.mulf %16, %112 : vector<8x128xf32>
    %144 = arith.subf %142, %143 : vector<8x128xf32>
    %145 = arith.addf %144, %135 : vector<8x128xf32>
    %146 = arith.mulf %12, %112 : vector<8x128xf32>
    %147 = arith.mulf %16, %108 : vector<8x128xf32>
    %148 = arith.addf %146, %147 : vector<8x128xf32>
    %149 = arith.addf %148, %137 : vector<8x128xf32>
    %150 = arith.mulf %12, %116 : vector<8x128xf32>
    %151 = arith.mulf %16, %120 : vector<8x128xf32>
    %152 = arith.subf %150, %151 : vector<8x128xf32>
    %153 = arith.addf %152, %139 : vector<8x128xf32>
    %154 = arith.mulf %12, %120 : vector<8x128xf32>
    %155 = arith.mulf %16, %116 : vector<8x128xf32>
    %156 = arith.addf %154, %155 : vector<8x128xf32>
    %157 = arith.addf %156, %141 : vector<8x128xf32>
    %158 = arith.index_cast %130 : i32 to index
    %c0_50 = arith.constant 0 : index
    %159 = vector.load %arg13[%158, %c0_50] : memref<64x512xf32, #tpu.memory_space<vmem>>, vector<8x128xf32>
    tpu.vector_store %arg13[%158, %c0_50], %145 {strides = array<i32>} : memref<64x512xf32, #tpu.memory_space<vmem>>, vector<8x128xf32>,
    %160 = arith.index_cast %130 : i32 to index
    %c128_51 = arith.constant 128 : index
    %161 = vector.load %arg13[%160, %c128_51] : memref<64x512xf32, #tpu.memory_space<vmem>>, vector<8x128xf32>
    tpu.vector_store %arg13[%160, %c128_51], %149 {strides = array<i32>} : memref<64x512xf32, #tpu.memory_space<vmem>>, vector<8x128xf32>,
    %162 = arith.index_cast %133 : i32 to index
    %c256_52 = arith.constant 256 : index
    %163 = vector.load %arg13[%162, %c256_52] : memref<64x512xf32, #tpu.memory_space<vmem>>, vector<8x128xf32>
    tpu.vector_store %arg13[%162, %c256_52], %153 {strides = array<i32>} : memref<64x512xf32, #tpu.memory_space<vmem>>, vector<8x128xf32>,
    %164 = arith.index_cast %133 : i32 to index
    %c384_53 = arith.constant 384 : index
    %165 = vector.load %arg13[%164, %c384_53] : memref<64x512xf32, #tpu.memory_space<vmem>>, vector<8x128xf32>
    tpu.vector_store %arg13[%164, %c384_53], %157 {strides = array<i32>} : memref<64x512xf32, #tpu.memory_space<vmem>>, vector<8x128xf32>,
    %c4_i32 = arith.constant 4 : i32
    %c8_i32_54 = arith.constant 8 : i32
    %166 = arith.muli %c4_i32, %c8_i32_54 : i32
    %167 = tpu.assume_multiple %166, 8 : i32
    %c7_i32_55 = arith.constant 7 : i32
    %168 = arith.subi %c7_i32_55, %c4_i32 : i32
    %c8_i32_56 = arith.constant 8 : i32
    %169 = arith.muli %168, %c8_i32_56 : i32
    %170 = tpu.assume_multiple %169, 8 : i32
    %171 = arith.index_cast %167 : i32 to index
    %c0_57 = arith.constant 0 : index
    %172 = vector.load %arg12[%171, %c0_57] : memref<64x256xf32, #tpu.memory_space<vmem>>, vector<8x128xf32>
    %173 = arith.index_cast %167 : i32 to index
    %c128_58 = arith.constant 128 : index
    %174 = vector.load %arg12[%173, %c128_58] : memref<64x256xf32, #tpu.memory_space<vmem>>, vector<8x128xf32>
    %175 = arith.index_cast %170 : i32 to index
    %c0_59 = arith.constant 0 : index
    %176 = vector.load %arg12[%175, %c0_59] : memref<64x256xf32, #tpu.memory_space<vmem>>, vector<8x128xf32>
    %177 = arith.index_cast %170 : i32 to index
    %c128_60 = arith.constant 128 : index
    %178 = vector.load %arg12[%177, %c128_60] : memref<64x256xf32, #tpu.memory_space<vmem>>, vector<8x128xf32>
    %179 = arith.mulf %12, %145 : vector<8x128xf32>
    %180 = arith.mulf %16, %149 : vector<8x128xf32>
    %181 = arith.subf %179, %180 : vector<8x128xf32>
    %182 = arith.addf %181, %172 : vector<8x128xf32>
    %183 = arith.mulf %12, %149 : vector<8x128xf32>
    %184 = arith.mulf %16, %145 : vector<8x128xf32>
    %185 = arith.addf %183, %184 : vector<8x128xf32>
    %186 = arith.addf %185, %174 : vector<8x128xf32>
    %187 = arith.mulf %12, %153 : vector<8x128xf32>
    %188 = arith.mulf %16, %157 : vector<8x128xf32>
    %189 = arith.subf %187, %188 : vector<8x128xf32>
    %190 = arith.addf %189, %176 : vector<8x128xf32>
    %191 = arith.mulf %12, %157 : vector<8x128xf32>
    %192 = arith.mulf %16, %153 : vector<8x128xf32>
    %193 = arith.addf %191, %192 : vector<8x128xf32>
    %194 = arith.addf %193, %178 : vector<8x128xf32>
    %195 = arith.index_cast %167 : i32 to index
    %c0_61 = arith.constant 0 : index
    %196 = vector.load %arg13[%195, %c0_61] : memref<64x512xf32, #tpu.memory_space<vmem>>, vector<8x128xf32>
    tpu.vector_store %arg13[%195, %c0_61], %182 {strides = array<i32>} : memref<64x512xf32, #tpu.memory_space<vmem>>, vector<8x128xf32>,
    %197 = arith.index_cast %167 : i32 to index
    %c128_62 = arith.constant 128 : index
    %198 = vector.load %arg13[%197, %c128_62] : memref<64x512xf32, #tpu.memory_space<vmem>>, vector<8x128xf32>
    tpu.vector_store %arg13[%197, %c128_62], %186 {strides = array<i32>} : memref<64x512xf32, #tpu.memory_space<vmem>>, vector<8x128xf32>,
    %199 = arith.index_cast %170 : i32 to index
    %c256_63 = arith.constant 256 : index
    %200 = vector.load %arg13[%199, %c256_63] : memref<64x512xf32, #tpu.memory_space<vmem>>, vector<8x128xf32>
    tpu.vector_store %arg13[%199, %c256_63], %190 {strides = array<i32>} : memref<64x512xf32, #tpu.memory_space<vmem>>, vector<8x128xf32>,
    %201 = arith.index_cast %170 : i32 to index
    %c384_64 = arith.constant 384 : index
    %202 = vector.load %arg13[%201, %c384_64] : memref<64x512xf32, #tpu.memory_space<vmem>>, vector<8x128xf32>
    tpu.vector_store %arg13[%201, %c384_64], %194 {strides = array<i32>} : memref<64x512xf32, #tpu.memory_space<vmem>>, vector<8x128xf32>,
    %c5_i32 = arith.constant 5 : i32
    %c8_i32_65 = arith.constant 8 : i32
    %203 = arith.muli %c5_i32, %c8_i32_65 : i32
    %204 = tpu.assume_multiple %203, 8 : i32
    %c7_i32_66 = arith.constant 7 : i32
    %205 = arith.subi %c7_i32_66, %c5_i32 : i32
    %c8_i32_67 = arith.constant 8 : i32
    %206 = arith.muli %205, %c8_i32_67 : i32
    %207 = tpu.assume_multiple %206, 8 : i32
    %208 = arith.index_cast %204 : i32 to index
    %c0_68 = arith.constant 0 : index
    %209 = vector.load %arg12[%208, %c0_68] : memref<64x256xf32, #tpu.memory_space<vmem>>, vector<8x128xf32>
    %210 = arith.index_cast %204 : i32 to index
    %c128_69 = arith.constant 128 : index
    %211 = vector.load %arg12[%210, %c128_69] : memref<64x256xf32, #tpu.memory_space<vmem>>, vector<8x128xf32>
    %212 = arith.index_cast %207 : i32 to index
    %c0_70 = arith.constant 0 : index
    %213 = vector.load %arg12[%212, %c0_70] : memref<64x256xf32, #tpu.memory_space<vmem>>, vector<8x128xf32>
    %214 = arith.index_cast %207 : i32 to index
    %c128_71 = arith.constant 128 : index
    %215 = vector.load %arg12[%214, %c128_71] : memref<64x256xf32, #tpu.memory_space<vmem>>, vector<8x128xf32>
    %216 = arith.mulf %12, %182 : vector<8x128xf32>
    %217 = arith.mulf %16, %186 : vector<8x128xf32>
    %218 = arith.subf %216, %217 : vector<8x128xf32>
    %219 = arith.addf %218, %209 : vector<8x128xf32>
    %220 = arith.mulf %12, %186 : vector<8x128xf32>
    %221 = arith.mulf %16, %182 : vector<8x128xf32>
    %222 = arith.addf %220, %221 : vector<8x128xf32>
    %223 = arith.addf %222, %211 : vector<8x128xf32>
    %224 = arith.mulf %12, %190 : vector<8x128xf32>
    %225 = arith.mulf %16, %194 : vector<8x128xf32>
    %226 = arith.subf %224, %225 : vector<8x128xf32>
    %227 = arith.addf %226, %213 : vector<8x128xf32>
    %228 = arith.mulf %12, %194 : vector<8x128xf32>
    %229 = arith.mulf %16, %190 : vector<8x128xf32>
    %230 = arith.addf %228, %229 : vector<8x128xf32>
    %231 = arith.addf %230, %215 : vector<8x128xf32>
    %232 = arith.index_cast %204 : i32 to index
    %c0_72 = arith.constant 0 : index
    %233 = vector.load %arg13[%232, %c0_72] : memref<64x512xf32, #tpu.memory_space<vmem>>, vector<8x128xf32>
    tpu.vector_store %arg13[%232, %c0_72], %219 {strides = array<i32>} : memref<64x512xf32, #tpu.memory_space<vmem>>, vector<8x128xf32>,
    %234 = arith.index_cast %204 : i32 to index
    %c128_73 = arith.constant 128 : index
    %235 = vector.load %arg13[%234, %c128_73] : memref<64x512xf32, #tpu.memory_space<vmem>>, vector<8x128xf32>
    tpu.vector_store %arg13[%234, %c128_73], %223 {strides = array<i32>} : memref<64x512xf32, #tpu.memory_space<vmem>>, vector<8x128xf32>,
    %236 = arith.index_cast %207 : i32 to index
    %c256_74 = arith.constant 256 : index
    %237 = vector.load %arg13[%236, %c256_74] : memref<64x512xf32, #tpu.memory_space<vmem>>, vector<8x128xf32>
    tpu.vector_store %arg13[%236, %c256_74], %227 {strides = array<i32>} : memref<64x512xf32, #tpu.memory_space<vmem>>, vector<8x128xf32>,
    %238 = arith.index_cast %207 : i32 to index
    %c384_75 = arith.constant 384 : index
    %239 = vector.load %arg13[%238, %c384_75] : memref<64x512xf32, #tpu.memory_space<vmem>>, vector<8x128xf32>
    tpu.vector_store %arg13[%238, %c384_75], %231 {strides = array<i32>} : memref<64x512xf32, #tpu.memory_space<vmem>>, vector<8x128xf32>,
    %c6_i32 = arith.constant 6 : i32
    %c8_i32_76 = arith.constant 8 : i32
    %240 = arith.muli %c6_i32, %c8_i32_76 : i32
    %241 = tpu.assume_multiple %240, 8 : i32
    %c7_i32_77 = arith.constant 7 : i32
    %242 = arith.subi %c7_i32_77, %c6_i32 : i32
    %c8_i32_78 = arith.constant 8 : i32
    %243 = arith.muli %242, %c8_i32_78 : i32
    %244 = tpu.assume_multiple %243, 8 : i32
    %245 = arith.index_cast %241 : i32 to index
    %c0_79 = arith.constant 0 : index
    %246 = vector.load %arg12[%245, %c0_79] : memref<64x256xf32, #tpu.memory_space<vmem>>, vector<8x128xf32>
    %247 = arith.index_cast %241 : i32 to index
    %c128_80 = arith.constant 128 : index
    %248 = vector.load %arg12[%247, %c128_80] : memref<64x256xf32, #tpu.memory_space<vmem>>, vector<8x128xf32>
    %249 = arith.index_cast %244 : i32 to index
    %c0_81 = arith.constant 0 : index
    %250 = vector.load %arg12[%249, %c0_81] : memref<64x256xf32, #tpu.memory_space<vmem>>, vector<8x128xf32>
    %251 = arith.index_cast %244 : i32 to index
    %c128_82 = arith.constant 128 : index
    %252 = vector.load %arg12[%251, %c128_82] : memref<64x256xf32, #tpu.memory_space<vmem>>, vector<8x128xf32>
    %253 = arith.mulf %12, %219 : vector<8x128xf32>
    %254 = arith.mulf %16, %223 : vector<8x128xf32>
    %255 = arith.subf %253, %254 : vector<8x128xf32>
    %256 = arith.addf %255, %246 : vector<8x128xf32>
    %257 = arith.mulf %12, %223 : vector<8x128xf32>
    %258 = arith.mulf %16, %219 : vector<8x128xf32>
    %259 = arith.addf %257, %258 : vector<8x128xf32>
    %260 = arith.addf %259, %248 : vector<8x128xf32>
    %261 = arith.mulf %12, %227 : vector<8x128xf32>
    %262 = arith.mulf %16, %231 : vector<8x128xf32>
    %263 = arith.subf %261, %262 : vector<8x128xf32>
    %264 = arith.addf %263, %250 : vector<8x128xf32>
    %265 = arith.mulf %12, %231 : vector<8x128xf32>
    %266 = arith.mulf %16, %227 : vector<8x128xf32>
    %267 = arith.addf %265, %266 : vector<8x128xf32>
    %268 = arith.addf %267, %252 : vector<8x128xf32>
    %269 = arith.index_cast %241 : i32 to index
    %c0_83 = arith.constant 0 : index
    %270 = vector.load %arg13[%269, %c0_83] : memref<64x512xf32, #tpu.memory_space<vmem>>, vector<8x128xf32>
    tpu.vector_store %arg13[%269, %c0_83], %256 {strides = array<i32>} : memref<64x512xf32, #tpu.memory_space<vmem>>, vector<8x128xf32>,
    %271 = arith.index_cast %241 : i32 to index
    %c128_84 = arith.constant 128 : index
    %272 = vector.load %arg13[%271, %c128_84] : memref<64x512xf32, #tpu.memory_space<vmem>>, vector<8x128xf32>
    tpu.vector_store %arg13[%271, %c128_84], %260 {strides = array<i32>} : memref<64x512xf32, #tpu.memory_space<vmem>>, vector<8x128xf32>,
    %273 = arith.index_cast %244 : i32 to index
    %c256_85 = arith.constant 256 : index
    %274 = vector.load %arg13[%273, %c256_85] : memref<64x512xf32, #tpu.memory_space<vmem>>, vector<8x128xf32>
    tpu.vector_store %arg13[%273, %c256_85], %264 {strides = array<i32>} : memref<64x512xf32, #tpu.memory_space<vmem>>, vector<8x128xf32>,
    %275 = arith.index_cast %244 : i32 to index
    %c384_86 = arith.constant 384 : index
    %276 = vector.load %arg13[%275, %c384_86] : memref<64x512xf32, #tpu.memory_space<vmem>>, vector<8x128xf32>
    tpu.vector_store %arg13[%275, %c384_86], %268 {strides = array<i32>} : memref<64x512xf32, #tpu.memory_space<vmem>>, vector<8x128xf32>,
    %c7_i32_87 = arith.constant 7 : i32
    %c8_i32_88 = arith.constant 8 : i32
    %277 = arith.muli %c7_i32_87, %c8_i32_88 : i32
    %278 = tpu.assume_multiple %277, 8 : i32
    %c7_i32_89 = arith.constant 7 : i32
    %279 = arith.subi %c7_i32_89, %c7_i32_87 : i32
    %c8_i32_90 = arith.constant 8 : i32
    %280 = arith.muli %279, %c8_i32_90 : i32
    %281 = tpu.assume_multiple %280, 8 : i32
    %282 = arith.index_cast %278 : i32 to index
    %c0_91 = arith.constant 0 : index
    %283 = vector.load %arg12[%282, %c0_91] : memref<64x256xf32, #tpu.memory_space<vmem>>, vector<8x128xf32>
    %284 = arith.index_cast %278 : i32 to index
    %c128_92 = arith.constant 128 : index
    %285 = vector.load %arg12[%284, %c128_92] : memref<64x256xf32, #tpu.memory_space<vmem>>, vector<8x128xf32>
    %286 = arith.index_cast %281 : i32 to index
    %c0_93 = arith.constant 0 : index
    %287 = vector.load %arg12[%286, %c0_93] : memref<64x256xf32, #tpu.memory_space<vmem>>, vector<8x128xf32>
    %288 = arith.index_cast %281 : i32 to index
    %c128_94 = arith.constant 128 : index
    %289 = vector.load %arg12[%288, %c128_94] : memref<64x256xf32, #tpu.memory_space<vmem>>, vector<8x128xf32>
    %290 = arith.mulf %12, %256 : vector<8x128xf32>
    %291 = arith.mulf %16, %260 : vector<8x128xf32>
    %292 = arith.subf %290, %291 : vector<8x128xf32>
    %293 = arith.addf %292, %283 : vector<8x128xf32>
    %294 = arith.mulf %12, %260 : vector<8x128xf32>
    %295 = arith.mulf %16, %256 : vector<8x128xf32>
    %296 = arith.addf %294, %295 : vector<8x128xf32>
    %297 = arith.addf %296, %285 : vector<8x128xf32>
    %298 = arith.mulf %12, %264 : vector<8x128xf32>
    %299 = arith.mulf %16, %268 : vector<8x128xf32>
    %300 = arith.subf %298, %299 : vector<8x128xf32>
    %301 = arith.addf %300, %287 : vector<8x128xf32>
    %302 = arith.mulf %12, %268 : vector<8x128xf32>
    %303 = arith.mulf %16, %264 : vector<8x128xf32>
    %304 = arith.addf %302, %303 : vector<8x128xf32>
    %305 = arith.addf %304, %289 : vector<8x128xf32>
    %306 = arith.index_cast %278 : i32 to index
    %c0_95 = arith.constant 0 : index
    %307 = vector.load %arg13[%306, %c0_95] : memref<64x512xf32, #tpu.memory_space<vmem>>, vector<8x128xf32>
    tpu.vector_store %arg13[%306, %c0_95], %293 {strides = array<i32>} : memref<64x512xf32, #tpu.memory_space<vmem>>, vector<8x128xf32>,
    %308 = arith.index_cast %278 : i32 to index
    %c128_96 = arith.constant 128 : index
    %309 = vector.load %arg13[%308, %c128_96] : memref<64x512xf32, #tpu.memory_space<vmem>>, vector<8x128xf32>
    tpu.vector_store %arg13[%308, %c128_96], %297 {strides = array<i32>} : memref<64x512xf32, #tpu.memory_space<vmem>>, vector<8x128xf32>,
    %310 = arith.index_cast %281 : i32 to index
    %c256_97 = arith.constant 256 : index
    %311 = vector.load %arg13[%310, %c256_97] : memref<64x512xf32, #tpu.memory_space<vmem>>, vector<8x128xf32>
    tpu.vector_store %arg13[%310, %c256_97], %301 {strides = array<i32>} : memref<64x512xf32, #tpu.memory_space<vmem>>, vector<8x128xf32>,
    %312 = arith.index_cast %281 : i32 to index
    %c384_98 = arith.constant 384 : index
    %313 = vector.load %arg13[%312, %c384_98] : memref<64x512xf32, #tpu.memory_space<vmem>>, vector<8x128xf32>
    tpu.vector_store %arg13[%312, %c384_98], %305 {strides = array<i32>} : memref<64x512xf32, #tpu.memory_space<vmem>>, vector<8x128xf32>,
    %c8_i32_99 = arith.constant 8 : i32
    %c0_100 = arith.constant 0 : index
    %c0_101 = arith.constant 0 : index
    %314 = vector.load %arg13[%c0_100, %c0_101] : memref<64x512xf32, #tpu.memory_space<vmem>>, vector<64x512xf32>
    %315 = arith.truncf %314 : vector<64x512xf32> to vector<64x512xbf16>
    %c0_102 = arith.constant 0 : index
    %c0_103 = arith.constant 0 : index
    %c0_104 = arith.constant 0 : index
    %316 = vector.load %arg6[%c0_102, %c0_103, %c0_104] : memref<1x512x64xbf16, #tpu.memory_space<vmem>>, vector<1x512x64xbf16>
    %317 = vector.shape_cast %316 : vector<1x512x64xbf16> to vector<512x64xbf16>
    %cst_105 = arith.constant dense<0.000000e+00> : vector<64x64xf32>
    %318 = tpu.matmul %315, %317, %cst_105 {dimension_numbers = #tpu.dot_dimension_numbers<[1], [0], [0], [1], [0, 0, 1, 1], [], []>} : vector<64x512xbf16>, vector<512x64xbf16>, vector<64x64xf32> -> vector<64x64xf32>
    %c0_106 = arith.constant 0 : index
    %c0_107 = arith.constant 0 : index
    %c0_108 = arith.constant 0 : index
    %319 = vector.load %arg7[%c0_106, %c0_107, %c0_108] : memref<1x1x64xf32, #tpu.memory_space<vmem>>, vector<1x1x64xf32>
    %320 = vector.shape_cast %319 : vector<1x1x64xf32> to vector<1x64xf32>
    %321 = vector.broadcast %320 : vector<1x64xf32> to vector<64x64xf32>
    %322 = arith.mulf %3, %321 : vector<64x64xf32>
    %323 = arith.addf %318, %322 : vector<64x64xf32>
    %324 = arith.mulf %323, %323 : vector<64x64xf32>
    %325 = arith.mulf %323, %324 : vector<64x64xf32>
    %cst_109 = arith.constant 4.471500e-02 : f32
    %326 = vector.broadcast %cst_109 : f32 to vector<64x64xf32>
    %327 = arith.mulf %326, %325 : vector<64x64xf32>
    %328 = arith.addf %323, %327 : vector<64x64xf32>
    %cst_110 = arith.constant 0.797884583 : f32
    %329 = vector.broadcast %cst_110 : f32 to vector<64x64xf32>
    %330 = arith.mulf %329, %328 : vector<64x64xf32>
    %331 = math.tanh %330 : vector<64x64xf32>
    %cst_111 = arith.constant 1.000000e+00 : f32
    %332 = vector.broadcast %cst_111 : f32 to vector<64x64xf32>
    %333 = arith.addf %332, %331 : vector<64x64xf32>
    %cst_112 = arith.constant 5.000000e-01 : f32
    %334 = vector.broadcast %cst_112 : f32 to vector<64x64xf32>
    %335 = arith.mulf %334, %333 : vector<64x64xf32>
    %336 = arith.mulf %323, %335 : vector<64x64xf32>
    %337 = arith.addf %336, %3 : vector<64x64xf32>
    %c0_113 = arith.constant 0 : index
    %c0_114 = arith.constant 0 : index
    %338 = vector.load %arg11[%c0_113, %c0_114] : memref<64x64xf32, #tpu.memory_space<vmem>>, vector<64x64xf32>
    tpu.vector_store %arg11[%c0_113, %c0_114], %337 {strides = array<i32>} : memref<64x64xf32, #tpu.memory_space<vmem>>, vector<64x64xf32>,
    %339 = arith.truncf %337 : vector<64x64xf32> to vector<64x64xbf16>
    %c0_115 = arith.constant 0 : index
    %c0_116 = arith.constant 0 : index
    %c0_117 = arith.constant 0 : index
    %340 = vector.load %arg8[%c0_115, %c0_116, %c0_117] : memref<1x64x256xbf16, #tpu.memory_space<vmem>>, vector<1x64x256xbf16>
    %341 = vector.shape_cast %340 : vector<1x64x256xbf16> to vector<64x256xbf16>
    %cst_118 = arith.constant dense<0.000000e+00> : vector<64x256xf32>
    %342 = tpu.matmul %339, %341, %cst_118 {dimension_numbers = #tpu.dot_dimension_numbers<[1], [0], [0], [1], [0, 0, 1, 1], [], []>} : vector<64x64xbf16>, vector<64x256xbf16>, vector<64x256xf32> -> vector<64x256xf32>
    %c0_119 = arith.constant 0 : index
    %c0_120 = arith.constant 0 : index
    %c0_121 = arith.constant 0 : index
    %343 = vector.load %arg9[%c0_119, %c0_120, %c0_121] : memref<1x1x256xf32, #tpu.memory_space<vmem>>, vector<1x1x256xf32>
    %344 = vector.shape_cast %343 : vector<1x1x256xf32> to vector<1x256xf32>
    %345 = vector.broadcast %344 : vector<1x256xf32> to vector<64x256xf32>
    %346 = arith.addf %342, %345 : vector<64x256xf32>
    %c0_122 = arith.constant 0 : index
    %c0_123 = arith.constant 0 : index
    %c0_124 = arith.constant 0 : index
    %c0_125 = arith.constant 0 : index
    %347 = vector.load %arg10[%c0_122, %c0_123, %c0_124, %c0_125] : memref<1x1x64x256xf32, #tpu.memory_space<vmem>>, vector<1x1x64x256xf32>
    %348 = vector.shape_cast %347 : vector<1x1x64x256xf32> to vector<64x256xf32>
    %349 = vector.shape_cast %346 : vector<64x256xf32> to vector<1x1x64x256xf32>
    tpu.vector_store %arg10[%c0_122, %c0_123, %c0_124, %c0_125], %349 {strides = array<i32>} : memref<1x1x64x256xf32, #tpu.memory_space<vmem>>, vector<1x1x64x256xf32>,
    return
  }
  func.func @transform_0(%arg0: i32, %arg1: i32) -> (i32, i32, i32) {
    %c0_i32 = arith.constant 0 : i32
    %c0_i32_0 = arith.constant 0 : i32
    %c0_i32_1 = arith.constant 0 : i32
    return %arg0, %c0_i32, %c0_i32_0 : i32, i32, i32
  }
  func.func @transform_1(%arg0: i32, %arg1: i32) -> (i32, i32, i32) {
    %c0_i32 = arith.constant 0 : i32
    %c0_i32_0 = arith.constant 0 : i32
    %c0_i32_1 = arith.constant 0 : i32
    return %arg1, %c0_i32, %c0_i32_0 : i32, i32, i32
  }
  func.func @transform_2(%arg0: i32, %arg1: i32) -> (i32, i32, i32) {
    %c0_i32 = arith.constant 0 : i32
    %c0_i32_0 = arith.constant 0 : i32
    %c0_i32_1 = arith.constant 0 : i32
    return %arg1, %c0_i32, %c0_i32_0 : i32, i32, i32
  }
  func.func @transform_3(%arg0: i32, %arg1: i32) -> (i32, i32, i32) {
    %c0_i32 = arith.constant 0 : i32
    %c0_i32_0 = arith.constant 0 : i32
    %c0_i32_1 = arith.constant 0 : i32
    return %arg1, %c0_i32, %c0_i32_0 : i32, i32, i32
  }
  func.func @transform_4(%arg0: i32, %arg1: i32) -> (i32, i32, i32) {
    %c0_i32 = arith.constant 0 : i32
    %c0_i32_0 = arith.constant 0 : i32
    %c0_i32_1 = arith.constant 0 : i32
    return %arg1, %c0_i32, %c0_i32_0 : i32, i32, i32
  }
  func.func @transform_5(%arg0: i32, %arg1: i32) -> (i32, i32, i32) {
    %c0_i32 = arith.constant 0 : i32
    %c0_i32_0 = arith.constant 0 : i32
    %c0_i32_1 = arith.constant 0 : i32
    return %arg1, %c0_i32, %c0_i32_0 : i32, i32, i32
  }
  func.func @transform_6(%arg0: i32, %arg1: i32) -> (i32, i32, i32) {
    %c0_i32 = arith.constant 0 : i32
    %c0_i32_0 = arith.constant 0 : i32
    %c0_i32_1 = arith.constant 0 : i32
    return %arg1, %c0_i32, %c0_i32_0 : i32, i32, i32
  }
  func.func @transform_7(%arg0: i32, %arg1: i32) -> (i32, i32, i32) {
    %c0_i32 = arith.constant 0 : i32
    %c0_i32_0 = arith.constant 0 : i32
    %c0_i32_1 = arith.constant 0 : i32
    return %arg1, %c0_i32, %c0_i32_0 : i32, i32, i32
  }
  func.func @transform_8(%arg0: i32, %arg1: i32) -> (i32, i32, i32, i32) {
    %c0_i32 = arith.constant 0 : i32
    %c0_i32_0 = arith.constant 0 : i32
    %c0_i32_1 = arith.constant 0 : i32
    return %arg0, %arg1, %c0_i32, %c0_i32_0 : i32, i32, i32, i32
  }
}

</mosaic_0001>

<llo_original>
// kernel: tsmlrtas_forward.2
$region0: #{tsmlrtas_forward.2}
  #allocation0 [shape = 'u32[]', space=smem, size = 0x4, offset = 0x4, fixed_abs, tag = 'smem constant byte address 0x4 - core index']
  #allocation1 [shape = 'u32[144,128]{1,0:T(1,128)}', space=vmem, size = 0x12000, scoped, tag = 'internal scratch']
  %s0 = inlined_call_operand.vmem [shape: f32[16,2048], index: 0, kind: input, shape index: {}]
  %s1 = inlined_call_operand.vmem [shape: f32[1,2048], index: 1, kind: input, shape index: {}]
  %s2 = inlined_call_operand.vmem [shape: f32[1,2048], index: 2, kind: input, shape index: {}]
  %s3 = inlined_call_operand.vmem [shape: bf16[2048,64], index: 3, kind: input, shape index: {}]
  %s4 = inlined_call_operand.vmem [shape: f32[1,64], index: 4, kind: input, shape index: {}]
  %s5 = inlined_call_operand.vmem [shape: f32[16,64], index: 5, kind: output, shape index: {}]
  %s6 = sld [smem:[#allocation0]]
  $region30: #{tsmlrtas_forward.2} parent=0
    _
  %s8 = ssub.s32 1, %s6
  %s9 = scalar_select 0, %s8, %s6
  // Predicated region
  $region2: #{tsmlrtas_forward.2} parent=0 // pred_check
    _
  $region3: #{tsmlrtas_forward.2} parent=0 // pred_check_branch
    %11 = sbr.rel (0) target = $region5
  $region4: #{tsmlrtas_forward.2} parent=0 // pred_region
    _
  $region5: #{tsmlrtas_forward.2} parent=0 // pred_fallthru
    _
  // Predicated region
  $region6: #{tsmlrtas_forward.2} parent=0 // pred_check
    _
  $region7: #{tsmlrtas_forward.2} parent=0 // pred_check_branch
    %13 = sbr.rel (0) target = $region9
  $region8: #{tsmlrtas_forward.2} parent=0 // pred_region
    _
  $region9: #{tsmlrtas_forward.2} parent=0 // pred_fallthru
    _
  // Predicated region
  $region10: #{tsmlrtas_forward.2} parent=0 // pred_check
    _
  $region11: #{tsmlrtas_forward.2} parent=0 // pred_check_branch
    %15 = sbr.rel (0) target = $region13
  $region12: #{tsmlrtas_forward.2} parent=0 // pred_region
    _
  $region13: #{tsmlrtas_forward.2} parent=0 // pred_fallthru
    _
  // Predicated region
  $region14: #{tsmlrtas_forward.2} parent=0 // pred_check
    _
  $region15: #{tsmlrtas_forward.2} parent=0 // pred_check_branch
    %17 = sbr.rel (0) target = $region17
  $region16: #{tsmlrtas_forward.2} parent=0 // pred_region
    _
  $region17: #{tsmlrtas_forward.2} parent=0 // pred_fallthru
    _
  // Predicated region
  $region18: #{tsmlrtas_forward.2} parent=0 // pred_check
    _
  $region19: #{tsmlrtas_forward.2} parent=0 // pred_check_branch
    %19 = sbr.rel (0) target = $region21
  $region20: #{tsmlrtas_forward.2} parent=0 // pred_region
    _
  $region21: #{tsmlrtas_forward.2} parent=0 // pred_fallthru
    _
  %v21 = vld [vmem:[%s0] sm:$0xff]
  %v22 = vld [vmem:[%s0 + $0x8] sm:$0xff]
  %v23 = vld [vmem:[%s0 + $0x10] sm:$0xff]
  %v24 = vld [vmem:[%s0 + $0x18] sm:$0xff]
  %v25 = vld [vmem:[%s0 + $0x20] sm:$0xff]
  %v26 = vld [vmem:[%s0 + $0x28] sm:$0xff]
  %v27 = vld [vmem:[%s0 + $0x30] sm:$0xff]
  %v28 = vld [vmem:[%s0 + $0x38] sm:$0xff]
  %v29 = vld [vmem:[%s0 + $0x40] sm:$0xff]
  %v30 = vld [vmem:[%s0 + $0x48] sm:$0xff]
  %v31 = vld [vmem:[%s0 + $0x50] sm:$0xff]
  %v32 = vld [vmem:[%s0 + $0x58] sm:$0xff]
  %v33 = vld [vmem:[%s0 + $0x60] sm:$0xff]
  %v34 = vld [vmem:[%s0 + $0x68] sm:$0xff]
  %v35 = vld [vmem:[%s0 + $0x70] sm:$0xff]
  %v36 = vld [vmem:[%s0 + $0x78] sm:$0xff]
  %v37 = vld [vmem:[%s0 + $0x80] sm:$0xff]
  %v38 = vld [vmem:[%s0 + $0x88] sm:$0xff]
  %v39 = vld [vmem:[%s0 + $0x90] sm:$0xff]
  %v40 = vld [vmem:[%s0 + $0x98] sm:$0xff]
  %v41 = vld [vmem:[%s0 + $0xa0] sm:$0xff]
  %v42 = vld [vmem:[%s0 + $0xa8] sm:$0xff]
  %v43 = vld [vmem:[%s0 + $0xb0] sm:$0xff]
  %v44 = vld [vmem:[%s0 + $0xb8] sm:$0xff]
  %v45 = vld [vmem:[%s0 + $0xc0] sm:$0xff]
  %v46 = vld [vmem:[%s0 + $0xc8] sm:$0xff]
  %v47 = vld [vmem:[%s0 + $0xd0] sm:$0xff]
  %v48 = vld [vmem:[%s0 + $0xd8] sm:$0xff]
  %v49 = vld [vmem:[%s0 + $0xe0] sm:$0xff]
  %v50 = vld [vmem:[%s0 + $0xe8] sm:$0xff]
  %v51 = vld [vmem:[%s0 + $0xf0] sm:$0xff]
  %v52 = vld [vmem:[%s0 + $0xf8] sm:$0xff]
  %v53 = vadd.f32 %v21, %v22
  %v54 = vadd.f32 %v53, %v23
  %v55 = vadd.f32 %v54, %v24
  %v56 = vadd.f32 %v55, %v25
  %v57 = vadd.f32 %v56, %v26
  %v58 = vadd.f32 %v57, %v27
  %v59 = vadd.f32 %v58, %v28
  %v60 = vadd.f32 %v59, %v29
  %v61 = vadd.f32 %v60, %v30
  %v62 = vadd.f32 %v61, %v31
  %v63 = vadd.f32 %v62, %v32
  %v64 = vadd.f32 %v63, %v33
  %v65 = vadd.f32 %v64, %v34
  %v66 = vadd.f32 %v65, %v35
  %v67 = vadd.f32 %v66, %v36
  %68 = vadd.xlane.f32.xlu0 %v67
  %v69 = vpop.xlane.xlu0 %68
  %v70 = vadd.f32 %v37, %v38
  %v71 = vadd.f32 %v70, %v39
  %v72 = vadd.f32 %v71, %v40
  %v73 = vadd.f32 %v72, %v41
  %v74 = vadd.f32 %v73, %v42
  %v75 = vadd.f32 %v74, %v43
  %v76 = vadd.f32 %v75, %v44
  %v77 = vadd.f32 %v76, %v45
  %v78 = vadd.f32 %v77, %v46
  %v79 = vadd.f32 %v78, %v47
  %v80 = vadd.f32 %v79, %v48
  %v81 = vadd.f32 %v80, %v49
  %v82 = vadd.f32 %v81, %v50
  %v83 = vadd.f32 %v82, %v51
  %v84 = vadd.f32 %v83, %v52
  %85 = vadd.xlane.f32.xlu0 %v84
  %v86 = vpop.xlane.xlu0 %85
  %v87 = vrcp.pop 2048.0
  %v88 = vmul.f32 %v69, %v87
  %v89 = vmul.f32 %v86, %v87
  %v90 = vmul.f32 %v21, %v21
  %v91 = vmul.f32 %v22, %v22
  %v92 = vmul.f32 %v23, %v23
  %v93 = vmul.f32 %v24, %v24
  %v94 = vmul.f32 %v25, %v25
  %v95 = vmul.f32 %v26, %v26
  %v96 = vmul.f32 %v27, %v27
  %v97 = vmul.f32 %v28, %v28
  %v98 = vmul.f32 %v29, %v29
  %v99 = vmul.f32 %v30, %v30
  %v100 = vmul.f32 %v31, %v31
  %v101 = vmul.f32 %v32, %v32
  %v102 = vmul.f32 %v33, %v33
  %v103 = vmul.f32 %v34, %v34
  %v104 = vmul.f32 %v35, %v35
  %v105 = vmul.f32 %v36, %v36
  %v106 = vmul.f32 %v37, %v37
  %v107 = vmul.f32 %v38, %v38
  %v108 = vmul.f32 %v39, %v39
  %v109 = vmul.f32 %v40, %v40
  %v110 = vmul.f32 %v41, %v41
  %v111 = vmul.f32 %v42, %v42
  %v112 = vmul.f32 %v43, %v43
  %v113 = vmul.f32 %v44, %v44
  %v114 = vmul.f32 %v45, %v45
  %v115 = vmul.f32 %v46, %v46
  %v116 = vmul.f32 %v47, %v47
  %v117 = vmul.f32 %v48, %v48
  %v118 = vmul.f32 %v49, %v49
  %v119 = vmul.f32 %v50, %v50
  %v120 = vmul.f32 %v51, %v51
  %v121 = vmul.f32 %v52, %v52
  %v122 = vadd.f32 %v90, %v91
  %v123 = vadd.f32 %v122, %v92
  %v124 = vadd.f32 %v123, %v93
  %v125 = vadd.f32 %v124, %v94
  %v126 = vadd.f32 %v125, %v95
  %v127 = vadd.f32 %v126, %v96
  %v128 = vadd.f32 %v127, %v97
  %v129 = vadd.f32 %v128, %v98
  %v130 = vadd.f32 %v129, %v99
  %v131 = vadd.f32 %v130, %v100
  %v132 = vadd.f32 %v131, %v101
  %v133 = vadd.f32 %v132, %v102
  %v134 = vadd.f32 %v133, %v103
  %v135 = vadd.f32 %v134, %v104
  %v136 = vadd.f32 %v135, %v105
  %137 = vadd.xlane.f32.xlu0 %v136
  %v138 = vpop.xlane.xlu0 %137
  %v139 = vadd.f32 %v106, %v107
  %v140 = vadd.f32 %v139, %v108
  %v141 = vadd.f32 %v140, %v109
  %v142 = vadd.f32 %v141, %v110
  %v143 = vadd.f32 %v142, %v111
  %v144 = vadd.f32 %v143, %v112
  %v145 = vadd.f32 %v144, %v113
  %v146 = vadd.f32 %v145, %v114
  %v147 = vadd.f32 %v146, %v115
  %v148 = vadd.f32 %v147, %v116
  %v149 = vadd.f32 %v148, %v117
  %v150 = vadd.f32 %v149, %v118
  %v151 = vadd.f32 %v150, %v119
  %v152 = vadd.f32 %v151, %v120
  %v153 = vadd.f32 %v152, %v121
  %154 = vadd.xlane.f32.xlu0 %v153
  %v155 = vpop.xlane.xlu0 %154
  %v156 = vmul.f32 %v138, %v87
  %v157 = vmul.f32 %v155, %v87
  %v158 = vmul.f32 %v88, %v88
  %v159 = vmul.f32 %v89, %v89
  %v160 = vsub.f32 %v156, %v158
  %v161 = vsub.f32 %v157, %v159
  %v162 = vsub.f32 %v21, %v88
  %v163 = vsub.f32 %v22, %v88
  %v164 = vsub.f32 %v23, %v88
  %v165 = vsub.f32 %v24, %v88
  %v166 = vsub.f32 %v25, %v88
  %v167 = vsub.f32 %v26, %v88
  %v168 = vsub.f32 %v27, %v88
  %v169 = vsub.f32 %v28, %v88
  %v170 = vsub.f32 %v29, %v88
  %v171 = vsub.f32 %v30, %v88
  %v172 = vsub.f32 %v31, %v88
  %v173 = vsub.f32 %v32, %v88
  %v174 = vsub.f32 %v33, %v88
  %v175 = vsub.f32 %v34, %v88
  %v176 = vsub.f32 %v35, %v88
  %v177 = vsub.f32 %v36, %v88
  %v178 = vsub.f32 %v37, %v89
  %v179 = vsub.f32 %v38, %v89
  %v180 = vsub.f32 %v39, %v89
  %v181 = vsub.f32 %v40, %v89
  %v182 = vsub.f32 %v41, %v89
  %v183 = vsub.f32 %v42, %v89
  %v184 = vsub.f32 %v43, %v89
  %v185 = vsub.f32 %v44, %v89
  %v186 = vsub.f32 %v45, %v89
  %v187 = vsub.f32 %v46, %v89
  %v188 = vsub.f32 %v47, %v89
  %v189 = vsub.f32 %v48, %v89
  %v190 = vsub.f32 %v49, %v89
  %v191 = vsub.f32 %v50, %v89
  %v192 = vsub.f32 %v51, %v89
  %v193 = vsub.f32 %v52, %v89
  %v194 = vadd.f32 %v160, 1e-05
  %v195 = vadd.f32 %v161, 1e-05
  %v196 = vrsqrt.pop %v194
  %v197 = vrsqrt.pop %v195
  %v198 = vmul.f32 %v162, %v196
  %v199 = vmul.f32 %v163, %v196
  %v200 = vmul.f32 %v164, %v196
  %v201 = vmul.f32 %v165, %v196
  %v202 = vmul.f32 %v166, %v196
  %v203 = vmul.f32 %v167, %v196
  %v204 = vmul.f32 %v168, %v196
  %v205 = vmul.f32 %v169, %v196
  %v206 = vmul.f32 %v170, %v196
  %v207 = vmul.f32 %v171, %v196
  %v208 = vmul.f32 %v172, %v196
  %v209 = vmul.f32 %v173, %v196
  %v210 = vmul.f32 %v174, %v196
  %v211 = vmul.f32 %v175, %v196
  %v212 = vmul.f32 %v176, %v196
  %v213 = vmul.f32 %v177, %v196
  %v214 = vmul.f32 %v178, %v197
  %v215 = vmul.f32 %v179, %v197
  %v216 = vmul.f32 %v180, %v197
  %v217 = vmul.f32 %v181, %v197
  %v218 = vmul.f32 %v182, %v197
  %v219 = vmul.f32 %v183, %v197
  %v220 = vmul.f32 %v184, %v197
  %v221 = vmul.f32 %v185, %v197
  %v222 = vmul.f32 %v186, %v197
  %v223 = vmul.f32 %v187, %v197
  %v224 = vmul.f32 %v188, %v197
  %v225 = vmul.f32 %v189, %v197
  %v226 = vmul.f32 %v190, %v197
  %v227 = vmul.f32 %v191, %v197
  %v228 = vmul.f32 %v192, %v197
  %v229 = vmul.f32 %v193, %v197
  %v230 = vld [vmem:[%s1] sm:$0xff]
  %v231 = vld [vmem:[%s1 + $0x8] sm:$0xff]
  %v234 = vlaneseq
  %v235 = vshrl.u32 %v234, 7
  %v236 = vsub.s32 0, %v235
  %v237 = vrot.slane %v230, %v236
  %v238 = vlaneseq
  %v239 = vshrl.u32 %v238, 7
  %v240 = vsub.s32 1, %v239
  %v241 = vrot.slane %v230, %v240
  %v242 = vlaneseq
  %v243 = vshrl.u32 %v242, 7
  %v244 = vsub.s32 2, %v243
  %v245 = vrot.slane %v230, %v244
  %v246 = vlaneseq
  %v247 = vshrl.u32 %v246, 7
  %v248 = vsub.s32 3, %v247
  %v249 = vrot.slane %v230, %v248
  %v250 = vlaneseq
  %v251 = vshrl.u32 %v250, 7
  %v252 = vsub.s32 4, %v251
  %v253 = vrot.slane %v230, %v252
  %v254 = vlaneseq
  %v255 = vshrl.u32 %v254, 7
  %v256 = vsub.s32 5, %v255
  %v257 = vrot.slane %v230, %v256
  %v258 = vlaneseq
  %v259 = vshrl.u32 %v258, 7
  %v260 = vsub.s32 6, %v259
  %v261 = vrot.slane %v230, %v260
  %v262 = vlaneseq
  %v263 = vshrl.u32 %v262, 7
  %v264 = vsub.s32 7, %v263
  %v265 = vrot.slane %v230, %v264
  %v266 = vlaneseq
  %v267 = vshrl.u32 %v266, 7
  %v268 = vsub.s32 0, %v267
  %v269 = vrot.slane %v231, %v268
  %v270 = vlaneseq
  %v271 = vshrl.u32 %v270, 7
  %v272 = vsub.s32 1, %v271
  %v273 = vrot.slane %v231, %v272
  %v274 = vlaneseq
  %v275 = vshrl.u32 %v274, 7
  %v276 = vsub.s32 2, %v275
  %v277 = vrot.slane %v231, %v276
  %v278 = vlaneseq
  %v279 = vshrl.u32 %v278, 7
  %v280 = vsub.s32 3, %v279
  %v281 = vrot.slane %v231, %v280
  %v282 = vlaneseq
  %v283 = vshrl.u32 %v282, 7
  %v284 = vsub.s32 4, %v283
  %v285 = vrot.slane %v231, %v284
  %v286 = vlaneseq
  %v287 = vshrl.u32 %v286, 7
  %v288 = vsub.s32 5, %v287
  %v289 = vrot.slane %v231, %v288
  %v290 = vlaneseq
  %v291 = vshrl.u32 %v290, 7
  %v292 = vsub.s32 6, %v291
  %v293 = vrot.slane %v231, %v292
  %v294 = vlaneseq
  %v295 = vshrl.u32 %v294, 7
  %v296 = vsub.s32 7, %v295
  %v297 = vrot.slane %v231, %v296
  %v314 = vmul.f32 %v198, %v237
  %v315 = vmul.f32 %v199, %v241
  %v316 = vmul.f32 %v200, %v245
  %v317 = vmul.f32 %v201, %v249
  %v318 = vmul.f32 %v202, %v253
  %v319 = vmul.f32 %v203, %v257
  %v320 = vmul.f32 %v204, %v261
  %v321 = vmul.f32 %v205, %v265
  %v322 = vmul.f32 %v206, %v269
  %v323 = vmul.f32 %v207, %v273
  %v324 = vmul.f32 %v208, %v277
  %v325 = vmul.f32 %v209, %v281
  %v326 = vmul.f32 %v210, %v285
  %v327 = vmul.f32 %v211, %v289
  %v328 = vmul.f32 %v212, %v293
  %v329 = vmul.f32 %v213, %v297
  %v330 = vmul.f32 %v214, %v237
  %v331 = vmul.f32 %v215, %v241
  %v332 = vmul.f32 %v216, %v245
  %v333 = vmul.f32 %v217, %v249
  %v334 = vmul.f32 %v218, %v253
  %v335 = vmul.f32 %v219, %v257
  %v336 = vmul.f32 %v220, %v261
  %v337 = vmul.f32 %v221, %v265
  %v338 = vmul.f32 %v222, %v269
  %v339 = vmul.f32 %v223, %v273
  %v340 = vmul.f32 %v224, %v277
  %v341 = vmul.f32 %v225, %v281
  %v342 = vmul.f32 %v226, %v285
  %v343 = vmul.f32 %v227, %v289
  %v344 = vmul.f32 %v228, %v293
  %v345 = vmul.f32 %v229, %v297
  %v346 = vld [vmem:[%s2] sm:$0xff]
  %v347 = vld [vmem:[%s2 + $0x8] sm:$0xff]
  %v350 = vlaneseq
  %v351 = vshrl.u32 %v350, 7
  %v352 = vsub.s32 0, %v351
  %v353 = vrot.slane %v346, %v352
  %v354 = vlaneseq
  %v355 = vshrl.u32 %v354, 7
  %v356 = vsub.s32 1, %v355
  %v357 = vrot.slane %v346, %v356
  %v358 = vlaneseq
  %v359 = vshrl.u32 %v358, 7
  %v360 = vsub.s32 2, %v359
  %v361 = vrot.slane %v346, %v360
  %v362 = vlaneseq
  %v363 = vshrl.u32 %v362, 7
  %v364 = vsub.s32 3, %v363
  %v365 = vrot.slane %v346, %v364
  %v366 = vlaneseq
  %v367 = vshrl.u32 %v366, 7
  %v368 = vsub.s32 4, %v367
  %v369 = vrot.slane %v346, %v368
  %v370 = vlaneseq
  %v371 = vshrl.u32 %v370, 7
  %v372 = vsub.s32 5, %v371
  %v373 = vrot.slane %v346, %v372
  %v374 = vlaneseq
  %v375 = vshrl.u32 %v374, 7
  %v376 = vsub.s32 6, %v375
  %v377 = vrot.slane %v346, %v376
  %v378 = vlaneseq
  %v379 = vshrl.u32 %v378, 7
  %v380 = vsub.s32 7, %v379
  %v381 = vrot.slane %v346, %v380
  %v382 = vlaneseq
  %v383 = vshrl.u32 %v382, 7
  %v384 = vsub.s32 0, %v383
  %v385 = vrot.slane %v347, %v384
  %v386 = vlaneseq
  %v387 = vshrl.u32 %v386, 7
  %v388 = vsub.s32 1, %v387
  %v389 = vrot.slane %v347, %v388
  %v390 = vlaneseq
  %v391 = vshrl.u32 %v390, 7
  %v392 = vsub.s32 2, %v391
  %v393 = vrot.slane %v347, %v392
  %v394 = vlaneseq
  %v395 = vshrl.u32 %v394, 7
  %v396 = vsub.s32 3, %v395
  %v397 = vrot.slane %v347, %v396
  %v398 = vlaneseq
  %v399 = vshrl.u32 %v398, 7
  %v400 = vsub.s32 4, %v399
  %v401 = vrot.slane %v347, %v400
  %v402 = vlaneseq
  %v403 = vshrl.u32 %v402, 7
  %v404 = vsub.s32 5, %v403
  %v405 = vrot.slane %v347, %v404
  %v406 = vlaneseq
  %v407 = vshrl.u32 %v406, 7
  %v408 = vsub.s32 6, %v407
  %v409 = vrot.slane %v347, %v408
  %v410 = vlaneseq
  %v411 = vshrl.u32 %v410, 7
  %v412 = vsub.s32 7, %v411
  %v413 = vrot.slane %v347, %v412
  %v430 = vadd.f32 %v314, %v353
  %v431 = vadd.f32 %v315, %v357
  %v432 = vadd.f32 %v316, %v361
  %v433 = vadd.f32 %v317, %v365
  %v434 = vadd.f32 %v318, %v369
  %v435 = vadd.f32 %v319, %v373
  %v436 = vadd.f32 %v320, %v377
  %v437 = vadd.f32 %v321, %v381
  %v438 = vadd.f32 %v322, %v385
  %v439 = vadd.f32 %v323, %v389
  %v440 = vadd.f32 %v324, %v393
  %v441 = vadd.f32 %v325, %v397
  %v442 = vadd.f32 %v326, %v401
  %v443 = vadd.f32 %v327, %v405
  %v444 = vadd.f32 %v328, %v409
  %v445 = vadd.f32 %v329, %v413
  %v446 = vadd.f32 %v330, %v353
  %v447 = vadd.f32 %v331, %v357
  %v448 = vadd.f32 %v332, %v361
  %v449 = vadd.f32 %v333, %v365
  %v450 = vadd.f32 %v334, %v369
  %v451 = vadd.f32 %v335, %v373
  %v452 = vadd.f32 %v336, %v377
  %v453 = vadd.f32 %v337, %v381
  %v454 = vadd.f32 %v338, %v385
  %v455 = vadd.f32 %v339, %v389
  %v456 = vadd.f32 %v340, %v393
  %v457 = vadd.f32 %v341, %v397
  %v458 = vadd.f32 %v342, %v401
  %v459 = vadd.f32 %v343, %v405
  %v460 = vadd.f32 %v344, %v409
  %v461 = vadd.f32 %v345, %v413
  %v462 = vpack.c.bf16 %v446, %v430
  %v463 = vpack.c.bf16 %v447, %v431
  %v464 = vpack.c.bf16 %v448, %v432
  %v465 = vpack.c.bf16 %v449, %v433
  %v466 = vpack.c.bf16 %v450, %v434
  %v467 = vpack.c.bf16 %v451, %v435
  %v468 = vpack.c.bf16 %v452, %v436
  %v469 = vpack.c.bf16 %v453, %v437
  %v470 = vpack.c.bf16 %v454, %v438
  %v471 = vpack.c.bf16 %v455, %v439
  %v472 = vpack.c.bf16 %v456, %v440
  %v473 = vpack.c.bf16 %v457, %v441
  %v474 = vpack.c.bf16 %v458, %v442
  %v475 = vpack.c.bf16 %v459, %v443
  %v476 = vpack.c.bf16 %v460, %v444
  %v477 = vpack.c.bf16 %v461, %v445
  %v478 = vld [vmem:[%s3] sm:$0xf]
  %v479 = vld [vmem:[%s3 + $0x4] sm:$0xf]
  %v480 = vld [vmem:[%s3 + $0x8] sm:$0xf]
  %v481 = vld [vmem:[%s3 + $0xc] sm:$0xf]
  %v482 = vld [vmem:[%s3 + $0x10] sm:$0xf]
  %v483 = vld [vmem:[%s3 + $0x14] sm:$0xf]
  %v484 = vld [vmem:[%s3 + $0x18] sm:$0xf]
  %v485 = vld [vmem:[%s3 + $0x1c] sm:$0xf]
  %v486 = vld [vmem:[%s3 + $0x20] sm:$0xf]
  %v487 = vld [vmem:[%s3 + $0x24] sm:$0xf]
  %v488 = vld [vmem:[%s3 + $0x28] sm:$0xf]
  %v489 = vld [vmem:[%s3 + $0x2c] sm:$0xf]
  %v490 = vld [vmem:[%s3 + $0x30] sm:$0xf]
  %v491 = vld [vmem:[%s3 + $0x34] sm:$0xf]
  %v492 = vld [vmem:[%s3 + $0x38] sm:$0xf]
  %v493 = vld [vmem:[%s3 + $0x3c] sm:$0xf]
  %v494 = vld [vmem:[%s3 + $0x40] sm:$0xf]
  %v495 = vld [vmem:[%s3 + $0x44] sm:$0xf]
  %v496 = vld [vmem:[%s3 + $0x48] sm:$0xf]
  %v497 = vld [vmem:[%s3 + $0x4c] sm:$0xf]
  %v498 = vld [vmem:[%s3 + $0x50] sm:$0xf]
  %v499 = vld [vmem:[%s3 + $0x54] sm:$0xf]
  %v500 = vld [vmem:[%s3 + $0x58] sm:$0xf]
  %v501 = vld [vmem:[%s3 + $0x5c] sm:$0xf]
  %v502 = vld [vmem:[%s3 + $0x60] sm:$0xf]
  %v503 = vld [vmem:[%s3 + $0x64] sm:$0xf]
  %v504 = vld [vmem:[%s3 + $0x68] sm:$0xf]
  %v505 = vld [vmem:[%s3 + $0x6c] sm:$0xf]
  %v506 = vld [vmem:[%s3 + $0x70] sm:$0xf]
  %v507 = vld [vmem:[%s3 + $0x74] sm:$0xf]
  %v508 = vld [vmem:[%s3 + $0x78] sm:$0xf]
  %v509 = vld [vmem:[%s3 + $0x7c] sm:$0xf]
  %v510 = vld [vmem:[%s3 + $0x80] sm:$0xf]
  %v511 = vld [vmem:[%s3 + $0x84] sm:$0xf]
  %v512 = vld [vmem:[%s3 + $0x88] sm:$0xf]
  %v513 = vld [vmem:[%s3 + $0x8c] sm:$0xf]
  %v514 = vld [vmem:[%s3 + $0x90] sm:$0xf]
  %v515 = vld [vmem:[%s3 + $0x94] sm:$0xf]
  %v516 = vld [vmem:[%s3 + $0x98] sm:$0xf]
  %v517 = vld [vmem:[%s3 + $0x9c] sm:$0xf]
  %v518 = vld [vmem:[%s3 + $0xa0] sm:$0xf]
  %v519 = vld [vmem:[%s3 + $0xa4] sm:$0xf]
  %v520 = vld [vmem:[%s3 + $0xa8] sm:$0xf]
  %v521 = vld [vmem:[%s3 + $0xac] sm:$0xf]
  %v522 = vld [vmem:[%s3 + $0xb0] sm:$0xf]
  %v523 = vld [vmem:[%s3 + $0xb4] sm:$0xf]
  %v524 = vld [vmem:[%s3 + $0xb8] sm:$0xf]
  %v525 = vld [vmem:[%s3 + $0xbc] sm:$0xf]
  %v526 = vld [vmem:[%s3 + $0xc0] sm:$0xf]
  %v527 = vld [vmem:[%s3 + $0xc4] sm:$0xf]
  %v528 = vld [vmem:[%s3 + $0xc8] sm:$0xf]
  %v529 = vld [vmem:[%s3 + $0xcc] sm:$0xf]
  %v530 = vld [vmem:[%s3 + $0xd0] sm:$0xf]
  %v531 = vld [vmem:[%s3 + $0xd4] sm:$0xf]
  %v532 = vld [vmem:[%s3 + $0xd8] sm:$0xf]
  %v533 = vld [vmem:[%s3 + $0xdc] sm:$0xf]
  %v534 = vld [vmem:[%s3 + $0xe0] sm:$0xf]
  %v535 = vld [vmem:[%s3 + $0xe4] sm:$0xf]
  %v536 = vld [vmem:[%s3 + $0xe8] sm:$0xf]
  %v537 = vld [vmem:[%s3 + $0xec] sm:$0xf]
  %v538 = vld [vmem:[%s3 + $0xf0] sm:$0xf]
  %v539 = vld [vmem:[%s3 + $0xf4] sm:$0xf]
  %v540 = vld [vmem:[%s3 + $0xf8] sm:$0xf]
  %v541 = vld [vmem:[%s3 + $0xfc] sm:$0xf]
  %v542 = vld [vmem:[%s3 + $0x100] sm:$0xf]
  %v543 = vld [vmem:[%s3 + $0x104] sm:$0xf]
  %v544 = vld [vmem:[%s3 + $0x108] sm:$0xf]
  %v545 = vld [vmem:[%s3 + $0x10c] sm:$0xf]
  %v546 = vld [vmem:[%s3 + $0x110] sm:$0xf]
  %v547 = vld [vmem:[%s3 + $0x114] sm:$0xf]
  %v548 = vld [vmem:[%s3 + $0x118] sm:$0xf]
  %v549 = vld [vmem:[%s3 + $0x11c] sm:$0xf]
  %v550 = vld [vmem:[%s3 + $0x120] sm:$0xf]
  %v551 = vld [vmem:[%s3 + $0x124] sm:$0xf]
  %v552 = vld [vmem:[%s3 + $0x128] sm:$0xf]
  %v553 = vld [vmem:[%s3 + $0x12c] sm:$0xf]
  %v554 = vld [vmem:[%s3 + $0x130] sm:$0xf]
  %v555 = vld [vmem:[%s3 + $0x134] sm:$0xf]
  %v556 = vld [vmem:[%s3 + $0x138] sm:$0xf]
  %v557 = vld [vmem:[%s3 + $0x13c] sm:$0xf]
  %v558 = vld [vmem:[%s3 + $0x140] sm:$0xf]
  %v559 = vld [vmem:[%s3 + $0x144] sm:$0xf]
  %v560 = vld [vmem:[%s3 + $0x148] sm:$0xf]
  %v561 = vld [vmem:[%s3 + $0x14c] sm:$0xf]
  %v562 = vld [vmem:[%s3 + $0x150] sm:$0xf]
  %v563 = vld [vmem:[%s3 + $0x154] sm:$0xf]
  %v564 = vld [vmem:[%s3 + $0x158] sm:$0xf]
  %v565 = vld [vmem:[%s3 + $0x15c] sm:$0xf]
  %v566 = vld [vmem:[%s3 + $0x160] sm:$0xf]
  %v567 = vld [vmem:[%s3 + $0x164] sm:$0xf]
  %v568 = vld [vmem:[%s3 + $0x168] sm:$0xf]
  %v569 = vld [vmem:[%s3 + $0x16c] sm:$0xf]
  %v570 = vld [vmem:[%s3 + $0x170] sm:$0xf]
  %v571 = vld [vmem:[%s3 + $0x174] sm:$0xf]
  %v572 = vld [vmem:[%s3 + $0x178] sm:$0xf]
  %v573 = vld [vmem:[%s3 + $0x17c] sm:$0xf]
  %v574 = vld [vmem:[%s3 + $0x180] sm:$0xf]
  %v575 = vld [vmem:[%s3 + $0x184] sm:$0xf]
  %v576 = vld [vmem:[%s3 + $0x188] sm:$0xf]
  %v577 = vld [vmem:[%s3 + $0x18c] sm:$0xf]
  %v578 = vld [vmem:[%s3 + $0x190] sm:$0xf]
  %v579 = vld [vmem:[%s3 + $0x194] sm:$0xf]
  %v580 = vld [vmem:[%s3 + $0x198] sm:$0xf]
  %v581 = vld [vmem:[%s3 + $0x19c] sm:$0xf]
  %v582 = vld [vmem:[%s3 + $0x1a0] sm:$0xf]
  %v583 = vld [vmem:[%s3 + $0x1a4] sm:$0xf]
  %v584 = vld [vmem:[%s3 + $0x1a8] sm:$0xf]
  %v585 = vld [vmem:[%s3 + $0x1ac] sm:$0xf]
  %v586 = vld [vmem:[%s3 + $0x1b0] sm:$0xf]
  %v587 = vld [vmem:[%s3 + $0x1b4] sm:$0xf]
  %v588 = vld [vmem:[%s3 + $0x1b8] sm:$0xf]
  %v589 = vld [vmem:[%s3 + $0x1bc] sm:$0xf]
  %v590 = vld [vmem:[%s3 + $0x1c0] sm:$0xf]
  %v591 = vld [vmem:[%s3 + $0x1c4] sm:$0xf]
  %v592 = vld [vmem:[%s3 + $0x1c8] sm:$0xf]
  %v593 = vld [vmem:[%s3 + $0x1cc] sm:$0xf]
  %v594 = vld [vmem:[%s3 + $0x1d0] sm:$0xf]
  %v595 = vld [vmem:[%s3 + $0x1d4] sm:$0xf]
  %v596 = vld [vmem:[%s3 + $0x1d8] sm:$0xf]
  %v597 = vld [vmem:[%s3 + $0x1dc] sm:$0xf]
  %v598 = vld [vmem:[%s3 + $0x1e0] sm:$0xf]
  %v599 = vld [vmem:[%s3 + $0x1e4] sm:$0xf]
  %v600 = vld [vmem:[%s3 + $0x1e8] sm:$0xf]
  %v601 = vld [vmem:[%s3 + $0x1ec] sm:$0xf]
  %v602 = vld [vmem:[%s3 + $0x1f0] sm:$0xf]
  %v603 = vld [vmem:[%s3 + $0x1f4] sm:$0xf]
  %v604 = vld [vmem:[%s3 + $0x1f8] sm:$0xf]
  %v605 = vld [vmem:[%s3 + $0x1fc] sm:$0xf]
  %v606 = vld [vmem:[%s3 + $0x200] sm:$0xf]
  %v607 = vld [vmem:[%s3 + $0x204] sm:$0xf]
  %v608 = vld [vmem:[%s3 + $0x208] sm:$0xf]
  %v609 = vld [vmem:[%s3 + $0x20c] sm:$0xf]
  %v610 = vld [vmem:[%s3 + $0x210] sm:$0xf]
  %v611 = vld [vmem:[%s3 + $0x214] sm:$0xf]
  %v612 = vld [vmem:[%s3 + $0x218] sm:$0xf]
  %v613 = vld [vmem:[%s3 + $0x21c] sm:$0xf]
  %v614 = vld [vmem:[%s3 + $0x220] sm:$0xf]
  %v615 = vld [vmem:[%s3 + $0x224] sm:$0xf]
  %v616 = vld [vmem:[%s3 + $0x228] sm:$0xf]
  %v617 = vld [vmem:[%s3 + $0x22c] sm:$0xf]
  %v618 = vld [vmem:[%s3 + $0x230] sm:$0xf]
  %v619 = vld [vmem:[%s3 + $0x234] sm:$0xf]
  %v620 = vld [vmem:[%s3 + $0x238] sm:$0xf]
  %v621 = vld [vmem:[%s3 + $0x23c] sm:$0xf]
  %v622 = vld [vmem:[%s3 + $0x240] sm:$0xf]
  %v623 = vld [vmem:[%s3 + $0x244] sm:$0xf]
  %v624 = vld [vmem:[%s3 + $0x248] sm:$0xf]
  %v625 = vld [vmem:[%s3 + $0x24c] sm:$0xf]
  %v626 = vld [vmem:[%s3 + $0x250] sm:$0xf]
  %v627 = vld [vmem:[%s3 + $0x254] sm:$0xf]
  %v628 = vld [vmem:[%s3 + $0x258] sm:$0xf]
  %v629 = vld [vmem:[%s3 + $0x25c] sm:$0xf]
  %v630 = vld [vmem:[%s3 + $0x260] sm:$0xf]
  %v631 = vld [vmem:[%s3 + $0x264] sm:$0xf]
  %v632 = vld [vmem:[%s3 + $0x268] sm:$0xf]
  %v633 = vld [vmem:[%s3 + $0x26c] sm:$0xf]
  %v634 = vld [vmem:[%s3 + $0x270] sm:$0xf]
  %v635 = vld [vmem:[%s3 + $0x274] sm:$0xf]
  %v636 = vld [vmem:[%s3 + $0x278] sm:$0xf]
  %v637 = vld [vmem:[%s3 + $0x27c] sm:$0xf]
  %v638 = vld [vmem:[%s3 + $0x280] sm:$0xf]
  %v639 = vld [vmem:[%s3 + $0x284] sm:$0xf]
  %v640 = vld [vmem:[%s3 + $0x288] sm:$0xf]
  %v641 = vld [vmem:[%s3 + $0x28c] sm:$0xf]
  %v642 = vld [vmem:[%s3 + $0x290] sm:$0xf]
  %v643 = vld [vmem:[%s3 + $0x294] sm:$0xf]
  %v644 = vld [vmem:[%s3 + $0x298] sm:$0xf]
  %v645 = vld [vmem:[%s3 + $0x29c] sm:$0xf]
  %v646 = vld [vmem:[%s3 + $0x2a0] sm:$0xf]
  %v647 = vld [vmem:[%s3 + $0x2a4] sm:$0xf]
  %v648 = vld [vmem:[%s3 + $0x2a8] sm:$0xf]
  %v649 = vld [vmem:[%s3 + $0x2ac] sm:$0xf]
  %v650 = vld [vmem:[%s3 + $0x2b0] sm:$0xf]
  %v651 = vld [vmem:[%s3 + $0x2b4] sm:$0xf]
  %v652 = vld [vmem:[%s3 + $0x2b8] sm:$0xf]
  %v653 = vld [vmem:[%s3 + $0x2bc] sm:$0xf]
  %v654 = vld [vmem:[%s3 + $0x2c0] sm:$0xf]
  %v655 = vld [vmem:[%s3 + $0x2c4] sm:$0xf]
  %v656 = vld [vmem:[%s3 + $0x2c8] sm:$0xf]
  %v657 = vld [vmem:[%s3 + $0x2cc] sm:$0xf]
  %v658 = vld [vmem:[%s3 + $0x2d0] sm:$0xf]
  %v659 = vld [vmem:[%s3 + $0x2d4] sm:$0xf]
  %v660 = vld [vmem:[%s3 + $0x2d8] sm:$0xf]
  %v661 = vld [vmem:[%s3 + $0x2dc] sm:$0xf]
  %v662 = vld [vmem:[%s3 + $0x2e0] sm:$0xf]
  %v663 = vld [vmem:[%s3 + $0x2e4] sm:$0xf]
  %v664 = vld [vmem:[%s3 + $0x2e8] sm:$0xf]
  %v665 = vld [vmem:[%s3 + $0x2ec] sm:$0xf]
  %v666 = vld [vmem:[%s3 + $0x2f0] sm:$0xf]
  %v667 = vld [vmem:[%s3 + $0x2f4] sm:$0xf]
  %v668 = vld [vmem:[%s3 + $0x2f8] sm:$0xf]
  %v669 = vld [vmem:[%s3 + $0x2fc] sm:$0xf]
  %v670 = vld [vmem:[%s3 + $0x300] sm:$0xf]
  %v671 = vld [vmem:[%s3 + $0x304] sm:$0xf]
  %v672 = vld [vmem:[%s3 + $0x308] sm:$0xf]
  %v673 = vld [vmem:[%s3 + $0x30c] sm:$0xf]
  %v674 = vld [vmem:[%s3 + $0x310] sm:$0xf]
  %v675 = vld [vmem:[%s3 + $0x314] sm:$0xf]
  %v676 = vld [vmem:[%s3 + $0x318] sm:$0xf]
  %v677 = vld [vmem:[%s3 + $0x31c] sm:$0xf]
  %v678 = vld [vmem:[%s3 + $0x320] sm:$0xf]
  %v679 = vld [vmem:[%s3 + $0x324] sm:$0xf]
  %v680 = vld [vmem:[%s3 + $0x328] sm:$0xf]
  %v681 = vld [vmem:[%s3 + $0x32c] sm:$0xf]
  %v682 = vld [vmem:[%s3 + $0x330] sm:$0xf]
  %v683 = vld [vmem:[%s3 + $0x334] sm:$0xf]
  %v684 = vld [vmem:[%s3 + $0x338] sm:$0xf]
  %v685 = vld [vmem:[%s3 + $0x33c] sm:$0xf]
  %v686 = vld [vmem:[%s3 + $0x340] sm:$0xf]
  %v687 = vld [vmem:[%s3 + $0x344] sm:$0xf]
  %v688 = vld [vmem:[%s3 + $0x348] sm:$0xf]
  %v689 = vld [vmem:[%s3 + $0x34c] sm:$0xf]
  %v690 = vld [vmem:[%s3 + $0x350] sm:$0xf]
  %v691 = vld [vmem:[%s3 + $0x354] sm:$0xf]
  %v692 = vld [vmem:[%s3 + $0x358] sm:$0xf]
  %v693 = vld [vmem:[%s3 + $0x35c] sm:$0xf]
  %v694 = vld [vmem:[%s3 + $0x360] sm:$0xf]
  %v695 = vld [vmem:[%s3 + $0x364] sm:$0xf]
  %v696 = vld [vmem:[%s3 + $0x368] sm:$0xf]
  %v697 = vld [vmem:[%s3 + $0x36c] sm:$0xf]
  %v698 = vld [vmem:[%s3 + $0x370] sm:$0xf]
  %v699 = vld [vmem:[%s3 + $0x374] sm:$0xf]
  %v700 = vld [vmem:[%s3 + $0x378] sm:$0xf]
  %v701 = vld [vmem:[%s3 + $0x37c] sm:$0xf]
  %v702 = vld [vmem:[%s3 + $0x380] sm:$0xf]
  %v703 = vld [vmem:[%s3 + $0x384] sm:$0xf]
  %v704 = vld [vmem:[%s3 + $0x388] sm:$0xf]
  %v705 = vld [vmem:[%s3 + $0x38c] sm:$0xf]
  %v706 = vld [vmem:[%s3 + $0x390] sm:$0xf]
  %v707 = vld [vmem:[%s3 + $0x394] sm:$0xf]
  %v708 = vld [vmem:[%s3 + $0x398] sm:$0xf]
  %v709 = vld [vmem:[%s3 + $0x39c] sm:$0xf]
  %v710 = vld [vmem:[%s3 + $0x3a0] sm:$0xf]
  %v711 = vld [vmem:[%s3 + $0x3a4] sm:$0xf]
  %v712 = vld [vmem:[%s3 + $0x3a8] sm:$0xf]
  %v713 = vld [vmem:[%s3 + $0x3ac] sm:$0xf]
  %v714 = vld [vmem:[%s3 + $0x3b0] sm:$0xf]
  %v715 = vld [vmem:[%s3 + $0x3b4] sm:$0xf]
  %v716 = vld [vmem:[%s3 + $0x3b8] sm:$0xf]
  %v717 = vld [vmem:[%s3 + $0x3bc] sm:$0xf]
  %v718 = vld [vmem:[%s3 + $0x3c0] sm:$0xf]
  %v719 = vld [vmem:[%s3 + $0x3c4] sm:$0xf]
  %v720 = vld [vmem:[%s3 + $0x3c8] sm:$0xf]
  %v721 = vld [vmem:[%s3 + $0x3cc] sm:$0xf]
  %v722 = vld [vmem:[%s3 + $0x3d0] sm:$0xf]
  %v723 = vld [vmem:[%s3 + $0x3d4] sm:$0xf]
  %v724 = vld [vmem:[%s3 + $0x3d8] sm:$0xf]
  %v725 = vld [vmem:[%s3 + $0x3dc] sm:$0xf]
  %v726 = vld [vmem:[%s3 + $0x3e0] sm:$0xf]
  %v727 = vld [vmem:[%s3 + $0x3e4] sm:$0xf]
  %v728 = vld [vmem:[%s3 + $0x3e8] sm:$0xf]
  %v729 = vld [vmem:[%s3 + $0x3ec] sm:$0xf]
  %v730 = vld [vmem:[%s3 + $0x3f0] sm:$0xf]
  %v731 = vld [vmem:[%s3 + $0x3f4] sm:$0xf]
  %v732 = vld [vmem:[%s3 + $0x3f8] sm:$0xf]
  %v733 = vld [vmem:[%s3 + $0x3fc] sm:$0xf]
  %v734 = vld [vmem:[%s4] sm:$0x1]
  %v736 = vlaneseq
  %v737 = vshrl.u32 %v736, 7
  %v738 = vsub.s32 0, %v737
  %v739 = vrot.slane %v734, %v738
  %v997 = vunpack.c.l.b16 %v478
  %v998 = vunpack.c.l.b16 %v479
  %v999 = vunpack.c.l.b16 %v480
  %v1000 = vunpack.c.l.b16 %v481
  %v1001 = vunpack.c.l.b16 %v482
  %v1002 = vunpack.c.l.b16 %v483
  %v1003 = vunpack.c.l.b16 %v484
  %v1004 = vunpack.c.l.b16 %v485
  %v1005 = vunpack.c.l.b16 %v486
  %v1006 = vunpack.c.l.b16 %v487
  %v1007 = vunpack.c.l.b16 %v488
  %v1008 = vunpack.c.l.b16 %v489
  %v1009 = vunpack.c.l.b16 %v490
  %v1010 = vunpack.c.l.b16 %v491
  %v1011 = vunpack.c.l.b16 %v492
  %v1012 = vunpack.c.l.b16 %v493
  %v1013 = vunpack.c.l.b16 %v494
  %v1014 = vunpack.c.l.b16 %v495
  %v1015 = vunpack.c.l.b16 %v496
  %v1016 = vunpack.c.l.b16 %v497
  %v1017 = vunpack.c.l.b16 %v498
  %v1018 = vunpack.c.l.b16 %v499
  %v1019 = vunpack.c.l.b16 %v500
  %v1020 = vunpack.c.l.b16 %v501
  %v1021 = vunpack.c.l.b16 %v502
  %v1022 = vunpack.c.l.b16 %v503
  %v1023 = vunpack.c.l.b16 %v504
  %v1024 = vunpack.c.l.b16 %v505
  %v1025 = vunpack.c.l.b16 %v506
  %v1026 = vunpack.c.l.b16 %v507
  %v1027 = vunpack.c.l.b16 %v508
  %v1028 = vunpack.c.l.b16 %v509
  %v1029 = vunpack.c.l.b16 %v510
  %v1030 = vunpack.c.l.b16 %v511
  %v1031 = vunpack.c.l.b16 %v512
  %v1032 = vunpack.c.l.b16 %v513
  %v1033 = vunpack.c.l.b16 %v514
  %v1034 = vunpack.c.l.b16 %v515
  %v1035 = vunpack.c.l.b16 %v516
  %v1036 = vunpack.c.l.b16 %v517
  %v1037 = vunpack.c.l.b16 %v518
  %v1038 = vunpack.c.l.b16 %v519
  %v1039 = vunpack.c.l.b16 %v520
  %v1040 = vunpack.c.l.b16 %v521
  %v1041 = vunpack.c.l.b16 %v522
  %v1042 = vunpack.c.l.b16 %v523
  %v1043 = vunpack.c.l.b16 %v524
  %v1044 = vunpack.c.l.b16 %v525
  %v1045 = vunpack.c.l.b16 %v526
  %v1046 = vunpack.c.l.b16 %v527
  %v1047 = vunpack.c.l.b16 %v528
  %v1048 = vunpack.c.l.b16 %v529
  %v1049 = vunpack.c.l.b16 %v530
  %v1050 = vunpack.c.l.b16 %v531
  %v1051 = vunpack.c.l.b16 %v532
  %v1052 = vunpack.c.l.b16 %v533
  %v1053 = vunpack.c.l.b16 %v534
  %v1054 = vunpack.c.l.b16 %v535
  %v1055 = vunpack.c.l.b16 %v536
  %v1056 = vunpack.c.l.b16 %v537
  %v1057 = vunpack.c.l.b16 %v538
  %v1058 = vunpack.c.l.b16 %v539
  %v1059 = vunpack.c.l.b16 %v540
  %v1060 = vunpack.c.l.b16 %v541
  %v1061 = vunpack.c.l.b16 %v542
  %v1062 = vunpack.c.l.b16 %v543
  %v1063 = vunpack.c.l.b16 %v544
  %v1064 = vunpack.c.l.b16 %v545
  %v1065 = vunpack.c.l.b16 %v546
  %v1066 = vunpack.c.l.b16 %v547
  %v1067 = vunpack.c.l.b16 %v548
  %v1068 = vunpack.c.l.b16 %v549
  %v1069 = vunpack.c.l.b16 %v550
  %v1070 = vunpack.c.l.b16 %v551
  %v1071 = vunpack.c.l.b16 %v552
  %v1072 = vunpack.c.l.b16 %v553
  %v1073 = vunpack.c.l.b16 %v554
  %v1074 = vunpack.c.l.b16 %v555
  %v1075 = vunpack.c.l.b16 %v556
  %v1076 = vunpack.c.l.b16 %v557
  %v1077 = vunpack.c.l.b16 %v558
  %v1078 = vunpack.c.l.b16 %v559
  %v1079 = vunpack.c.l.b16 %v560
  %v1080 = vunpack.c.l.b16 %v561
  %v1081 = vunpack.c.l.b16 %v562
  %v1082 = vunpack.c.l.b16 %v563
  %v1083 = vunpack.c.l.b16 %v564
  %v1084 = vunpack.c.l.b16 %v565
  %v1085 = vunpack.c.l.b16 %v566
  %v1086 = vunpack.c.l.b16 %v567
  %v1087 = vunpack.c.l.b16 %v568
  %v1088 = vunpack.c.l.b16 %v569
  %v1089 = vunpack.c.l.b16 %v570
  %v1090 = vunpack.c.l.b16 %v571
  %v1091 = vunpack.c.l.b16 %v572
  %v1092 = vunpack.c.l.b16 %v573
  %v1093 = vunpack.c.l.b16 %v574
  %v1094 = vunpack.c.l.b16 %v575
  %v1095 = vunpack.c.l.b16 %v576
  %v1096 = vunpack.c.l.b16 %v577
  %v1097 = vunpack.c.l.b16 %v578
  %v1098 = vunpack.c.l.b16 %v579
  %v1099 = vunpack.c.l.b16 %v580
  %v1100 = vunpack.c.l.b16 %v581
  %v1101 = vunpack.c.l.b16 %v582
  %v1102 = vunpack.c.l.b16 %v583
  %v1103 = vunpack.c.l.b16 %v584
  %v1104 = vunpack.c.l.b16 %v585
  %v1105 = vunpack.c.l.b16 %v586
  %v1106 = vunpack.c.l.b16 %v587
  %v1107 = vunpack.c.l.b16 %v588
  %v1108 = vunpack.c.l.b16 %v589
  %v1109 = vunpack.c.l.b16 %v590
  %v1110 = vunpack.c.l.b16 %v591
  %v1111 = vunpack.c.l.b16 %v592
  %v1112 = vunpack.c.l.b16 %v593
  %v1113 = vunpack.c.l.b16 %v594
  %v1114 = vunpack.c.l.b16 %v595
  %v1115 = vunpack.c.l.b16 %v596
  %v1116 = vunpack.c.l.b16 %v597
  %v1117 = vunpack.c.l.b16 %v598
  %v1118 = vunpack.c.l.b16 %v599
  %v1119 = vunpack.c.l.b16 %v600
  %v1120 = vunpack.c.l.b16 %v601
  %v1121 = vunpack.c.l.b16 %v602
  %v1122 = vunpack.c.l.b16 %v603
  %v1123 = vunpack.c.l.b16 %v604
  %v1124 = vunpack.c.l.b16 %v605
  %v1125 = vunpack.c.l.b16 %v606
  %v1126 = vunpack.c.l.b16 %v607
  %v1127 = vunpack.c.l.b16 %v608
  %v1128 = vunpack.c.l.b16 %v609
  %v1129 = vunpack.c.l.b16 %v610
  %v1130 = vunpack.c.l.b16 %v611
  %v1131 = vunpack.c.l.b16 %v612
  %v1132 = vunpack.c.l.b16 %v613
  %v1133 = vunpack.c.l.b16 %v614
  %v1134 = vunpack.c.l.b16 %v615
  %v1135 = vunpack.c.l.b16 %v616
  %v1136 = vunpack.c.l.b16 %v617
  %v1137 = vunpack.c.l.b16 %v618
  %v1138 = vunpack.c.l.b16 %v619
  %v1139 = vunpack.c.l.b16 %v620
  %v1140 = vunpack.c.l.b16 %v621
  %v1141 = vunpack.c.l.b16 %v622
  %v1142 = vunpack.c.l.b16 %v623
  %v1143 = vunpack.c.l.b16 %v624
  %v1144 = vunpack.c.l.b16 %v625
  %v1145 = vunpack.c.l.b16 %v626
  %v1146 = vunpack.c.l.b16 %v627
  %v1147 = vunpack.c.l.b16 %v628
  %v1148 = vunpack.c.l.b16 %v629
  %v1149 = vunpack.c.l.b16 %v630
  %v1150 = vunpack.c.l.b16 %v631
  %v1151 = vunpack.c.l.b16 %v632
  %v1152 = vunpack.c.l.b16 %v633
  %v1153 = vunpack.c.l.b16 %v634
  %v1154 = vunpack.c.l.b16 %v635
  %v1155 = vunpack.c.l.b16 %v636
  %v1156 = vunpack.c.l.b16 %v637
  %v1157 = vunpack.c.l.b16 %v638
  %v1158 = vunpack.c.l.b16 %v639
  %v1159 = vunpack.c.l.b16 %v640
  %v1160 = vunpack.c.l.b16 %v641
  %v1161 = vunpack.c.l.b16 %v642
  %v1162 = vunpack.c.l.b16 %v643
  %v1163 = vunpack.c.l.b16 %v644
  %v1164 = vunpack.c.l.b16 %v645
  %v1165 = vunpack.c.l.b16 %v646
  %v1166 = vunpack.c.l.b16 %v647
  %v1167 = vunpack.c.l.b16 %v648
  %v1168 = vunpack.c.l.b16 %v649
  %v1169 = vunpack.c.l.b16 %v650
  %v1170 = vunpack.c.l.b16 %v651
  %v1171 = vunpack.c.l.b16 %v652
  %v1172 = vunpack.c.l.b16 %v653
  %v1173 = vunpack.c.l.b16 %v654
  %v1174 = vunpack.c.l.b16 %v655
  %v1175 = vunpack.c.l.b16 %v656
  %v1176 = vunpack.c.l.b16 %v657
  %v1177 = vunpack.c.l.b16 %v658
  %v1178 = vunpack.c.l.b16 %v659
  %v1179 = vunpack.c.l.b16 %v660
  %v1180 = vunpack.c.l.b16 %v661
  %v1181 = vunpack.c.l.b16 %v662
  %v1182 = vunpack.c.l.b16 %v663
  %v1183 = vunpack.c.l.b16 %v664
  %v1184 = vunpack.c.l.b16 %v665
  %v1185 = vunpack.c.l.b16 %v666
  %v1186 = vunpack.c.l.b16 %v667
  %v1187 = vunpack.c.l.b16 %v668
  %v1188 = vunpack.c.l.b16 %v669
  %v1189 = vunpack.c.l.b16 %v670
  %v1190 = vunpack.c.l.b16 %v671
  %v1191 = vunpack.c.l.b16 %v672
  %v1192 = vunpack.c.l.b16 %v673
  %v1193 = vunpack.c.l.b16 %v674
  %v1194 = vunpack.c.l.b16 %v675
  %v1195 = vunpack.c.l.b16 %v676
  %v1196 = vunpack.c.l.b16 %v677
  %v1197 = vunpack.c.l.b16 %v678
  %v1198 = vunpack.c.l.b16 %v679
  %v1199 = vunpack.c.l.b16 %v680
  %v1200 = vunpack.c.l.b16 %v681
  %v1201 = vunpack.c.l.b16 %v682
  %v1202 = vunpack.c.l.b16 %v683
  %v1203 = vunpack.c.l.b16 %v684
  %v1204 = vunpack.c.l.b16 %v685
  %v1205 = vunpack.c.l.b16 %v686
  %v1206 = vunpack.c.l.b16 %v687
  %v1207 = vunpack.c.l.b16 %v688
  %v1208 = vunpack.c.l.b16 %v689
  %v1209 = vunpack.c.l.b16 %v690
  %v1210 = vunpack.c.l.b16 %v691
  %v1211 = vunpack.c.l.b16 %v692
  %v1212 = vunpack.c.l.b16 %v693
  %v1213 = vunpack.c.l.b16 %v694
  %v1214 = vunpack.c.l.b16 %v695
  %v1215 = vunpack.c.l.b16 %v696
  %v1216 = vunpack.c.l.b16 %v697
  %v1217 = vunpack.c.l.b16 %v698
  %v1218 = vunpack.c.l.b16 %v699
  %v1219 = vunpack.c.l.b16 %v700
  %v1220 = vunpack.c.l.b16 %v701
  %v1221 = vunpack.c.l.b16 %v702
  %v1222 = vunpack.c.l.b16 %v703
  %v1223 = vunpack.c.l.b16 %v704
  %v1224 = vunpack.c.l.b16 %v705
  %v1225 = vunpack.c.l.b16 %v706
  %v1226 = vunpack.c.l.b16 %v707
  %v1227 = vunpack.c.l.b16 %v708
  %v1228 = vunpack.c.l.b16 %v709
  %v1229 = vunpack.c.l.b16 %v710
  %v1230 = vunpack.c.l.b16 %v711
  %v1231 = vunpack.c.l.b16 %v712
  %v1232 = vunpack.c.l.b16 %v713
  %v1233 = vunpack.c.l.b16 %v714
  %v1234 = vunpack.c.l.b16 %v715
  %v1235 = vunpack.c.l.b16 %v716
  %v1236 = vunpack.c.l.b16 %v717
  %v1237 = vunpack.c.l.b16 %v718
  %v1238 = vunpack.c.l.b16 %v719
  %v1239 = vunpack.c.l.b16 %v720
  %v1240 = vunpack.c.l.b16 %v721
  %v1241 = vunpack.c.l.b16 %v722
  %v1242 = vunpack.c.l.b16 %v723
  %v1243 = vunpack.c.l.b16 %v724
  %v1244 = vunpack.c.l.b16 %v725
  %v1245 = vunpack.c.l.b16 %v726
  %v1246 = vunpack.c.l.b16 %v727
  %v1247 = vunpack.c.l.b16 %v728
  %v1248 = vunpack.c.l.b16 %v729
  %v1249 = vunpack.c.l.b16 %v730
  %v1250 = vunpack.c.l.b16 %v731
  %v1251 = vunpack.c.l.b16 %v732
  %v1252 = vunpack.c.l.b16 %v733
  %v1253 = vpack.c.b16 %v998, %v997
  %v1254 = vpack.c.b16 %v1000, %v999
  %v1255 = vpack.c.b16 %v1002, %v1001
  %v1256 = vpack.c.b16 %v1004, %v1003
  %v1257 = vpack.c.b16 %v1006, %v1005
  %v1258 = vpack.c.b16 %v1008, %v1007
  %v1259 = vpack.c.b16 %v1010, %v1009
  %v1260 = vpack.c.b16 %v1012, %v1011
  %v1261 = vpack.c.b16 %v1014, %v1013
  %v1262 = vpack.c.b16 %v1016, %v1015
  %v1263 = vpack.c.b16 %v1018, %v1017
  %v1264 = vpack.c.b16 %v1020, %v1019
  %v1265 = vpack.c.b16 %v1022, %v1021
  %v1266 = vpack.c.b16 %v1024, %v1023
  %v1267 = vpack.c.b16 %v1026, %v1025
  %v1268 = vpack.c.b16 %v1028, %v1027
  %v1269 = vpack.c.b16 %v1030, %v1029
  %v1270 = vpack.c.b16 %v1032, %v1031
  %v1271 = vpack.c.b16 %v1034, %v1033
  %v1272 = vpack.c.b16 %v1036, %v1035
  %v1273 = vpack.c.b16 %v1038, %v1037
  %v1274 = vpack.c.b16 %v1040, %v1039
  %v1275 = vpack.c.b16 %v1042, %v1041
  %v1276 = vpack.c.b16 %v1044, %v1043
  %v1277 = vpack.c.b16 %v1046, %v1045
  %v1278 = vpack.c.b16 %v1048, %v1047
  %v1279 = vpack.c.b16 %v1050, %v1049
  %v1280 = vpack.c.b16 %v1052, %v1051
  %v1281 = vpack.c.b16 %v1054, %v1053
  %v1282 = vpack.c.b16 %v1056, %v1055
  %v1283 = vpack.c.b16 %v1058, %v1057
  %v1284 = vpack.c.b16 %v1060, %v1059
  %v1285 = vpack.c.b16 %v1062, %v1061
  %v1286 = vpack.c.b16 %v1064, %v1063
  %v1287 = vpack.c.b16 %v1066, %v1065
  %v1288 = vpack.c.b16 %v1068, %v1067
  %v1289 = vpack.c.b16 %v1070, %v1069
  %v1290 = vpack.c.b16 %v1072, %v1071
  %v1291 = vpack.c.b16 %v1074, %v1073
  %v1292 = vpack.c.b16 %v1076, %v1075
  %v1293 = vpack.c.b16 %v1078, %v1077
  %v1294 = vpack.c.b16 %v1080, %v1079
  %v1295 = vpack.c.b16 %v1082, %v1081
  %v1296 = vpack.c.b16 %v1084, %v1083
  %v1297 = vpack.c.b16 %v1086, %v1085
  %v1298 = vpack.c.b16 %v1088, %v1087
  %v1299 = vpack.c.b16 %v1090, %v1089
  %v1300 = vpack.c.b16 %v1092, %v1091
  %v1301 = vpack.c.b16 %v1094, %v1093
  %v1302 = vpack.c.b16 %v1096, %v1095
  %v1303 = vpack.c.b16 %v1098, %v1097
  %v1304 = vpack.c.b16 %v1100, %v1099
  %v1305 = vpack.c.b16 %v1102, %v1101
  %v1306 = vpack.c.b16 %v1104, %v1103
  %v1307 = vpack.c.b16 %v1106, %v1105
  %v1308 = vpack.c.b16 %v1108, %v1107
  %v1309 = vpack.c.b16 %v1110, %v1109
  %v1310 = vpack.c.b16 %v1112, %v1111
  %v1311 = vpack.c.b16 %v1114, %v1113
  %v1312 = vpack.c.b16 %v1116, %v1115
  %v1313 = vpack.c.b16 %v1118, %v1117
  %v1314 = vpack.c.b16 %v1120, %v1119
  %v1315 = vpack.c.b16 %v1122, %v1121
  %v1316 = vpack.c.b16 %v1124, %v1123
  %v1317 = vpack.c.b16 %v1126, %v1125
  %v1318 = vpack.c.b16 %v1128, %v1127
  %v1319 = vpack.c.b16 %v1130, %v1129
  %v1320 = vpack.c.b16 %v1132, %v1131
  %v1321 = vpack.c.b16 %v1134, %v1133
  %v1322 = vpack.c.b16 %v1136, %v1135
  %v1323 = vpack.c.b16 %v1138, %v1137
  %v1324 = vpack.c.b16 %v1140, %v1139
  %v1325 = vpack.c.b16 %v1142, %v1141
  %v1326 = vpack.c.b16 %v1144, %v1143
  %v1327 = vpack.c.b16 %v1146, %v1145
  %v1328 = vpack.c.b16 %v1148, %v1147
  %v1329 = vpack.c.b16 %v1150, %v1149
  %v1330 = vpack.c.b16 %v1152, %v1151
  %v1331 = vpack.c.b16 %v1154, %v1153
  %v1332 = vpack.c.b16 %v1156, %v1155
  %v1333 = vpack.c.b16 %v1158, %v1157
  %v1334 = vpack.c.b16 %v1160, %v1159
  %v1335 = vpack.c.b16 %v1162, %v1161
  %v1336 = vpack.c.b16 %v1164, %v1163
  %v1337 = vpack.c.b16 %v1166, %v1165
  %v1338 = vpack.c.b16 %v1168, %v1167
  %v1339 = vpack.c.b16 %v1170, %v1169
  %v1340 = vpack.c.b16 %v1172, %v1171
  %v1341 = vpack.c.b16 %v1174, %v1173
  %v1342 = vpack.c.b16 %v1176, %v1175
  %v1343 = vpack.c.b16 %v1178, %v1177
  %v1344 = vpack.c.b16 %v1180, %v1179
  %v1345 = vpack.c.b16 %v1182, %v1181
  %v1346 = vpack.c.b16 %v1184, %v1183
  %v1347 = vpack.c.b16 %v1186, %v1185
  %v1348 = vpack.c.b16 %v1188, %v1187
  %v1349 = vpack.c.b16 %v1190, %v1189
  %v1350 = vpack.c.b16 %v1192, %v1191
  %v1351 = vpack.c.b16 %v1194, %v1193
  %v1352 = vpack.c.b16 %v1196, %v1195
  %v1353 = vpack.c.b16 %v1198, %v1197
  %v1354 = vpack.c.b16 %v1200, %v1199
  %v1355 = vpack.c.b16 %v1202, %v1201
  %v1356 = vpack.c.b16 %v1204, %v1203
  %v1357 = vpack.c.b16 %v1206, %v1205
  %v1358 = vpack.c.b16 %v1208, %v1207
  %v1359 = vpack.c.b16 %v1210, %v1209
  %v1360 = vpack.c.b16 %v1212, %v1211
  %v1361 = vpack.c.b16 %v1214, %v1213
  %v1362 = vpack.c.b16 %v1216, %v1215
  %v1363 = vpack.c.b16 %v1218, %v1217
  %v1364 = vpack.c.b16 %v1220, %v1219
  %v1365 = vpack.c.b16 %v1222, %v1221
  %v1366 = vpack.c.b16 %v1224, %v1223
  %v1367 = vpack.c.b16 %v1226, %v1225
  %v1368 = vpack.c.b16 %v1228, %v1227
  %v1369 = vpack.c.b16 %v1230, %v1229
  %v1370 = vpack.c.b16 %v1232, %v1231
  %v1371 = vpack.c.b16 %v1234, %v1233
  %v1372 = vpack.c.b16 %v1236, %v1235
  %v1373 = vpack.c.b16 %v1238, %v1237
  %v1374 = vpack.c.b16 %v1240, %v1239
  %v1375 = vpack.c.b16 %v1242, %v1241
  %v1376 = vpack.c.b16 %v1244, %v1243
  %v1377 = vpack.c.b16 %v1246, %v1245
  %v1378 = vpack.c.b16 %v1248, %v1247
  %v1379 = vpack.c.b16 %v1250, %v1249
  %v1380 = vpack.c.b16 %v1252, %v1251
  %1509 = vmatprep.subr.bf16.mxu0 0
  %1510 = vmatpush1.bf16.msra.mxu0 %v1253
  %1511 = vmatprep.subr.bf16.mxu0 0
  %1512 = vmatpush1.bf16.msra.mxu0 %v1254
  %1513 = vmatprep.subr.bf16.mxu0 0
  %1514 = vmatpush1.bf16.msra.mxu0 %v1255
  %1515 = vmatprep.subr.bf16.mxu0 0
  %1516 = vmatpush1.bf16.msra.mxu0 %v1256
  %1517 = vmatprep.subr.bf16.mxu0 0
  %1518 = vmatpush1.bf16.msra.mxu0 %v1257
  %1519 = vmatprep.subr.bf16.mxu0 0
  %1520 = vmatpush1.bf16.msra.mxu0 %v1258
  %1521 = vmatprep.subr.bf16.mxu0 0
  %1522 = vmatpush1.bf16.msra.mxu0 %v1259
  %1523 = vmatprep.subr.bf16.mxu0 0
  %1524 = vmatpush1.bf16.msra.mxu0 %v1260
  %1525 = vmatprep.subr.bf16.mxu0 0
  %1526 = vmatpush1.bf16.msra.mxu0 %v1261
  %1527 = vmatprep.subr.bf16.mxu0 0
  %1528 = vmatpush1.bf16.msra.mxu0 %v1262
  %1529 = vmatprep.subr.bf16.mxu0 0
  %1530 = vmatpush1.bf16.msra.mxu0 %v1263
  %1531 = vmatprep.subr.bf16.mxu0 0
  %1532 = vmatpush1.bf16.msra.mxu0 %v1264
  %1533 = vmatprep.subr.bf16.mxu0 0
  %1534 = vmatpush1.bf16.msra.mxu0 %v1265
  %1535 = vmatprep.subr.bf16.mxu0 0
  %1536 = vmatpush1.bf16.msra.mxu0 %v1266
  %1537 = vmatprep.subr.bf16.mxu0 0
  %1538 = vmatpush1.bf16.msra.mxu0 %v1267
  %1539 = vmatprep.subr.bf16.mxu0 0
  %1540 = vmatpush1.bf16.msra.mxu0 %v1268
  %1541 = vmatprep.mubr.bf16.mxu0 %v463
  %1542 = vmatmul.mubr.bf16.gmra.mrb[0].mxu0 %v462
  %v1543 = vpop.f32.mrb[0].mxu0
  %v1544 = vadd.f32 %v739, %v1543
  %v1545 = vpop.f32.mrb[0].mxu0
  %v1546 = vpop.f32.mrb[0].mxu0
  %v1547 = vadd.f32 %v739, %v1546
  %v1548 = vpop.f32.mrb[0].mxu0
  %1549 = vdwg.mxu0
  %1550 = vmatprep.subr.bf16.mxu0 0
  %1551 = vmatpush1.bf16.msra.mxu0 %v1269
  %1552 = vmatprep.subr.bf16.mxu0 0
  %1553 = vmatpush1.bf16.msra.mxu0 %v1270
  %1554 = vmatprep.subr.bf16.mxu0 0
  %1555 = vmatpush1.bf16.msra.mxu0 %v1271
  %1556 = vmatprep.subr.bf16.mxu0 0
  %1557 = vmatpush1.bf16.msra.mxu0 %v1272
  %1558 = vmatprep.subr.bf16.mxu0 0
  %1559 = vmatpush1.bf16.msra.mxu0 %v1273
  %1560 = vmatprep.subr.bf16.mxu0 0
  %1561 = vmatpush1.bf16.msra.mxu0 %v1274
  %1562 = vmatprep.subr.bf16.mxu0 0
  %1563 = vmatpush1.bf16.msra.mxu0 %v1275
  %1564 = vmatprep.subr.bf16.mxu0 0
  %1565 = vmatpush1.bf16.msra.mxu0 %v1276
  %1566 = vmatprep.subr.bf16.mxu0 0
  %1567 = vmatpush1.bf16.msra.mxu0 %v1277
  %1568 = vmatprep.subr.bf16.mxu0 0
  %1569 = vmatpush1.bf16.msra.mxu0 %v1278
  %1570 = vmatprep.subr.bf16.mxu0 0
  %1571 = vmatpush1.bf16.msra.mxu0 %v1279
  %1572 = vmatprep.subr.bf16.mxu0 0
  %1573 = vmatpush1.bf16.msra.mxu0 %v1280
  %1574 = vmatprep.subr.bf16.mxu0 0
  %1575 = vmatpush1.bf16.msra.mxu0 %v1281
  %1576 = vmatprep.subr.bf16.mxu0 0
  %1577 = vmatpush1.bf16.msra.mxu0 %v1282
  %1578 = vmatprep.subr.bf16.mxu0 0
  %1579 = vmatpush1.bf16.msra.mxu0 %v1283
  %1580 = vmatprep.subr.bf16.mxu0 0
  %1581 = vmatpush1.bf16.msra.mxu0 %v1284
  %1582 = vmatprep.mubr.bf16.mxu0 %v465
  %1583 = vmatmul.mubr.bf16.gmra.mrb[0].mxu0 %v464
  %v1584 = vpop.f32.mrb[0].mxu0
  %v1585 = vadd.f32 %v1544, %v1584
  %v1586 = vpop.f32.mrb[0].mxu0
  %v1587 = vpop.f32.mrb[0].mxu0
  %v1588 = vadd.f32 %v1547, %v1587
  %v1589 = vpop.f32.mrb[0].mxu0
  %1590 = vdwg.mxu0
  %1591 = vmatprep.subr.bf16.mxu0 0
  %1592 = vmatpush1.bf16.msra.mxu0 %v1285
  %1593 = vmatprep.subr.bf16.mxu0 0
  %1594 = vmatpush1.bf16.msra.mxu0 %v1286
  %1595 = vmatprep.subr.bf16.mxu0 0
  %1596 = vmatpush1.bf16.msra.mxu0 %v1287
  %1597 = vmatprep.subr.bf16.mxu0 0
  %1598 = vmatpush1.bf16.msra.mxu0 %v1288
  %1599 = vmatprep.subr.bf16.mxu0 0
  %1600 = vmatpush1.bf16.msra.mxu0 %v1289
  %1601 = vmatprep.subr.bf16.mxu0 0
  %1602 = vmatpush1.bf16.msra.mxu0 %v1290
  %1603 = vmatprep.subr.bf16.mxu0 0
  %1604 = vmatpush1.bf16.msra.mxu0 %v1291
  %1605 = vmatprep.subr.bf16.mxu0 0
  %1606 = vmatpush1.bf16.msra.mxu0 %v1292
  %1607 = vmatprep.subr.bf16.mxu0 0
  %1608 = vmatpush1.bf16.msra.mxu0 %v1293
  %1609 = vmatprep.subr.bf16.mxu0 0
  %1610 = vmatpush1.bf16.msra.mxu0 %v1294
  %1611 = vmatprep.subr.bf16.mxu0 0
  %1612 = vmatpush1.bf16.msra.mxu0 %v1295
  %1613 = vmatprep.subr.bf16.mxu0 0
  %1614 = vmatpush1.bf16.msra.mxu0 %v1296
  %1615 = vmatprep.subr.bf16.mxu0 0
  %1616 = vmatpush1.bf16.msra.mxu0 %v1297
  %1617 = vmatprep.subr.bf16.mxu0 0
  %1618 = vmatpush1.bf16.msra.mxu0 %v1298
  %1619 = vmatprep.subr.bf16.mxu0 0
  %1620 = vmatpush1.bf16.msra.mxu0 %v1299
  %1621 = vmatprep.subr.bf16.mxu0 0
  %1622 = vmatpush1.bf16.msra.mxu0 %v1300
  %1623 = vmatprep.mubr.bf16.mxu0 %v467
  %1624 = vmatmul.mubr.bf16.gmra.mrb[0].mxu0 %v466
  %v1625 = vpop.f32.mrb[0].mxu0
  %v1626 = vadd.f32 %v1585, %v1625
  %v1627 = vpop.f32.mrb[0].mxu0
  %v1628 = vpop.f32.mrb[0].mxu0
  %v1629 = vadd.f32 %v1588, %v1628
  %v1630 = vpop.f32.mrb[0].mxu0
  %1631 = vdwg.mxu0
  %1632 = vmatprep.subr.bf16.mxu0 0
  %1633 = vmatpush1.bf16.msra.mxu0 %v1301
  %1634 = vmatprep.subr.bf16.mxu0 0
  %1635 = vmatpush1.bf16.msra.mxu0 %v1302
  %1636 = vmatprep.subr.bf16.mxu0 0
  %1637 = vmatpush1.bf16.msra.mxu0 %v1303
  %1638 = vmatprep.subr.bf16.mxu0 0
  %1639 = vmatpush1.bf16.msra.mxu0 %v1304
  %1640 = vmatprep.subr.bf16.mxu0 0
  %1641 = vmatpush1.bf16.msra.mxu0 %v1305
  %1642 = vmatprep.subr.bf16.mxu0 0
  %1643 = vmatpush1.bf16.msra.mxu0 %v1306
  %1644 = vmatprep.subr.bf16.mxu0 0
  %1645 = vmatpush1.bf16.msra.mxu0 %v1307
  %1646 = vmatprep.subr.bf16.mxu0 0
  %1647 = vmatpush1.bf16.msra.mxu0 %v1308
  %1648 = vmatprep.subr.bf16.mxu0 0
  %1649 = vmatpush1.bf16.msra.mxu0 %v1309
  %1650 = vmatprep.subr.bf16.mxu0 0
  %1651 = vmatpush1.bf16.msra.mxu0 %v1310
  %1652 = vmatprep.subr.bf16.mxu0 0
  %1653 = vmatpush1.bf16.msra.mxu0 %v1311
  %1654 = vmatprep.subr.bf16.mxu0 0
  %1655 = vmatpush1.bf16.msra.mxu0 %v1312
  %1656 = vmatprep.subr.bf16.mxu0 0
  %1657 = vmatpush1.bf16.msra.mxu0 %v1313
  %1658 = vmatprep.subr.bf16.mxu0 0
  %1659 = vmatpush1.bf16.msra.mxu0 %v1314
  %1660 = vmatprep.subr.bf16.mxu0 0
  %1661 = vmatpush1.bf16.msra.mxu0 %v1315
  %1662 = vmatprep.subr.bf16.mxu0 0
  %1663 = vmatpush1.bf16.msra.mxu0 %v1316
  %1664 = vmatprep.mubr.bf16.mxu0 %v469
  %1665 = vmatmul.mubr.bf16.gmra.mrb[0].mxu0 %v468
  %v1666 = vpop.f32.mrb[0].mxu0
  %v1667 = vadd.f32 %v1626, %v1666
  %v1668 = vpop.f32.mrb[0].mxu0
  %v1669 = vpop.f32.mrb[0].mxu0
  %v1670 = vadd.f32 %v1629, %v1669
  %v1671 = vpop.f32.mrb[0].mxu0
  %1672 = vdwg.mxu0
  %1673 = vmatprep.subr.bf16.mxu0 0
  %1674 = vmatpush1.bf16.msra.mxu0 %v1317
  %1675 = vmatprep.subr.bf16.mxu0 0
  %1676 = vmatpush1.bf16.msra.mxu0 %v1318
  %1677 = vmatprep.subr.bf16.mxu0 0
  %1678 = vmatpush1.bf16.msra.mxu0 %v1319
  %1679 = vmatprep.subr.bf16.mxu0 0
  %1680 = vmatpush1.bf16.msra.mxu0 %v1320
  %1681 = vmatprep.subr.bf16.mxu0 0
  %1682 = vmatpush1.bf16.msra.mxu0 %v1321
  %1683 = vmatprep.subr.bf16.mxu0 0
  %1684 = vmatpush1.bf16.msra.mxu0 %v1322
  %1685 = vmatprep.subr.bf16.mxu0 0
  %1686 = vmatpush1.bf16.msra.mxu0 %v1323
  %1687 = vmatprep.subr.bf16.mxu0 0
  %1688 = vmatpush1.bf16.msra.mxu0 %v1324
  %1689 = vmatprep.subr.bf16.mxu0 0
  %1690 = vmatpush1.bf16.msra.mxu0 %v1325
  %1691 = vmatprep.subr.bf16.mxu0 0
  %1692 = vmatpush1.bf16.msra.mxu0 %v1326
  %1693 = vmatprep.subr.bf16.mxu0 0
  %1694 = vmatpush1.bf16.msra.mxu0 %v1327
  %1695 = vmatprep.subr.bf16.mxu0 0
  %1696 = vmatpush1.bf16.msra.mxu0 %v1328
  %1697 = vmatprep.subr.bf16.mxu0 0
  %1698 = vmatpush1.bf16.msra.mxu0 %v1329
  %1699 = vmatprep.subr.bf16.mxu0 0
  %1700 = vmatpush1.bf16.msra.mxu0 %v1330
  %1701 = vmatprep.subr.bf16.mxu0 0
  %1702 = vmatpush1.bf16.msra.mxu0 %v1331
  %1703 = vmatprep.subr.bf16.mxu0 0
  %1704 = vmatpush1.bf16.msra.mxu0 %v1332
  %1705 = vmatprep.mubr.bf16.mxu0 %v471
  %1706 = vmatmul.mubr.bf16.gmra.mrb[0].mxu0 %v470
  %v1707 = vpop.f32.mrb[0].mxu0
  %v1708 = vadd.f32 %v1667, %v1707
  %v1709 = vpop.f32.mrb[0].mxu0
  %v1710 = vpop.f32.mrb[0].mxu0
  %v1711 = vadd.f32 %v1670, %v1710
  %v1712 = vpop.f32.mrb[0].mxu0
  %1713 = vdwg.mxu0
  %1714 = vmatprep.subr.bf16.mxu0 0
  %1715 = vmatpush1.bf16.msra.mxu0 %v1333
  %1716 = vmatprep.subr.bf16.mxu0 0
  %1717 = vmatpush1.bf16.msra.mxu0 %v1334
  %1718 = vmatprep.subr.bf16.mxu0 0
  %1719 = vmatpush1.bf16.msra.mxu0 %v1335
  %1720 = vmatprep.subr.bf16.mxu0 0
  %1721 = vmatpush1.bf16.msra.mxu0 %v1336
  %1722 = vmatprep.subr.bf16.mxu0 0
  %1723 = vmatpush1.bf16.msra.mxu0 %v1337
  %1724 = vmatprep.subr.bf16.mxu0 0
  %1725 = vmatpush1.bf16.msra.mxu0 %v1338
  %1726 = vmatprep.subr.bf16.mxu0 0
  %1727 = vmatpush1.bf16.msra.mxu0 %v1339
  %1728 = vmatprep.subr.bf16.mxu0 0
  %1729 = vmatpush1.bf16.msra.mxu0 %v1340
  %1730 = vmatprep.subr.bf16.mxu0 0
  %1731 = vmatpush1.bf16.msra.mxu0 %v1341
  %1732 = vmatprep.subr.bf16.mxu0 0
  %1733 = vmatpush1.bf16.msra.mxu0 %v1342
  %1734 = vmatprep.subr.bf16.mxu0 0
  %1735 = vmatpush1.bf16.msra.mxu0 %v1343
  %1736 = vmatprep.subr.bf16.mxu0 0
  %1737 = vmatpush1.bf16.msra.mxu0 %v1344
  %1738 = vmatprep.subr.bf16.mxu0 0
  %1739 = vmatpush1.bf16.msra.mxu0 %v1345
  %1740 = vmatprep.subr.bf16.mxu0 0
  %1741 = vmatpush1.bf16.msra.mxu0 %v1346
  %1742 = vmatprep.subr.bf16.mxu0 0
  %1743 = vmatpush1.bf16.msra.mxu0 %v1347
  %1744 = vmatprep.subr.bf16.mxu0 0
  %1745 = vmatpush1.bf16.msra.mxu0 %v1348
  %1746 = vmatprep.mubr.bf16.mxu0 %v473
  %1747 = vmatmul.mubr.bf16.gmra.mrb[0].mxu0 %v472
  %v1748 = vpop.f32.mrb[0].mxu0
  %v1749 = vadd.f32 %v1708, %v1748
  %v1750 = vpop.f32.mrb[0].mxu0
  %v1751 = vpop.f32.mrb[0].mxu0
  %v1752 = vadd.f32 %v1711, %v1751
  %v1753 = vpop.f32.mrb[0].mxu0
  %1754 = vdwg.mxu0
  %1755 = vmatprep.subr.bf16.mxu0 0
  %1756 = vmatpush1.bf16.msra.mxu0 %v1349
  %1757 = vmatprep.subr.bf16.mxu0 0
  %1758 = vmatpush1.bf16.msra.mxu0 %v1350
  %1759 = vmatprep.subr.bf16.mxu0 0
  %1760 = vmatpush1.bf16.msra.mxu0 %v1351
  %1761 = vmatprep.subr.bf16.mxu0 0
  %1762 = vmatpush1.bf16.msra.mxu0 %v1352
  %1763 = vmatprep.subr.bf16.mxu0 0
  %1764 = vmatpush1.bf16.msra.mxu0 %v1353
  %1765 = vmatprep.subr.bf16.mxu0 0
  %1766 = vmatpush1.bf16.msra.mxu0 %v1354
  %1767 = vmatprep.subr.bf16.mxu0 0
  %1768 = vmatpush1.bf16.msra.mxu0 %v1355
  %1769 = vmatprep.subr.bf16.mxu0 0
  %1770 = vmatpush1.bf16.msra.mxu0 %v1356
  %1771 = vmatprep.subr.bf16.mxu0 0
  %1772 = vmatpush1.bf16.msra.mxu0 %v1357
  %1773 = vmatprep.subr.bf16.mxu0 0
  %1774 = vmatpush1.bf16.msra.mxu0 %v1358
  %1775 = vmatprep.subr.bf16.mxu0 0
  %1776 = vmatpush1.bf16.msra.mxu0 %v1359
  %1777 = vmatprep.subr.bf16.mxu0 0
  %1778 = vmatpush1.bf16.msra.mxu0 %v1360
  %1779 = vmatprep.subr.bf16.mxu0 0
  %1780 = vmatpush1.bf16.msra.mxu0 %v1361
  %1781 = vmatprep.subr.bf16.mxu0 0
  %1782 = vmatpush1.bf16.msra.mxu0 %v1362
  %1783 = vmatprep.subr.bf16.mxu0 0
  %1784 = vmatpush1.bf16.msra.mxu0 %v1363
  %1785 = vmatprep.subr.bf16.mxu0 0
  %1786 = vmatpush1.bf16.msra.mxu0 %v1364
  %1787 = vmatprep.mubr.bf16.mxu0 %v475
  %1788 = vmatmul.mubr.bf16.gmra.mrb[0].mxu0 %v474
  %v1789 = vpop.f32.mrb[0].mxu0
  %v1790 = vadd.f32 %v1749, %v1789
  %v1791 = vpop.f32.mrb[0].mxu0
  %v1792 = vpop.f32.mrb[0].mxu0
  %v1793 = vadd.f32 %v1752, %v1792
  %v1794 = vpop.f32.mrb[0].mxu0
  %1795 = vdwg.mxu0
  %1796 = vmatprep.subr.bf16.mxu0 0
  %1797 = vmatpush1.bf16.msra.mxu0 %v1365
  %1798 = vmatprep.subr.bf16.mxu0 0
  %1799 = vmatpush1.bf16.msra.mxu0 %v1366
  %1800 = vmatprep.subr.bf16.mxu0 0
  %1801 = vmatpush1.bf16.msra.mxu0 %v1367
  %1802 = vmatprep.subr.bf16.mxu0 0
  %1803 = vmatpush1.bf16.msra.mxu0 %v1368
  %1804 = vmatprep.subr.bf16.mxu0 0
  %1805 = vmatpush1.bf16.msra.mxu0 %v1369
  %1806 = vmatprep.subr.bf16.mxu0 0
  %1807 = vmatpush1.bf16.msra.mxu0 %v1370
  %1808 = vmatprep.subr.bf16.mxu0 0
  %1809 = vmatpush1.bf16.msra.mxu0 %v1371
  %1810 = vmatprep.subr.bf16.mxu0 0
  %1811 = vmatpush1.bf16.msra.mxu0 %v1372
  %1812 = vmatprep.subr.bf16.mxu0 0
  %1813 = vmatpush1.bf16.msra.mxu0 %v1373
  %1814 = vmatprep.subr.bf16.mxu0 0
  %1815 = vmatpush1.bf16.msra.mxu0 %v1374
  %1816 = vmatprep.subr.bf16.mxu0 0
  %1817 = vmatpush1.bf16.msra.mxu0 %v1375
  %1818 = vmatprep.subr.bf16.mxu0 0
  %1819 = vmatpush1.bf16.msra.mxu0 %v1376
  %1820 = vmatprep.subr.bf16.mxu0 0
  %1821 = vmatpush1.bf16.msra.mxu0 %v1377
  %1822 = vmatprep.subr.bf16.mxu0 0
  %1823 = vmatpush1.bf16.msra.mxu0 %v1378
  %1824 = vmatprep.subr.bf16.mxu0 0
  %1825 = vmatpush1.bf16.msra.mxu0 %v1379
  %1826 = vmatprep.subr.bf16.mxu0 0
  %1827 = vmatpush1.bf16.msra.mxu0 %v1380
  %1828 = vmatprep.mubr.bf16.mxu0 %v477
  %1829 = vmatmul.mubr.bf16.gmra.mrb[0].mxu0 %v476
  %v1830 = vpop.f32.mrb[0].mxu0
  %v1831 = vadd.f32 %v1790, %v1830
  %v1832 = vpop.f32.mrb[0].mxu0
  %v1833 = vpop.f32.mrb[0].mxu0
  %v1834 = vadd.f32 %v1793, %v1833
  %v1835 = vpop.f32.mrb[0].mxu0
  %1836 = vdwg.mxu0
  %vm1837 = vcmask 523264
  %1838 = vst.msk [vmem:[%s5] sm:$0xff] %vm1837, %v1831
  %1839 = vst.msk [vmem:[%s5 + $0x8] sm:$0xff] %vm1837, %v1834
  // Predicated region
  $region22: #{tsmlrtas_forward.2} parent=0 // pred_check
    _
  $region23: #{tsmlrtas_forward.2} parent=0 // pred_check_branch
    %1841 = sbr.rel (0) target = $region25
  $region24: #{tsmlrtas_forward.2} parent=0 // pred_region
    _
  $region25: #{tsmlrtas_forward.2} parent=0 // pred_fallthru
    _
  // Predicated region
  $region26: #{tsmlrtas_forward.2} parent=0 // pred_check
    _
  $region27: #{tsmlrtas_forward.2} parent=0 // pred_check_branch
    %1843 = sbr.rel (0) target = $region29
  $region28: #{tsmlrtas_forward.2} parent=0 // pred_region
    _
  $region29: #{tsmlrtas_forward.2} parent=0 // pred_fallthru
    _

// kernel: tsmlrtas_forward.3
$region0: #{tsmlrtas_forward.3}
  #allocation0 [shape = 'u32[]', space=smem, size = 0x4, offset = 0x4, fixed_abs, tag = 'smem constant byte address 0x4 - core index']
  #allocation1 [shape = 'u32[144,128]{1,0:T(1,128)}', space=vmem, size = 0x12000, scoped, tag = 'internal scratch']
  #allocation2 [shape = 'f32[64,64]{1,0:T(8,128)}', space=vmem, size = 0x8000, scoped, tag = 'scratch operand']
  #allocation3 [shape = 'f32[64,256]{1,0:T(8,128)}', space=vmem, size = 0x10000, scoped, tag = 'scratch operand']
  #allocation4 [shape = 'f32[64,512]{1,0:T(8,128)}', space=vmem, size = 0x20000, scoped, tag = 'scratch operand']
  %s0 = inlined_call_operand.vmem [shape: f32[1,64,64], index: 0, kind: input, shape index: {}]
  %s1 = inlined_call_operand.vmem [shape: bf16[5,64,256], index: 1, kind: input, shape index: {}]
  %s2 = inlined_call_operand.vmem [shape: f32[5,1,128], index: 2, kind: input, shape index: {}]
  %s3 = inlined_call_operand.vmem [shape: f32[5,1,128], index: 3, kind: input, shape index: {}]
  %s4 = inlined_call_operand.vmem [shape: bf16[5,512,64], index: 4, kind: input, shape index: {}]
  %s5 = inlined_call_operand.vmem [shape: f32[5,1,64], index: 5, kind: input, shape index: {}]
  %s6 = inlined_call_operand.vmem [shape: bf16[5,64,256], index: 6, kind: input, shape index: {}]
  %s7 = inlined_call_operand.vmem [shape: f32[5,1,256], index: 7, kind: input, shape index: {}]
  %s8 = inlined_call_operand.vmem [shape: f32[1,5,64,256], index: 8, kind: output, shape index: {}]
  %s9 = sld [smem:[#allocation0]]
  $region69: #{tsmlrtas_forward.3} parent=0
    _
  %s11 = ssub.s32 1, %s9
  %s12 = scalar_select 0, %s11, %s9
  loop: start=0, step=1, limit=7
  $region2: #{tsmlrtas_forward.3} parent=0 // loop_pre_header
    _
  $region3: #{tsmlrtas_forward.3} parent=0 // loop_header
    %s14 = sphi 0, %s18
    %p15 = scmp.ge.s32.totalorder %s14, 7
    %s21 = sphi 0, %s33
    %s22 = sphi 0, %s29
    %s23 = sphi 0, %s21
    %s24 = sphi 0, %s22
    %s25 = sphi 0, %s23
    %s26 = sphi 0, %s24
    %s36 = sphi 0, %s38
    %s39 = sphi 0, %s36
    %s40 = sphi 0, %s39
    %s56 = sphi 0, %s40
    %s62 = sphi 0, %s64
    %s65 = sphi 0, %s62
    %s66 = sphi 0, %s65
    %s82 = sphi 0, %s66
    %s88 = sphi 0, %s90
    %s91 = sphi 0, %s88
    %s92 = sphi 0, %s91
    %s108 = sphi 0, %s92
    %s114 = sphi 0, %s116
    %s117 = sphi 0, %s114
    %s118 = sphi 0, %s117
    %s134 = sphi 0, %s118
    %s140 = sphi 0, %s142
    %s143 = sphi 0, %s140
    %s144 = sphi 0, %s143
    %s160 = sphi 0, %s144
    %s166 = sphi 0, %s168
    %s169 = sphi 0, %s166
    %s170 = sphi 0, %s169
    %s186 = sphi 0, %s170
    %s192 = sphi 0, %s194
    %s195 = sphi 0, %s192
    %s196 = sphi 0, %s195
    %s212 = sphi 0, %s196
    %s218 = sphi 0, %s220
    %s221 = sphi 0, %s218
    %s222 = sphi 0, %s221
    %s238 = sphi 0, %s222
    %s246 = sphi 0, %s248
    %s249 = sphi 0, %s246
    %s250 = sphi 0, %s249
    %s266 = sphi 0, %s250
  $region4: #{tsmlrtas_forward.3} parent=0 // loop_header_branch
    %17 = sbr.rel (%p15) target = $region8
  $region5: #{tsmlrtas_forward.3} parent=0 // loop_body
    %s19 = ssub.s32 %s14, 1
    %s20 = ssub.s32 %s14, 2
    %s27 = sadd.s32 1, %s22
    %p28 = scmp.ge.s32.totalorder %s27, 5
    %s29 = scalar_select %p28, 0, %s27
    %s30 = sadd.s32 1, %s21
    %s31 = scalar_select %p28, %s30, %s21
    %p32 = scmp.ge.s32.totalorder %s31, 1
    %s33 = scalar_select %p32, 0, %s31
    %s34 = ssub.s32 %s21, %s33
    %p35 = scmp.eq.s32.totalorder %s34, 0
    %s37 = sadd.s32 %s36, 1
    %s38 = scalar_select %p35, %s36, %s37
    %p41 = pneg %p35
    %p42 = scmp.eq.s32.totalorder %s14, 4
    %p43 = por %p41, %p42
    %p44 = scmp.ne.s32.totalorder %s36, %s39
    %p45 = scmp.eq.s32.totalorder %s14, 0
    %p46 = por %p44, %p45
    %p47 = scmp.ne.s32.totalorder %s36, %s39
    %p48 = scmp.eq.s32.totalorder %s19, 4
    %p49 = por %p47, %p48
    %p50 = scmp.ne.s32.totalorder %s39, %s40
    %p51 = scmp.eq.s32.totalorder %s19, 0
    %p52 = por %p50, %p51
    %p53 = scmp.ne.s32.totalorder %s39, %s40
    %p54 = scmp.eq.s32.totalorder %s20, 4
    %p55 = por %p53, %p54
    %p57 = scmp.ne.s32.totalorder %s40, %s56
    %p58 = scmp.eq.s32.totalorder %s20, 0
    %p59 = por %p57, %p58
    %s60 = ssub.s32 %s22, %s29
    %p61 = scmp.eq.s32.totalorder %s60, 0
    %s63 = sadd.s32 %s62, 1
    %s64 = scalar_select %p61, %s62, %s63
    %p67 = pneg %p61
    %p68 = scmp.eq.s32.totalorder %s14, 4
    %p69 = por %p67, %p68
    %p70 = scmp.ne.s32.totalorder %s62, %s65
    %p71 = scmp.eq.s32.totalorder %s14, 0
    %p72 = por %p70, %p71
    %p73 = scmp.ne.s32.totalorder %s62, %s65
    %p74 = scmp.eq.s32.totalorder %s19, 4
    %p75 = por %p73, %p74
    %p76 = scmp.ne.s32.totalorder %s65, %s66
    %p77 = scmp.eq.s32.totalorder %s19, 0
    %p78 = por %p76, %p77
    %p79 = scmp.ne.s32.totalorder %s65, %s66
    %p80 = scmp.eq.s32.totalorder %s20, 4
    %p81 = por %p79, %p80
    %p83 = scmp.ne.s32.totalorder %s66, %s82
    %p84 = scmp.eq.s32.totalorder %s20, 0
    %p85 = por %p83, %p84
    %s86 = ssub.s32 %s22, %s29
    %p87 = scmp.eq.s32.totalorder %s86, 0
    %s89 = sadd.s32 %s88, 1
    %s90 = scalar_select %p87, %s88, %s89
    %p93 = pneg %p87
    %p94 = scmp.eq.s32.totalorder %s14, 4
    %p95 = por %p93, %p94
    %p96 = scmp.ne.s32.totalorder %s88, %s91
    %p97 = scmp.eq.s32.totalorder %s14, 0
    %p98 = por %p96, %p97
    %p99 = scmp.ne.s32.totalorder %s88, %s91
    %p100 = scmp.eq.s32.totalorder %s19, 4
    %p101 = por %p99, %p100
    %p102 = scmp.ne.s32.totalorder %s91, %s92
    %p103 = scmp.eq.s32.totalorder %s19, 0
    %p104 = por %p102, %p103
    %p105 = scmp.ne.s32.totalorder %s91, %s92
    %p106 = scmp.eq.s32.totalorder %s20, 4
    %p107 = por %p105, %p106
    %p109 = scmp.ne.s32.totalorder %s92, %s108
    %p110 = scmp.eq.s32.totalorder %s20, 0
    %p111 = por %p109, %p110
    %s112 = ssub.s32 %s22, %s29
    %p113 = scmp.eq.s32.totalorder %s112, 0
    %s115 = sadd.s32 %s114, 1
    %s116 = scalar_select %p113, %s114, %s115
    %p119 = pneg %p113
    %p120 = scmp.eq.s32.totalorder %s14, 4
    %p121 = por %p119, %p120
    %p122 = scmp.ne.s32.totalorder %s114, %s117
    %p123 = scmp.eq.s32.totalorder %s14, 0
    %p124 = por %p122, %p123
    %p125 = scmp.ne.s32.totalorder %s114, %s117
    %p126 = scmp.eq.s32.totalorder %s19, 4
    %p127 = por %p125, %p126
    %p128 = scmp.ne.s32.totalorder %s117, %s118
    %p129 = scmp.eq.s32.totalorder %s19, 0
    %p130 = por %p128, %p129
    %p131 = scmp.ne.s32.totalorder %s117, %s118
    %p132 = scmp.eq.s32.totalorder %s20, 4
    %p133 = por %p131, %p132
    %p135 = scmp.ne.s32.totalorder %s118, %s134
    %p136 = scmp.eq.s32.totalorder %s20, 0
    %p137 = por %p135, %p136
    %s138 = ssub.s32 %s22, %s29
    %p139 = scmp.eq.s32.totalorder %s138, 0
    %s141 = sadd.s32 %s140, 1
    %s142 = scalar_select %p139, %s140, %s141
    %p145 = pneg %p139
    %p146 = scmp.eq.s32.totalorder %s14, 4
    %p147 = por %p145, %p146
    %p148 = scmp.ne.s32.totalorder %s140, %s143
    %p149 = scmp.eq.s32.totalorder %s14, 0
    %p150 = por %p148, %p149
    %p151 = scmp.ne.s32.totalorder %s140, %s143
    %p152 = scmp.eq.s32.totalorder %s19, 4
    %p153 = por %p151, %p152
    %p154 = scmp.ne.s32.totalorder %s143, %s144
    %p155 = scmp.eq.s32.totalorder %s19, 0
    %p156 = por %p154, %p155
    %p157 = scmp.ne.s32.totalorder %s143, %s144
    %p158 = scmp.eq.s32.totalorder %s20, 4
    %p159 = por %p157, %p158
    %p161 = scmp.ne.s32.totalorder %s144, %s160
    %p162 = scmp.eq.s32.totalorder %s20, 0
    %p163 = por %p161, %p162
    %s164 = ssub.s32 %s22, %s29
    %p165 = scmp.eq.s32.totalorder %s164, 0
    %s167 = sadd.s32 %s166, 1
    %s168 = scalar_select %p165, %s166, %s167
    %p171 = pneg %p165
    %p172 = scmp.eq.s32.totalorder %s14, 4
    %p173 = por %p171, %p172
    %p174 = scmp.ne.s32.totalorder %s166, %s169
    %p175 = scmp.eq.s32.totalorder %s14, 0
    %p176 = por %p174, %p175
    %p177 = scmp.ne.s32.totalorder %s166, %s169
    %p178 = scmp.eq.s32.totalorder %s19, 4
    %p179 = por %p177, %p178
    %p180 = scmp.ne.s32.totalorder %s169, %s170
    %p181 = scmp.eq.s32.totalorder %s19, 0
    %p182 = por %p180, %p181
    %p183 = scmp.ne.s32.totalorder %s169, %s170
    %p184 = scmp.eq.s32.totalorder %s20, 4
    %p185 = por %p183, %p184
    %p187 = scmp.ne.s32.totalorder %s170, %s186
    %p188 = scmp.eq.s32.totalorder %s20, 0
    %p189 = por %p187, %p188
    %s190 = ssub.s32 %s22, %s29
    %p191 = scmp.eq.s32.totalorder %s190, 0
    %s193 = sadd.s32 %s192, 1
    %s194 = scalar_select %p191, %s192, %s193
    %p197 = pneg %p191
    %p198 = scmp.eq.s32.totalorder %s14, 4
    %p199 = por %p197, %p198
    %p200 = scmp.ne.s32.totalorder %s192, %s195
    %p201 = scmp.eq.s32.totalorder %s14, 0
    %p202 = por %p200, %p201
    %p203 = scmp.ne.s32.totalorder %s192, %s195
    %p204 = scmp.eq.s32.totalorder %s19, 4
    %p205 = por %p203, %p204
    %p206 = scmp.ne.s32.totalorder %s195, %s196
    %p207 = scmp.eq.s32.totalorder %s19, 0
    %p208 = por %p206, %p207
    %p209 = scmp.ne.s32.totalorder %s195, %s196
    %p210 = scmp.eq.s32.totalorder %s20, 4
    %p211 = por %p209, %p210
    %p213 = scmp.ne.s32.totalorder %s196, %s212
    %p214 = scmp.eq.s32.totalorder %s20, 0
    %p215 = por %p213, %p214
    %s216 = ssub.s32 %s22, %s29
    %p217 = scmp.eq.s32.totalorder %s216, 0
    %s219 = sadd.s32 %s218, 1
    %s220 = scalar_select %p217, %s218, %s219
    %p223 = pneg %p217
    %p224 = scmp.eq.s32.totalorder %s14, 4
    %p225 = por %p223, %p224
    %p226 = scmp.ne.s32.totalorder %s218, %s221
    %p227 = scmp.eq.s32.totalorder %s14, 0
    %p228 = por %p226, %p227
    %p229 = scmp.ne.s32.totalorder %s218, %s221
    %p230 = scmp.eq.s32.totalorder %s19, 4
    %p231 = por %p229, %p230
    %p232 = scmp.ne.s32.totalorder %s221, %s222
    %p233 = scmp.eq.s32.totalorder %s19, 0
    %p234 = por %p232, %p233
    %p235 = scmp.ne.s32.totalorder %s221, %s222
    %p236 = scmp.eq.s32.totalorder %s20, 4
    %p237 = por %p235, %p236
    %p239 = scmp.ne.s32.totalorder %s222, %s238
    %p240 = scmp.eq.s32.totalorder %s20, 0
    %p241 = por %p239, %p240
    %s242 = ssub.s32 %s21, %s33
    %s243 = ssub.s32 %s22, %s29
    %s244 = sor.u32 %s242, %s243
    %p245 = scmp.eq.s32.totalorder %s244, 0
    %s247 = sadd.s32 %s246, 1
    %s248 = scalar_select %p245, %s246, %s247
    %p251 = pneg %p245
    %p252 = scmp.eq.s32.totalorder %s14, 4
    %p253 = por %p251, %p252
    %p254 = scmp.ne.s32.totalorder %s246, %s249
    %p255 = scmp.eq.s32.totalorder %s14, 0
    %p256 = por %p254, %p255
    %p257 = scmp.ne.s32.totalorder %s246, %s249
    %p258 = scmp.eq.s32.totalorder %s19, 4
    %p259 = por %p257, %p258
    %p260 = scmp.ne.s32.totalorder %s249, %s250
    %p261 = scmp.eq.s32.totalorder %s19, 0
    %p262 = por %p260, %p261
    %p263 = scmp.ne.s32.totalorder %s249, %s250
    %p264 = scmp.eq.s32.totalorder %s20, 4
    %p265 = por %p263, %p264
    %p267 = scmp.ne.s32.totalorder %s250, %s266
    %p268 = scmp.eq.s32.totalorder %s20, 0
    %p269 = por %p267, %p268
    %p270 = scmp.le.s32.totalorder 1, %s14
    %p271 = scmp.lt.s32.totalorder %s14, 6
    %p272 = pnand %p270, %p271
    %p273 = pneg %p272
    // Predicated region
    $region9: #{tsmlrtas_forward.3} parent=5 // pred_check
      _
    $region10: #{tsmlrtas_forward.3} parent=5 // pred_check_branch
      %275 = sbr.rel (%p272) target = $region12
    $region11: #{tsmlrtas_forward.3} parent=5 // pred_region
      %s276 = ssub.s32 %s14, 1
      // Predicated region
      $region13: #{tsmlrtas_forward.3} parent=11 // pred_check
        %p277 = pneg %p52
      $region14: #{tsmlrtas_forward.3} parent=11 // pred_check_branch
        %279 = sbr.rel (%p277) target = $region16
      $region15: #{tsmlrtas_forward.3} parent=11 // pred_region
        %p280 = scmp.lt.s32.totalorder %s23, 0
        %s281 = scalar_select %p280, %s23, 0
        %s282 = smul.addr %s281, 8
        %s283 = smul.addr %s282, 8
        %s284 = scalar_lea.vmem %s0, %s283
      $region16: #{tsmlrtas_forward.3} parent=11 // pred_fallthru
        _
    $region12: #{tsmlrtas_forward.3} parent=5 // pred_fallthru
      _
    %p285 = scmp.lt.s32.totalorder %s14, 5
    // Predicated region
    $region17: #{tsmlrtas_forward.3} parent=5 // pred_check
      %p286 = pneg %p285
    $region18: #{tsmlrtas_forward.3} parent=5 // pred_check_branch
      %288 = sbr.rel (%p286) target = $region20
    $region19: #{tsmlrtas_forward.3} parent=5 // pred_region
      // Predicated region
      $region21: #{tsmlrtas_forward.3} parent=19 // pred_check
        %p289 = pneg %p72
      $region22: #{tsmlrtas_forward.3} parent=19 // pred_check_branch
        %291 = sbr.rel (%p289) target = $region24
      $region23: #{tsmlrtas_forward.3} parent=19 // pred_region
        %p292 = scmp.lt.s32.totalorder %s22, 4
        %s293 = scalar_select %p292, %s22, 4
        %s294 = smul.addr %s293, 16
        %s295 = smul.addr %s294, 4
        %s296 = scalar_lea.vmem %s1, %s295
      $region24: #{tsmlrtas_forward.3} parent=19 // pred_fallthru
        _
      // Predicated region
      $region25: #{tsmlrtas_forward.3} parent=19 // pred_check
        %p297 = pneg %p98
      $region26: #{tsmlrtas_forward.3} parent=19 // pred_check_branch
        %299 = sbr.rel (%p297) target = $region28
      $region27: #{tsmlrtas_forward.3} parent=19 // pred_region
        %p300 = scmp.lt.s32.totalorder %s22, 4
        %s301 = scalar_select %p300, %s22, 4
        %s302 = scalar_lea.vmem %s2, %s301
      $region28: #{tsmlrtas_forward.3} parent=19 // pred_fallthru
        _
      // Predicated region
      $region29: #{tsmlrtas_forward.3} parent=19 // pred_check
        %p303 = pneg %p124
      $region30: #{tsmlrtas_forward.3} parent=19 // pred_check_branch
        %305 = sbr.rel (%p303) target = $region32
      $region31: #{tsmlrtas_forward.3} parent=19 // pred_region
        %p306 = scmp.lt.s32.totalorder %s22, 4
        %s307 = scalar_select %p306, %s22, 4
        %s308 = scalar_lea.vmem %s3, %s307
      $region32: #{tsmlrtas_forward.3} parent=19 // pred_fallthru
        _
      // Predicated region
      $region33: #{tsmlrtas_forward.3} parent=19 // pred_check
        %p309 = pneg %p150
      $region34: #{tsmlrtas_forward.3} parent=19 // pred_check_branch
        %311 = sbr.rel (%p309) target = $region36
      $region35: #{tsmlrtas_forward.3} parent=19 // pred_region
        %p312 = scmp.lt.s32.totalorder %s22, 4
        %s313 = scalar_select %p312, %s22, 4
        %s314 = smul.addr %s313, 64
        %s315 = smul.addr %s314, 4
        %s316 = scalar_lea.vmem %s4, %s315
      $region36: #{tsmlrtas_forward.3} parent=19 // pred_fallthru
        _
      // Predicated region
      $region37: #{tsmlrtas_forward.3} parent=19 // pred_check
        %p317 = pneg %p176
      $region38: #{tsmlrtas_forward.3} parent=19 // pred_check_branch
        %319 = sbr.rel (%p317) target = $region40
      $region39: #{tsmlrtas_forward.3} parent=19 // pred_region
        %p320 = scmp.lt.s32.totalorder %s22, 4
        %s321 = scalar_select %p320, %s22, 4
        %s322 = scalar_lea.vmem %s5, %s321
      $region40: #{tsmlrtas_forward.3} parent=19 // pred_fallthru
        _
      // Predicated region
      $region41: #{tsmlrtas_forward.3} parent=19 // pred_check
        %p323 = pneg %p202
      $region42: #{tsmlrtas_forward.3} parent=19 // pred_check_branch
        %325 = sbr.rel (%p323) target = $region44
      $region43: #{tsmlrtas_forward.3} parent=19 // pred_region
        %p326 = scmp.lt.s32.totalorder %s22, 4
        %s327 = scalar_select %p326, %s22, 4
        %s328 = smul.addr %s327, 16
        %s329 = smul.addr %s328, 4
        %s330 = scalar_lea.vmem %s6, %s329
      $region44: #{tsmlrtas_forward.3} parent=19 // pred_fallthru
        _
      // Predicated region
      $region45: #{tsmlrtas_forward.3} parent=19 // pred_check
        %p331 = pneg %p228
      $region46: #{tsmlrtas_forward.3} parent=19 // pred_check_branch
        %333 = sbr.rel (%p331) target = $region48
      $region47: #{tsmlrtas_forward.3} parent=19 // pred_region
        %p334 = scmp.lt.s32.totalorder %s22, 4
        %s335 = scalar_select %p334, %s22, 4
        %s336 = smul.addr %s335, 2
        %s337 = scalar_lea.vmem %s7, %s336
      $region48: #{tsmlrtas_forward.3} parent=19 // pred_fallthru
        _
    $region20: #{tsmlrtas_forward.3} parent=5 // pred_fallthru
      _
    %p338 = scmp.le.s32.totalorder 1, %s14
    %p339 = scmp.lt.s32.totalorder %s14, 6
    %p340 = pnand %p338, %p339
    %p341 = pneg %p340
    // Predicated region
    $region49: #{tsmlrtas_forward.3} parent=5 // pred_check
      _
    $region50: #{tsmlrtas_forward.3} parent=5 // pred_check_branch
      %343 = sbr.rel (%p340) target = $region52
    $region51: #{tsmlrtas_forward.3} parent=5 // pred_region
      %s344 = ssub.s32 %s14, 1
      %p345 = scmp.lt.s32.totalorder %s23, 0
      %s346 = scalar_select %p345, %s23, 0
      %s347 = smul.addr %s346, 8
      %s348 = smul.addr %s347, 8
      %s349 = scalar_lea.vmem %s0, %s348
      %p350 = pneg %p52
      %p351 = pneg %p49
      %p352 = scmp.lt.s32.totalorder %s24, 4
      %s353 = scalar_select %p352, %s24, 4
      %s354 = smul.addr %s353, 16
      %s355 = smul.addr %s354, 4
      %s356 = scalar_lea.vmem %s1, %s355
      %p357 = pneg %p78
      %p358 = pneg %p75
      %p359 = scmp.lt.s32.totalorder %s24, 4
      %s360 = scalar_select %p359, %s24, 4
      %s361 = scalar_lea.vmem %s2, %s360
      %p362 = pneg %p104
      %p363 = pneg %p101
      %p364 = scmp.lt.s32.totalorder %s24, 4
      %s365 = scalar_select %p364, %s24, 4
      %s366 = scalar_lea.vmem %s3, %s365
      %p367 = pneg %p130
      %p368 = pneg %p127
      %p369 = scmp.lt.s32.totalorder %s24, 4
      %s370 = scalar_select %p369, %s24, 4
      %s371 = smul.addr %s370, 64
      %s372 = smul.addr %s371, 4
      %s373 = scalar_lea.vmem %s4, %s372
      %p374 = pneg %p156
      %p375 = pneg %p153
      %p376 = scmp.lt.s32.totalorder %s24, 4
      %s377 = scalar_select %p376, %s24, 4
      %s378 = scalar_lea.vmem %s5, %s377
      %p379 = pneg %p182
      %p380 = pneg %p179
      %p381 = scmp.lt.s32.totalorder %s24, 4
      %s382 = scalar_select %p381, %s24, 4
      %s383 = smul.addr %s382, 16
      %s384 = smul.addr %s383, 4
      %s385 = scalar_lea.vmem %s6, %s384
      %p386 = pneg %p208
      %p387 = pneg %p205
      %p388 = scmp.lt.s32.totalorder %s24, 4
      %s389 = scalar_select %p388, %s24, 4
      %s390 = smul.addr %s389, 2
      %s391 = scalar_lea.vmem %s7, %s390
      %p392 = pneg %p234
      %p393 = pneg %p231
      %p394 = pneg %p262
      %p395 = pneg %p259
      %p396 = scmp.lt.s32.totalorder %s23, 0
      %s397 = scalar_select %p396, %s23, 0
      %p398 = scmp.lt.s32.totalorder %s24, 4
      %s399 = scalar_select %p398, %s24, 4
      %s400 = smul.addr %s399, 16
      %s401 = smul.addr %s397, 80
      %s402 = sadd.s32 %s400, %s401
      %s403 = smul.addr %s402, 8
      %s404 = scalar_lea.vmem %s8, %s403
      %p405 = scmp.lt.s32.totalorder %s23, 0
      %s406 = scalar_select %p405, %s23, 0
      %s407 = smul.addr %s406, 8
      %s408 = smul.addr %s407, 8
      %s409 = scalar_lea.vmem %s0, %s408
      %p410 = scmp.lt.s32.totalorder %s24, 4
      %s411 = scalar_select %p410, %s24, 4
      %s412 = smul.addr %s411, 16
      %s413 = smul.addr %s412, 4
      %s414 = scalar_lea.vmem %s1, %s413
      %p415 = scmp.lt.s32.totalorder %s24, 4
      %s416 = scalar_select %p415, %s24, 4
      %s417 = scalar_lea.vmem %s2, %s416
      %p418 = scmp.lt.s32.totalorder %s24, 4
      %s419 = scalar_select %p418, %s24, 4
      %s420 = scalar_lea.vmem %s3, %s419
      %p421 = scmp.lt.s32.totalorder %s24, 4
      %s422 = scalar_select %p421, %s24, 4
      %s423 = smul.addr %s422, 64
      %s424 = smul.addr %s423, 4
      %s425 = scalar_lea.vmem %s4, %s424
      %p426 = scmp.lt.s32.totalorder %s24, 4
      %s427 = scalar_select %p426, %s24, 4
      %s428 = scalar_lea.vmem %s5, %s427
      %p429 = scmp.lt.s32.totalorder %s24, 4
      %s430 = scalar_select %p429, %s24, 4
      %s431 = smul.addr %s430, 16
      %s432 = smul.addr %s431, 4
      %s433 = scalar_lea.vmem %s6, %s432
      %p434 = scmp.lt.s32.totalorder %s24, 4
      %s435 = scalar_select %p434, %s24, 4
      %s436 = smul.addr %s435, 2
      %s437 = scalar_lea.vmem %s7, %s436
      %p438 = scmp.lt.s32.totalorder %s23, 0
      %s439 = scalar_select %p438, %s23, 0
      %p440 = scmp.lt.s32.totalorder %s24, 4
      %s441 = scalar_select %p440, %s24, 4
      %s442 = smul.addr %s441, 16
      %s443 = smul.addr %s439, 80
      %s444 = sadd.s32 %s442, %s443
      %s445 = smul.addr %s444, 8
      %s446 = scalar_lea.vmem %s8, %s445
      %p448 = scmp.eq.s32.totalorder %s24, 0
      // Predicated region
      $region53: #{tsmlrtas_forward.3} parent=51 // pred_check
        %p449 = pneg %p448
      $region54: #{tsmlrtas_forward.3} parent=51 // pred_check_branch
        %451 = sbr.rel (%p449) target = $region56
      $region55: #{tsmlrtas_forward.3} parent=51 // pred_region
        %v452 = vld [vmem:[%s409] sm:$0xff]
        %v453 = vld [vmem:[%s409 + $0x8] sm:$0xff]
        %v454 = vld [vmem:[%s409 + $0x10] sm:$0xff]
        %v455 = vld [vmem:[%s409 + $0x18] sm:$0xff]
        %v456 = vld [vmem:[%s409 + $0x20] sm:$0xff]
        %v457 = vld [vmem:[%s409 + $0x28] sm:$0xff]
        %v458 = vld [vmem:[%s409 + $0x30] sm:$0xff]
        %v459 = vld [vmem:[%s409 + $0x38] sm:$0xff]
        %vm460 = vcmask 523264
        %461 = vst.msk [vmem:[#allocation2] sm:$0xff] %vm460, %v452
        %462 = vst.msk [vmem:[#allocation2 + $0x8] sm:$0xff] %vm460, %v453
        %463 = vst.msk [vmem:[#allocation2 + $0x10] sm:$0xff] %vm460, %v454
        %464 = vst.msk [vmem:[#allocation2 + $0x18] sm:$0xff] %vm460, %v455
        %465 = vst.msk [vmem:[#allocation2 + $0x20] sm:$0xff] %vm460, %v456
        %466 = vst.msk [vmem:[#allocation2 + $0x28] sm:$0xff] %vm460, %v457
        %467 = vst.msk [vmem:[#allocation2 + $0x30] sm:$0xff] %vm460, %v458
        %468 = vst.msk [vmem:[#allocation2 + $0x38] sm:$0xff] %vm460, %v459
      $region56: #{tsmlrtas_forward.3} parent=51 // pred_fallthru
        _
      %v469 = vld [vmem:[#allocation2] sm:$0xff]
      %v470 = vld [vmem:[#allocation2 + $0x8] sm:$0xff]
      %v471 = vld [vmem:[#allocation2 + $0x10] sm:$0xff]
      %v472 = vld [vmem:[#allocation2 + $0x18] sm:$0xff]
      %v473 = vld [vmem:[#allocation2 + $0x20] sm:$0xff]
      %v474 = vld [vmem:[#allocation2 + $0x28] sm:$0xff]
      %v475 = vld [vmem:[#allocation2 + $0x30] sm:$0xff]
      %v476 = vld [vmem:[#allocation2 + $0x38] sm:$0xff]
      %v477 = vpack.c.bf16 %v470, %v469
      %v478 = vpack.c.bf16 %v472, %v471
      %v479 = vpack.c.bf16 %v474, %v473
      %v480 = vpack.c.bf16 %v476, %v475
      %v481 = vld [vmem:[%s414] sm:$0xff]
      %v482 = vld [vmem:[%s414 + $0x8] sm:$0xff]
      %v483 = vld [vmem:[%s414 + $0x10] sm:$0xff]
      %v484 = vld [vmem:[%s414 + $0x18] sm:$0xff]
      %v485 = vld [vmem:[%s414 + $0x20] sm:$0xff]
      %v486 = vld [vmem:[%s414 + $0x28] sm:$0xff]
      %v487 = vld [vmem:[%s414 + $0x30] sm:$0xff]
      %v488 = vld [vmem:[%s414 + $0x38] sm:$0xff]
      %v497 = vunpack.c.l.b16 %v481
      %v498 = vunpack.c.h.b16 %v481
      %v499 = vunpack.c.l.b16 %v482
      %v500 = vunpack.c.h.b16 %v482
      %v501 = vunpack.c.l.b16 %v483
      %v502 = vunpack.c.h.b16 %v483
      %v503 = vunpack.c.l.b16 %v484
      %v504 = vunpack.c.h.b16 %v484
      %v505 = vunpack.c.l.b16 %v485
      %v506 = vunpack.c.h.b16 %v485
      %v507 = vunpack.c.l.b16 %v486
      %v508 = vunpack.c.h.b16 %v486
      %v509 = vunpack.c.l.b16 %v487
      %v510 = vunpack.c.h.b16 %v487
      %v511 = vunpack.c.l.b16 %v488
      %v512 = vunpack.c.h.b16 %v488
      %v513 = vpack.c.b16 %v499, %v497
      %v514 = vpack.c.b16 %v500, %v498
      %v515 = vpack.c.b16 %v503, %v501
      %v516 = vpack.c.b16 %v504, %v502
      %v517 = vpack.c.b16 %v507, %v505
      %v518 = vpack.c.b16 %v508, %v506
      %v519 = vpack.c.b16 %v511, %v509
      %v520 = vpack.c.b16 %v512, %v510
      %vm529 = vcmask 523264
      %v531 = vsel %vm529, %v477, 0
      %v534 = vsel %vm529, %v478, 0
      %v537 = vsel %vm529, %v479, 0
      %v540 = vsel %vm529, %v480, 0
      %542 = vmatprep.subr.bf16.mxu0 %v514
      %543 = vmatpush1.bf16.msra.mxu0 %v513
      %544 = vmatprep.subr.bf16.mxu0 %v516
      %545 = vmatpush1.bf16.msra.mxu0 %v515
      %546 = vmatprep.subr.bf16.mxu0 %v518
      %547 = vmatpush1.bf16.msra.mxu0 %v517
      %548 = vmatprep.subr.bf16.mxu0 %v520
      %549 = vmatpush1.bf16.msra.mxu0 %v519
      %550 = vmatprep.subr.bf16.mxu0 0
      %551 = vmatpush1.bf16.msra.mxu0 0
      %552 = vmatprep.subr.bf16.mxu0 0
      %553 = vmatpush1.bf16.msra.mxu0 0
      %554 = vmatprep.subr.bf16.mxu0 0
      %555 = vmatpush1.bf16.msra.mxu0 0
      %556 = vmatprep.subr.bf16.mxu0 0
      %557 = vmatpush1.bf16.msra.mxu0 0
      %558 = vmatprep.subr.bf16.mxu0 0
      %559 = vmatpush1.bf16.msra.mxu0 0
      %560 = vmatprep.subr.bf16.mxu0 0
      %561 = vmatpush1.bf16.msra.mxu0 0
      %562 = vmatprep.subr.bf16.mxu0 0
      %563 = vmatpush1.bf16.msra.mxu0 0
      %564 = vmatprep.subr.bf16.mxu0 0
      %565 = vmatpush1.bf16.msra.mxu0 0
      %566 = vmatprep.subr.bf16.mxu0 0
      %567 = vmatpush1.bf16.msra.mxu0 0
      %568 = vmatprep.subr.bf16.mxu0 0
      %569 = vmatpush1.bf16.msra.mxu0 0
      %570 = vmatprep.subr.bf16.mxu0 0
      %571 = vmatpush1.bf16.msra.mxu0 0
      %572 = vmatprep.subr.bf16.mxu0 0
      %573 = vmatpush1.bf16.msra.mxu0 0
      %574 = vmatprep.mubr.bf16.mxu0 0
      %575 = vmatmul.mubr.bf16.gmra.mrb[0].mxu0 %v531
      %v576 = vpop.f32.mrb[0].mxu0
      %v577 = vadd.f32 0.0, %v576
      %v578 = vpop.f32.mrb[0].mxu0
      %v579 = vadd.f32 0.0, %v578
      %v580 = vpop.f32.mrb[0].mxu0
      %v581 = vadd.f32 0.0, %v580
      %v582 = vpop.f32.mrb[0].mxu0
      %v583 = vadd.f32 0.0, %v582
      %584 = vmatprep.mubr.bf16.mxu0 0
      %585 = vmatmul.mubr.bf16.gmra.mrb[0].mxu0 %v534
      %v586 = vpop.f32.mrb[0].mxu0
      %v587 = vadd.f32 0.0, %v586
      %v588 = vpop.f32.mrb[0].mxu0
      %v589 = vadd.f32 0.0, %v588
      %v590 = vpop.f32.mrb[0].mxu0
      %v591 = vadd.f32 0.0, %v590
      %v592 = vpop.f32.mrb[0].mxu0
      %v593 = vadd.f32 0.0, %v592
      %594 = vmatprep.mubr.bf16.mxu0 0
      %595 = vmatmul.mubr.bf16.gmra.mrb[0].mxu0 %v537
      %v596 = vpop.f32.mrb[0].mxu0
      %v597 = vadd.f32 0.0, %v596
      %v598 = vpop.f32.mrb[0].mxu0
      %v599 = vadd.f32 0.0, %v598
      %v600 = vpop.f32.mrb[0].mxu0
      %v601 = vadd.f32 0.0, %v600
      %v602 = vpop.f32.mrb[0].mxu0
      %v603 = vadd.f32 0.0, %v602
      %604 = vmatprep.mubr.bf16.mxu0 0
      %605 = vmatmul.mubr.bf16.gmra.mrb[0].mxu0 %v540
      %v606 = vpop.f32.mrb[0].mxu0
      %v607 = vadd.f32 0.0, %v606
      %v608 = vpop.f32.mrb[0].mxu0
      %v609 = vadd.f32 0.0, %v608
      %v610 = vpop.f32.mrb[0].mxu0
      %v611 = vadd.f32 0.0, %v610
      %v612 = vpop.f32.mrb[0].mxu0
      %v613 = vadd.f32 0.0, %v612
      %614 = vdwg.mxu0
      %615 = vst [vmem:[#allocation3] sm:$0xff] %v577
      %616 = vst [vmem:[#allocation3 + $0x8] sm:$0xff] %v579
      %617 = vst [vmem:[#allocation3 + $0x10] sm:$0xff] %v581
      %618 = vst [vmem:[#allocation3 + $0x18] sm:$0xff] %v583
      %619 = vst [vmem:[#allocation3 + $0x20] sm:$0xff] %v587
      %620 = vst [vmem:[#allocation3 + $0x28] sm:$0xff] %v589
      %621 = vst [vmem:[#allocation3 + $0x30] sm:$0xff] %v591
      %622 = vst [vmem:[#allocation3 + $0x38] sm:$0xff] %v593
      %623 = vst [vmem:[#allocation3 + $0x40] sm:$0xff] %v597
      %624 = vst [vmem:[#allocation3 + $0x48] sm:$0xff] %v599
      %625 = vst [vmem:[#allocation3 + $0x50] sm:$0xff] %v601
      %626 = vst [vmem:[#allocation3 + $0x58] sm:$0xff] %v603
      %627 = vst [vmem:[#allocation3 + $0x60] sm:$0xff] %v607
      %628 = vst [vmem:[#allocation3 + $0x68] sm:$0xff] %v609
      %629 = vst [vmem:[#allocation3 + $0x70] sm:$0xff] %v611
      %630 = vst [vmem:[#allocation3 + $0x78] sm:$0xff] %v613
      %v631 = vld [vmem:[%s417] sm:$0x1]
      %v633 = vlaneseq
      %v634 = vshrl.u32 %v633, 7
      %v635 = vsub.s32 0, %v634
      %v636 = vrot.slane %v631, %v635
      %v638 = vld [vmem:[%s420] sm:$0x1]
      %v640 = vlaneseq
      %v641 = vshrl.u32 %v640, 7
      %v642 = vsub.s32 0, %v641
      %v643 = vrot.slane %v638, %v642
      %s645 = smul.u32 0, 2
      %s646 = smul.addr %s645, 8
      %s647 = scalar_lea.vmem [#allocation3], %s646
      %v648 = vld [vmem:[%s647] sm:$0xff]
      %v649 = vld [vmem:[%s647 + $0x8] sm:$0xff]
      %s650 = smul.u32 7, 2
      %s651 = smul.addr %s650, 8
      %s652 = scalar_lea.vmem [#allocation3], %s651
      %v653 = vld [vmem:[%s652] sm:$0xff]
      %v654 = vld [vmem:[%s652 + $0x8] sm:$0xff]
      %v655 = vmul.f32 %v636, 0.0
      %v656 = vmul.f32 %v643, 0.0
      %v657 = vsub.f32 %v655, %v656
      %v658 = vadd.f32 %v657, %v648
      %v659 = vadd.f32 %v655, %v656
      %v660 = vadd.f32 %v659, %v649
      %v661 = vadd.f32 %v657, %v653
      %v662 = vadd.f32 %v659, %v654
      %s663 = smul.u32 0, 4
      %s664 = smul.addr %s663, 8
      %s665 = scalar_lea.vmem [#allocation4], %s664
      %666 = vst [vmem:[%s665] sm:$0xff] %v658
      %667 = vst [vmem:[%s665 + $0x8] sm:$0xff] %v660
      %s668 = smul.u32 7, 4
      %s669 = smul.addr %s668, 8
      %s670 = scalar_lea.vmem [#allocation4], %s669
      %671 = vst [vmem:[%s670 + $0x10] sm:$0xff] %v661
      %672 = vst [vmem:[%s670 + $0x18] sm:$0xff] %v662
      %s673 = smul.u32 1, 2
      %s674 = smul.addr %s673, 8
      %s675 = scalar_lea.vmem [#allocation3], %s674
      %v676 = vld [vmem:[%s675] sm:$0xff]
      %v677 = vld [vmem:[%s675 + $0x8] sm:$0xff]
      %s678 = smul.u32 6, 2
      %s679 = smul.addr %s678, 8
      %s680 = scalar_lea.vmem [#allocation3], %s679
      %v681 = vld [vmem:[%s680] sm:$0xff]
      %v682 = vld [vmem:[%s680 + $0x8] sm:$0xff]
      %v683 = vmul.f32 %v636, %v658
      %v684 = vmul.f32 %v643, %v660
      %v685 = vsub.f32 %v683, %v684
      %v686 = vadd.f32 %v685, %v676
      %v687 = vmul.f32 %v636, %v660
      %v688 = vmul.f32 %v643, %v658
      %v689 = vadd.f32 %v687, %v688
      %v690 = vadd.f32 %v689, %v677
      %v691 = vmul.f32 %v636, %v661
      %v692 = vmul.f32 %v643, %v662
      %v693 = vsub.f32 %v691, %v692
      %v694 = vadd.f32 %v693, %v681
      %v695 = vmul.f32 %v636, %v662
      %v696 = vmul.f32 %v643, %v661
      %v697 = vadd.f32 %v695, %v696
      %v698 = vadd.f32 %v697, %v682
      %s699 = smul.u32 1, 4
      %s700 = smul.addr %s699, 8
      %s701 = scalar_lea.vmem [#allocation4], %s700
      %702 = vst [vmem:[%s701] sm:$0xff] %v686
      %703 = vst [vmem:[%s701 + $0x8] sm:$0xff] %v690
      %s704 = smul.u32 6, 4
      %s705 = smul.addr %s704, 8
      %s706 = scalar_lea.vmem [#allocation4], %s705
      %707 = vst [vmem:[%s706 + $0x10] sm:$0xff] %v694
      %708 = vst [vmem:[%s706 + $0x18] sm:$0xff] %v698
      %s709 = smul.u32 2, 2
      %s710 = smul.addr %s709, 8
      %s711 = scalar_lea.vmem [#allocation3], %s710
      %v712 = vld [vmem:[%s711] sm:$0xff]
      %v713 = vld [vmem:[%s711 + $0x8] sm:$0xff]
      %s714 = smul.u32 5, 2
      %s715 = smul.addr %s714, 8
      %s716 = scalar_lea.vmem [#allocation3], %s715
      %v717 = vld [vmem:[%s716] sm:$0xff]
      %v718 = vld [vmem:[%s716 + $0x8] sm:$0xff]
      %v719 = vmul.f32 %v636, %v686
      %v720 = vmul.f32 %v643, %v690
      %v721 = vsub.f32 %v719, %v720
      %v722 = vadd.f32 %v721, %v712
      %v723 = vmul.f32 %v636, %v690
      %v724 = vmul.f32 %v643, %v686
      %v725 = vadd.f32 %v723, %v724
      %v726 = vadd.f32 %v725, %v713
      %v727 = vmul.f32 %v636, %v694
      %v728 = vmul.f32 %v643, %v698
      %v729 = vsub.f32 %v727, %v728
      %v730 = vadd.f32 %v729, %v717
      %v731 = vmul.f32 %v636, %v698
      %v732 = vmul.f32 %v643, %v694
      %v733 = vadd.f32 %v731, %v732
      %v734 = vadd.f32 %v733, %v718
      %s735 = smul.u32 2, 4
      %s736 = smul.addr %s735, 8
      %s737 = scalar_lea.vmem [#allocation4], %s736
      %738 = vst [vmem:[%s737] sm:$0xff] %v722
      %739 = vst [vmem:[%s737 + $0x8] sm:$0xff] %v726
      %s740 = smul.u32 5, 4
      %s741 = smul.addr %s740, 8
      %s742 = scalar_lea.vmem [#allocation4], %s741
      %743 = vst [vmem:[%s742 + $0x10] sm:$0xff] %v730
      %744 = vst [vmem:[%s742 + $0x18] sm:$0xff] %v734
      %s745 = smul.u32 3, 2
      %s746 = smul.addr %s745, 8
      %s747 = scalar_lea.vmem [#allocation3], %s746
      %v748 = vld [vmem:[%s747] sm:$0xff]
      %v749 = vld [vmem:[%s747 + $0x8] sm:$0xff]
      %s750 = smul.u32 4, 2
      %s751 = smul.addr %s750, 8
      %s752 = scalar_lea.vmem [#allocation3], %s751
      %v753 = vld [vmem:[%s752] sm:$0xff]
      %v754 = vld [vmem:[%s752 + $0x8] sm:$0xff]
      %v755 = vmul.f32 %v636, %v722
      %v756 = vmul.f32 %v643, %v726
      %v757 = vsub.f32 %v755, %v756
      %v758 = vadd.f32 %v757, %v748
      %v759 = vmul.f32 %v636, %v726
      %v760 = vmul.f32 %v643, %v722
      %v761 = vadd.f32 %v759, %v760
      %v762 = vadd.f32 %v761, %v749
      %v763 = vmul.f32 %v636, %v730
      %v764 = vmul.f32 %v643, %v734
      %v765 = vsub.f32 %v763, %v764
      %v766 = vadd.f32 %v765, %v753
      %v767 = vmul.f32 %v636, %v734
      %v768 = vmul.f32 %v643, %v730
      %v769 = vadd.f32 %v767, %v768
      %v770 = vadd.f32 %v769, %v754
      %s771 = smul.u32 3, 4
      %s772 = smul.addr %s771, 8
      %s773 = scalar_lea.vmem [#allocation4], %s772
      %774 = vst [vmem:[%s773] sm:$0xff] %v758
      %775 = vst [vmem:[%s773 + $0x8] sm:$0xff] %v762
      %s776 = smul.u32 4, 4
      %s777 = smul.addr %s776, 8
      %s778 = scalar_lea.vmem [#allocation4], %s777
      %779 = vst [vmem:[%s778 + $0x10] sm:$0xff] %v766
      %780 = vst [vmem:[%s778 + $0x18] sm:$0xff] %v770
      %v781 = vld [vmem:[%s752] sm:$0xff]
      %v782 = vld [vmem:[%s752 + $0x8] sm:$0xff]
      %v783 = vld [vmem:[%s747] sm:$0xff]
      %v784 = vld [vmem:[%s747 + $0x8] sm:$0xff]
      %v785 = vmul.f32 %v636, %v758
      %v786 = vmul.f32 %v643, %v762
      %v787 = vsub.f32 %v785, %v786
      %v788 = vadd.f32 %v787, %v781
      %v789 = vmul.f32 %v636, %v762
      %v790 = vmul.f32 %v643, %v758
      %v791 = vadd.f32 %v789, %v790
      %v792 = vadd.f32 %v791, %v782
      %v793 = vmul.f32 %v636, %v766
      %v794 = vmul.f32 %v643, %v770
      %v795 = vsub.f32 %v793, %v794
      %v796 = vadd.f32 %v795, %v783
      %v797 = vmul.f32 %v636, %v770
      %v798 = vmul.f32 %v643, %v766
      %v799 = vadd.f32 %v797, %v798
      %v800 = vadd.f32 %v799, %v784
      %801 = vst [vmem:[%s778] sm:$0xff] %v788
      %802 = vst [vmem:[%s778 + $0x8] sm:$0xff] %v792
      %803 = vst [vmem:[%s773 + $0x10] sm:$0xff] %v796
      %804 = vst [vmem:[%s773 + $0x18] sm:$0xff] %v800
      %v805 = vld [vmem:[%s716] sm:$0xff]
      %v806 = vld [vmem:[%s716 + $0x8] sm:$0xff]
      %v807 = vld [vmem:[%s711] sm:$0xff]
      %v808 = vld [vmem:[%s711 + $0x8] sm:$0xff]
      %v809 = vmul.f32 %v636, %v788
      %v810 = vmul.f32 %v643, %v792
      %v811 = vsub.f32 %v809, %v810
      %v812 = vadd.f32 %v811, %v805
      %v813 = vmul.f32 %v636, %v792
      %v814 = vmul.f32 %v643, %v788
      %v815 = vadd.f32 %v813, %v814
      %v816 = vadd.f32 %v815, %v806
      %v817 = vmul.f32 %v636, %v796
      %v818 = vmul.f32 %v643, %v800
      %v819 = vsub.f32 %v817, %v818
      %v820 = vadd.f32 %v819, %v807
      %v821 = vmul.f32 %v636, %v800
      %v822 = vmul.f32 %v643, %v796
      %v823 = vadd.f32 %v821, %v822
      %v824 = vadd.f32 %v823, %v808
      %825 = vst [vmem:[%s742] sm:$0xff] %v812
      %826 = vst [vmem:[%s742 + $0x8] sm:$0xff] %v816
      %827 = vst [vmem:[%s737 + $0x10] sm:$0xff] %v820
      %828 = vst [vmem:[%s737 + $0x18] sm:$0xff] %v824
      %v829 = vld [vmem:[%s680] sm:$0xff]
      %v830 = vld [vmem:[%s680 + $0x8] sm:$0xff]
      %v831 = vld [vmem:[%s675] sm:$0xff]
      %v832 = vld [vmem:[%s675 + $0x8] sm:$0xff]
      %v833 = vmul.f32 %v636, %v812
      %v834 = vmul.f32 %v643, %v816
      %v835 = vsub.f32 %v833, %v834
      %v836 = vadd.f32 %v835, %v829
      %v837 = vmul.f32 %v636, %v816
      %v838 = vmul.f32 %v643, %v812
      %v839 = vadd.f32 %v837, %v838
      %v840 = vadd.f32 %v839, %v830
      %v841 = vmul.f32 %v636, %v820
      %v842 = vmul.f32 %v643, %v824
      %v843 = vsub.f32 %v841, %v842
      %v844 = vadd.f32 %v843, %v831
      %v845 = vmul.f32 %v636, %v824
      %v846 = vmul.f32 %v643, %v820
      %v847 = vadd.f32 %v845, %v846
      %v848 = vadd.f32 %v847, %v832
      %849 = vst [vmem:[%s706] sm:$0xff] %v836
      %850 = vst [vmem:[%s706 + $0x8] sm:$0xff] %v840
      %851 = vst [vmem:[%s701 + $0x10] sm:$0xff] %v844
      %852 = vst [vmem:[%s701 + $0x18] sm:$0xff] %v848
      %v853 = vld [vmem:[%s652] sm:$0xff]
      %v854 = vld [vmem:[%s652 + $0x8] sm:$0xff]
      %v855 = vld [vmem:[%s647] sm:$0xff]
      %v856 = vld [vmem:[%s647 + $0x8] sm:$0xff]
      %v857 = vmul.f32 %v636, %v836
      %v858 = vmul.f32 %v643, %v840
      %v859 = vsub.f32 %v857, %v858
      %v860 = vadd.f32 %v859, %v853
      %v861 = vmul.f32 %v636, %v840
      %v862 = vmul.f32 %v643, %v836
      %v863 = vadd.f32 %v861, %v862
      %v864 = vadd.f32 %v863, %v854
      %v865 = vmul.f32 %v636, %v844
      %v866 = vmul.f32 %v643, %v848
      %v867 = vsub.f32 %v865, %v866
      %v868 = vadd.f32 %v867, %v855
      %v869 = vmul.f32 %v636, %v848
      %v870 = vmul.f32 %v643, %v844
      %v871 = vadd.f32 %v869, %v870
      %v872 = vadd.f32 %v871, %v856
      %873 = vst [vmem:[%s670] sm:$0xff] %v860
      %874 = vst [vmem:[%s670 + $0x8] sm:$0xff] %v864
      %875 = vst [vmem:[%s665 + $0x10] sm:$0xff] %v868
      %876 = vst [vmem:[%s665 + $0x18] sm:$0xff] %v872
      %v877 = vld [vmem:[#allocation4] sm:$0xff]
      %v878 = vld [vmem:[#allocation4 + $0x8] sm:$0xff]
      %v879 = vld [vmem:[#allocation4 + $0x10] sm:$0xff]
      %v880 = vld [vmem:[#allocation4 + $0x18] sm:$0xff]
      %v881 = vld [vmem:[#allocation4 + $0x20] sm:$0xff]
      %v882 = vld [vmem:[#allocation4 + $0x28] sm:$0xff]
      %v883 = vld [vmem:[#allocation4 + $0x30] sm:$0xff]
      %v884 = vld [vmem:[#allocation4 + $0x38] sm:$0xff]
      %v885 = vld [vmem:[#allocation4 + $0x40] sm:$0xff]
      %v886 = vld [vmem:[#allocation4 + $0x48] sm:$0xff]
      %v887 = vld [vmem:[#allocation4 + $0x50] sm:$0xff]
      %v888 = vld [vmem:[#allocation4 + $0x58] sm:$0xff]
      %v889 = vld [vmem:[#allocation4 + $0x60] sm:$0xff]
      %v890 = vld [vmem:[#allocation4 + $0x68] sm:$0xff]
      %v891 = vld [vmem:[#allocation4 + $0x70] sm:$0xff]
      %v892 = vld [vmem:[#allocation4 + $0x78] sm:$0xff]
      %v893 = vld [vmem:[#allocation4 + $0x80] sm:$0xff]
      %v894 = vld [vmem:[#allocation4 + $0x88] sm:$0xff]
      %v895 = vld [vmem:[#allocation4 + $0x90] sm:$0xff]
      %v896 = vld [vmem:[#allocation4 + $0x98] sm:$0xff]
      %v897 = vld [vmem:[#allocation4 + $0xa0] sm:$0xff]
      %v898 = vld [vmem:[#allocation4 + $0xa8] sm:$0xff]
      %v899 = vld [vmem:[#allocation4 + $0xb0] sm:$0xff]
      %v900 = vld [vmem:[#allocation4 + $0xb8] sm:$0xff]
      %v901 = vld [vmem:[#allocation4 + $0xc0] sm:$0xff]
      %v902 = vld [vmem:[#allocation4 + $0xc8] sm:$0xff]
      %v903 = vld [vmem:[#allocation4 + $0xd0] sm:$0xff]
      %v904 = vld [vmem:[#allocation4 + $0xd8] sm:$0xff]
      %v905 = vld [vmem:[#allocation4 + $0xe0] sm:$0xff]
      %v906 = vld [vmem:[#allocation4 + $0xe8] sm:$0xff]
      %v907 = vld [vmem:[#allocation4 + $0xf0] sm:$0xff]
      %v908 = vld [vmem:[#allocation4 + $0xf8] sm:$0xff]
      %v909 = vpack.c.bf16 %v881, %v877
      %v910 = vpack.c.bf16 %v882, %v878
      %v911 = vpack.c.bf16 %v883, %v879
      %v912 = vpack.c.bf16 %v884, %v880
      %v913 = vpack.c.bf16 %v889, %v885
      %v914 = vpack.c.bf16 %v890, %v886
      %v915 = vpack.c.bf16 %v891, %v887
      %v916 = vpack.c.bf16 %v892, %v888
      %v917 = vpack.c.bf16 %v897, %v893
      %v918 = vpack.c.bf16 %v898, %v894
      %v919 = vpack.c.bf16 %v899, %v895
      %v920 = vpack.c.bf16 %v900, %v896
      %v921 = vpack.c.bf16 %v905, %v901
      %v922 = vpack.c.bf16 %v906, %v902
      %v923 = vpack.c.bf16 %v907, %v903
      %v924 = vpack.c.bf16 %v908, %v904
      %v925 = vld [vmem:[%s425] sm:$0xf]
      %v926 = vld [vmem:[%s425 + $0x4] sm:$0xf]
      %v927 = vld [vmem:[%s425 + $0x8] sm:$0xf]
      %v928 = vld [vmem:[%s425 + $0xc] sm:$0xf]
      %v929 = vld [vmem:[%s425 + $0x10] sm:$0xf]
      %v930 = vld [vmem:[%s425 + $0x14] sm:$0xf]
      %v931 = vld [vmem:[%s425 + $0x18] sm:$0xf]
      %v932 = vld [vmem:[%s425 + $0x1c] sm:$0xf]
      %v933 = vld [vmem:[%s425 + $0x20] sm:$0xf]
      %v934 = vld [vmem:[%s425 + $0x24] sm:$0xf]
      %v935 = vld [vmem:[%s425 + $0x28] sm:$0xf]
      %v936 = vld [vmem:[%s425 + $0x2c] sm:$0xf]
      %v937 = vld [vmem:[%s425 + $0x30] sm:$0xf]
      %v938 = vld [vmem:[%s425 + $0x34] sm:$0xf]
      %v939 = vld [vmem:[%s425 + $0x38] sm:$0xf]
      %v940 = vld [vmem:[%s425 + $0x3c] sm:$0xf]
      %v941 = vld [vmem:[%s425 + $0x40] sm:$0xf]
      %v942 = vld [vmem:[%s425 + $0x44] sm:$0xf]
      %v943 = vld [vmem:[%s425 + $0x48] sm:$0xf]
      %v944 = vld [vmem:[%s425 + $0x4c] sm:$0xf]
      %v945 = vld [vmem:[%s425 + $0x50] sm:$0xf]
      %v946 = vld [vmem:[%s425 + $0x54] sm:$0xf]
      %v947 = vld [vmem:[%s425 + $0x58] sm:$0xf]
      %v948 = vld [vmem:[%s425 + $0x5c] sm:$0xf]
      %v949 = vld [vmem:[%s425 + $0x60] sm:$0xf]
      %v950 = vld [vmem:[%s425 + $0x64] sm:$0xf]
      %v951 = vld [vmem:[%s425 + $0x68] sm:$0xf]
      %v952 = vld [vmem:[%s425 + $0x6c] sm:$0xf]
      %v953 = vld [vmem:[%s425 + $0x70] sm:$0xf]
      %v954 = vld [vmem:[%s425 + $0x74] sm:$0xf]
      %v955 = vld [vmem:[%s425 + $0x78] sm:$0xf]
      %v956 = vld [vmem:[%s425 + $0x7c] sm:$0xf]
      %v957 = vld [vmem:[%s425 + $0x80] sm:$0xf]
      %v958 = vld [vmem:[%s425 + $0x84] sm:$0xf]
      %v959 = vld [vmem:[%s425 + $0x88] sm:$0xf]
      %v960 = vld [vmem:[%s425 + $0x8c] sm:$0xf]
      %v961 = vld [vmem:[%s425 + $0x90] sm:$0xf]
      %v962 = vld [vmem:[%s425 + $0x94] sm:$0xf]
      %v963 = vld [vmem:[%s425 + $0x98] sm:$0xf]
      %v964 = vld [vmem:[%s425 + $0x9c] sm:$0xf]
      %v965 = vld [vmem:[%s425 + $0xa0] sm:$0xf]
      %v966 = vld [vmem:[%s425 + $0xa4] sm:$0xf]
      %v967 = vld [vmem:[%s425 + $0xa8] sm:$0xf]
      %v968 = vld [vmem:[%s425 + $0xac] sm:$0xf]
      %v969 = vld [vmem:[%s425 + $0xb0] sm:$0xf]
      %v970 = vld [vmem:[%s425 + $0xb4] sm:$0xf]
      %v971 = vld [vmem:[%s425 + $0xb8] sm:$0xf]
      %v972 = vld [vmem:[%s425 + $0xbc] sm:$0xf]
      %v973 = vld [vmem:[%s425 + $0xc0] sm:$0xf]
      %v974 = vld [vmem:[%s425 + $0xc4] sm:$0xf]
      %v975 = vld [vmem:[%s425 + $0xc8] sm:$0xf]
      %v976 = vld [vmem:[%s425 + $0xcc] sm:$0xf]
      %v977 = vld [vmem:[%s425 + $0xd0] sm:$0xf]
      %v978 = vld [vmem:[%s425 + $0xd4] sm:$0xf]
      %v979 = vld [vmem:[%s425 + $0xd8] sm:$0xf]
      %v980 = vld [vmem:[%s425 + $0xdc] sm:$0xf]
      %v981 = vld [vmem:[%s425 + $0xe0] sm:$0xf]
      %v982 = vld [vmem:[%s425 + $0xe4] sm:$0xf]
      %v983 = vld [vmem:[%s425 + $0xe8] sm:$0xf]
      %v984 = vld [vmem:[%s425 + $0xec] sm:$0xf]
      %v985 = vld [vmem:[%s425 + $0xf0] sm:$0xf]
      %v986 = vld [vmem:[%s425 + $0xf4] sm:$0xf]
      %v987 = vld [vmem:[%s425 + $0xf8] sm:$0xf]
      %v988 = vld [vmem:[%s425 + $0xfc] sm:$0xf]
      %v989 = vld [vmem:[%s428] sm:$0x1]
      %v991 = vlaneseq
      %v992 = vshrl.u32 %v991, 7
      %v993 = vsub.s32 0, %v992
      %v994 = vrot.slane %v989, %v993
      %v996 = vmul.f32 %v469, %v994
      %v997 = vmul.f32 %v470, %v994
      %v998 = vmul.f32 %v471, %v994
      %v999 = vmul.f32 %v472, %v994
      %v1000 = vmul.f32 %v473, %v994
      %v1001 = vmul.f32 %v474, %v994
      %v1002 = vmul.f32 %v475, %v994
      %v1003 = vmul.f32 %v476, %v994
      %v1068 = vunpack.c.l.b16 %v925
      %v1069 = vunpack.c.l.b16 %v926
      %v1070 = vunpack.c.l.b16 %v927
      %v1071 = vunpack.c.l.b16 %v928
      %v1072 = vunpack.c.l.b16 %v929
      %v1073 = vunpack.c.l.b16 %v930
      %v1074 = vunpack.c.l.b16 %v931
      %v1075 = vunpack.c.l.b16 %v932
      %v1076 = vunpack.c.l.b16 %v933
      %v1077 = vunpack.c.l.b16 %v934
      %v1078 = vunpack.c.l.b16 %v935
      %v1079 = vunpack.c.l.b16 %v936
      %v1080 = vunpack.c.l.b16 %v937
      %v1081 = vunpack.c.l.b16 %v938
      %v1082 = vunpack.c.l.b16 %v939
      %v1083 = vunpack.c.l.b16 %v940
      %v1084 = vunpack.c.l.b16 %v941
      %v1085 = vunpack.c.l.b16 %v942
      %v1086 = vunpack.c.l.b16 %v943
      %v1087 = vunpack.c.l.b16 %v944
      %v1088 = vunpack.c.l.b16 %v945
      %v1089 = vunpack.c.l.b16 %v946
      %v1090 = vunpack.c.l.b16 %v947
      %v1091 = vunpack.c.l.b16 %v948
      %v1092 = vunpack.c.l.b16 %v949
      %v1093 = vunpack.c.l.b16 %v950
      %v1094 = vunpack.c.l.b16 %v951
      %v1095 = vunpack.c.l.b16 %v952
      %v1096 = vunpack.c.l.b16 %v953
      %v1097 = vunpack.c.l.b16 %v954
      %v1098 = vunpack.c.l.b16 %v955
      %v1099 = vunpack.c.l.b16 %v956
      %v1100 = vunpack.c.l.b16 %v957
      %v1101 = vunpack.c.l.b16 %v958
      %v1102 = vunpack.c.l.b16 %v959
      %v1103 = vunpack.c.l.b16 %v960
      %v1104 = vunpack.c.l.b16 %v961
      %v1105 = vunpack.c.l.b16 %v962
      %v1106 = vunpack.c.l.b16 %v963
      %v1107 = vunpack.c.l.b16 %v964
      %v1108 = vunpack.c.l.b16 %v965
      %v1109 = vunpack.c.l.b16 %v966
      %v1110 = vunpack.c.l.b16 %v967
      %v1111 = vunpack.c.l.b16 %v968
      %v1112 = vunpack.c.l.b16 %v969
      %v1113 = vunpack.c.l.b16 %v970
      %v1114 = vunpack.c.l.b16 %v971
      %v1115 = vunpack.c.l.b16 %v972
      %v1116 = vunpack.c.l.b16 %v973
      %v1117 = vunpack.c.l.b16 %v974
      %v1118 = vunpack.c.l.b16 %v975
      %v1119 = vunpack.c.l.b16 %v976
      %v1120 = vunpack.c.l.b16 %v977
      %v1121 = vunpack.c.l.b16 %v978
      %v1122 = vunpack.c.l.b16 %v979
      %v1123 = vunpack.c.l.b16 %v980
      %v1124 = vunpack.c.l.b16 %v981
      %v1125 = vunpack.c.l.b16 %v982
      %v1126 = vunpack.c.l.b16 %v983
      %v1127 = vunpack.c.l.b16 %v984
      %v1128 = vunpack.c.l.b16 %v985
      %v1129 = vunpack.c.l.b16 %v986
      %v1130 = vunpack.c.l.b16 %v987
      %v1131 = vunpack.c.l.b16 %v988
      %v1132 = vpack.c.b16 %v1069, %v1068
      %v1133 = vpack.c.b16 %v1071, %v1070
      %v1134 = vpack.c.b16 %v1073, %v1072
      %v1135 = vpack.c.b16 %v1075, %v1074
      %v1136 = vpack.c.b16 %v1077, %v1076
      %v1137 = vpack.c.b16 %v1079, %v1078
      %v1138 = vpack.c.b16 %v1081, %v1080
      %v1139 = vpack.c.b16 %v1083, %v1082
      %v1140 = vpack.c.b16 %v1085, %v1084
      %v1141 = vpack.c.b16 %v1087, %v1086
      %v1142 = vpack.c.b16 %v1089, %v1088
      %v1143 = vpack.c.b16 %v1091, %v1090
      %v1144 = vpack.c.b16 %v1093, %v1092
      %v1145 = vpack.c.b16 %v1095, %v1094
      %v1146 = vpack.c.b16 %v1097, %v1096
      %v1147 = vpack.c.b16 %v1099, %v1098
      %v1148 = vpack.c.b16 %v1101, %v1100
      %v1149 = vpack.c.b16 %v1103, %v1102
      %v1150 = vpack.c.b16 %v1105, %v1104
      %v1151 = vpack.c.b16 %v1107, %v1106
      %v1152 = vpack.c.b16 %v1109, %v1108
      %v1153 = vpack.c.b16 %v1111, %v1110
      %v1154 = vpack.c.b16 %v1113, %v1112
      %v1155 = vpack.c.b16 %v1115, %v1114
      %v1156 = vpack.c.b16 %v1117, %v1116
      %v1157 = vpack.c.b16 %v1119, %v1118
      %v1158 = vpack.c.b16 %v1121, %v1120
      %v1159 = vpack.c.b16 %v1123, %v1122
      %v1160 = vpack.c.b16 %v1125, %v1124
      %v1161 = vpack.c.b16 %v1127, %v1126
      %v1162 = vpack.c.b16 %v1129, %v1128
      %v1163 = vpack.c.b16 %v1131, %v1130
      %1196 = vmatprep.subr.bf16.mxu0 0
      %1197 = vmatpush1.bf16.msra.mxu0 %v1132
      %1198 = vmatprep.subr.bf16.mxu0 0
      %1199 = vmatpush1.bf16.msra.mxu0 %v1133
      %1200 = vmatprep.subr.bf16.mxu0 0
      %1201 = vmatpush1.bf16.msra.mxu0 %v1134
      %1202 = vmatprep.subr.bf16.mxu0 0
      %1203 = vmatpush1.bf16.msra.mxu0 %v1135
      %1204 = vmatprep.subr.bf16.mxu0 0
      %1205 = vmatpush1.bf16.msra.mxu0 %v1136
      %1206 = vmatprep.subr.bf16.mxu0 0
      %1207 = vmatpush1.bf16.msra.mxu0 %v1137
      %1208 = vmatprep.subr.bf16.mxu0 0
      %1209 = vmatpush1.bf16.msra.mxu0 %v1138
      %1210 = vmatprep.subr.bf16.mxu0 0
      %1211 = vmatpush1.bf16.msra.mxu0 %v1139
      %1212 = vmatprep.subr.bf16.mxu0 0
      %1213 = vmatpush1.bf16.msra.mxu0 %v1140
      %1214 = vmatprep.subr.bf16.mxu0 0
      %1215 = vmatpush1.bf16.msra.mxu0 %v1141
      %1216 = vmatprep.subr.bf16.mxu0 0
      %1217 = vmatpush1.bf16.msra.mxu0 %v1142
      %1218 = vmatprep.subr.bf16.mxu0 0
      %1219 = vmatpush1.bf16.msra.mxu0 %v1143
      %1220 = vmatprep.subr.bf16.mxu0 0
      %1221 = vmatpush1.bf16.msra.mxu0 %v1144
      %1222 = vmatprep.subr.bf16.mxu0 0
      %1223 = vmatpush1.bf16.msra.mxu0 %v1145
      %1224 = vmatprep.subr.bf16.mxu0 0
      %1225 = vmatpush1.bf16.msra.mxu0 %v1146
      %1226 = vmatprep.subr.bf16.mxu0 0
      %1227 = vmatpush1.bf16.msra.mxu0 %v1147
      %1228 = vmatprep.mubr.bf16.mxu0 %v910
      %1229 = vmatmul.mubr.bf16.gmra.mrb[0].mxu0 %v909
      %v1230 = vpop.f32.mrb[0].mxu0
      %v1231 = vadd.f32 %v996, %v1230
      %v1232 = vpop.f32.mrb[0].mxu0
      %v1233 = vpop.f32.mrb[0].mxu0
      %v1234 = vadd.f32 %v997, %v1233
      %v1235 = vpop.f32.mrb[0].mxu0
      %1236 = vmatprep.mubr.bf16.mxu0 %v914
      %1237 = vmatmul.mubr.bf16.gmra.mrb[0].mxu0 %v913
      %v1238 = vpop.f32.mrb[0].mxu0
      %v1239 = vadd.f32 %v998, %v1238
      %v1240 = vpop.f32.mrb[0].mxu0
      %v1241 = vpop.f32.mrb[0].mxu0
      %v1242 = vadd.f32 %v999, %v1241
      %v1243 = vpop.f32.mrb[0].mxu0
      %1244 = vmatprep.mubr.bf16.mxu0 %v918
      %1245 = vmatmul.mubr.bf16.gmra.mrb[0].mxu0 %v917
      %v1246 = vpop.f32.mrb[0].mxu0
      %v1247 = vadd.f32 %v1000, %v1246
      %v1248 = vpop.f32.mrb[0].mxu0
      %v1249 = vpop.f32.mrb[0].mxu0
      %v1250 = vadd.f32 %v1001, %v1249
      %v1251 = vpop.f32.mrb[0].mxu0
      %1252 = vmatprep.mubr.bf16.mxu0 %v922
      %1253 = vmatmul.mubr.bf16.gmra.mrb[0].mxu0 %v921
      %v1254 = vpop.f32.mrb[0].mxu0
      %v1255 = vadd.f32 %v1002, %v1254
      %v1256 = vpop.f32.mrb[0].mxu0
      %v1257 = vpop.f32.mrb[0].mxu0
      %v1258 = vadd.f32 %v1003, %v1257
      %v1259 = vpop.f32.mrb[0].mxu0
      %1260 = vdwg.mxu0
      %1261 = vmatprep.subr.bf16.mxu0 0
      %1262 = vmatpush1.bf16.msra.mxu0 %v1148
      %1263 = vmatprep.subr.bf16.mxu0 0
      %1264 = vmatpush1.bf16.msra.mxu0 %v1149
      %1265 = vmatprep.subr.bf16.mxu0 0
      %1266 = vmatpush1.bf16.msra.mxu0 %v1150
      %1267 = vmatprep.subr.bf16.mxu0 0
      %1268 = vmatpush1.bf16.msra.mxu0 %v1151
      %1269 = vmatprep.subr.bf16.mxu0 0
      %1270 = vmatpush1.bf16.msra.mxu0 %v1152
      %1271 = vmatprep.subr.bf16.mxu0 0
      %1272 = vmatpush1.bf16.msra.mxu0 %v1153
      %1273 = vmatprep.subr.bf16.mxu0 0
      %1274 = vmatpush1.bf16.msra.mxu0 %v1154
      %1275 = vmatprep.subr.bf16.mxu0 0
      %1276 = vmatpush1.bf16.msra.mxu0 %v1155
      %1277 = vmatprep.subr.bf16.mxu0 0
      %1278 = vmatpush1.bf16.msra.mxu0 %v1156
      %1279 = vmatprep.subr.bf16.mxu0 0
      %1280 = vmatpush1.bf16.msra.mxu0 %v1157
      %1281 = vmatprep.subr.bf16.mxu0 0
      %1282 = vmatpush1.bf16.msra.mxu0 %v1158
      %1283 = vmatprep.subr.bf16.mxu0 0
      %1284 = vmatpush1.bf16.msra.mxu0 %v1159
      %1285 = vmatprep.subr.bf16.mxu0 0
      %1286 = vmatpush1.bf16.msra.mxu0 %v1160
      %1287 = vmatprep.subr.bf16.mxu0 0
      %1288 = vmatpush1.bf16.msra.mxu0 %v1161
      %1289 = vmatprep.subr.bf16.mxu0 0
      %1290 = vmatpush1.bf16.msra.mxu0 %v1162
      %1291 = vmatprep.subr.bf16.mxu0 0
      %1292 = vmatpush1.bf16.msra.mxu0 %v1163
      %1293 = vmatprep.mubr.bf16.mxu0 %v912
      %1294 = vmatmul.mubr.bf16.gmra.mrb[0].mxu0 %v911
      %v1295 = vpop.f32.mrb[0].mxu0
      %v1296 = vadd.f32 %v1231, %v1295
      %v1297 = vpop.f32.mrb[0].mxu0
      %v1298 = vpop.f32.mrb[0].mxu0
      %v1299 = vadd.f32 %v1234, %v1298
      %v1300 = vpop.f32.mrb[0].mxu0
      %1301 = vmatprep.mubr.bf16.mxu0 %v916
      %1302 = vmatmul.mubr.bf16.gmra.mrb[0].mxu0 %v915
      %v1303 = vpop.f32.mrb[0].mxu0
      %v1304 = vadd.f32 %v1239, %v1303
      %v1305 = vpop.f32.mrb[0].mxu0
      %v1306 = vpop.f32.mrb[0].mxu0
      %v1307 = vadd.f32 %v1242, %v1306
      %v1308 = vpop.f32.mrb[0].mxu0
      %1309 = vmatprep.mubr.bf16.mxu0 %v920
      %1310 = vmatmul.mubr.bf16.gmra.mrb[0].mxu0 %v919
      %v1311 = vpop.f32.mrb[0].mxu0
      %v1312 = vadd.f32 %v1247, %v1311
      %v1313 = vpop.f32.mrb[0].mxu0
      %v1314 = vpop.f32.mrb[0].mxu0
      %v1315 = vadd.f32 %v1250, %v1314
      %v1316 = vpop.f32.mrb[0].mxu0
      %1317 = vmatprep.mubr.bf16.mxu0 %v924
      %1318 = vmatmul.mubr.bf16.gmra.mrb[0].mxu0 %v923
      %v1319 = vpop.f32.mrb[0].mxu0
      %v1320 = vadd.f32 %v1255, %v1319
      %v1321 = vpop.f32.mrb[0].mxu0
      %v1322 = vpop.f32.mrb[0].mxu0
      %v1323 = vadd.f32 %v1258, %v1322
      %v1324 = vpop.f32.mrb[0].mxu0
      %1325 = vdwg.mxu0
      %v1326 = vmul.f32 %v1296, %v1296
      %v1327 = vmul.f32 %v1299, %v1299
      %v1328 = vmul.f32 %v1304, %v1304
      %v1329 = vmul.f32 %v1307, %v1307
      %v1330 = vmul.f32 %v1312, %v1312
      %v1331 = vmul.f32 %v1315, %v1315
      %v1332 = vmul.f32 %v1320, %v1320
      %v1333 = vmul.f32 %v1323, %v1323
      %v1334 = vmul.f32 %v1296, %v1326
      %v1335 = vmul.f32 %v1299, %v1327
      %v1336 = vmul.f32 %v1304, %v1328
      %v1337 = vmul.f32 %v1307, %v1329
      %v1338 = vmul.f32 %v1312, %v1330
      %v1339 = vmul.f32 %v1315, %v1331
      %v1340 = vmul.f32 %v1320, %v1332
      %v1341 = vmul.f32 %v1323, %v1333
      %v1342 = vmul.f32 %v1334, 0.044715
      %v1343 = vmul.f32 %v1335, 0.044715
      %v1344 = vmul.f32 %v1336, 0.044715
      %v1345 = vmul.f32 %v1337, 0.044715
      %v1346 = vmul.f32 %v1338, 0.044715
      %v1347 = vmul.f32 %v1339, 0.044715
      %v1348 = vmul.f32 %v1340, 0.044715
      %v1349 = vmul.f32 %v1341, 0.044715
      %v1350 = vadd.f32 %v1296, %v1342
      %v1351 = vadd.f32 %v1299, %v1343
      %v1352 = vadd.f32 %v1304, %v1344
      %v1353 = vadd.f32 %v1307, %v1345
      %v1354 = vadd.f32 %v1312, %v1346
      %v1355 = vadd.f32 %v1315, %v1347
      %v1356 = vadd.f32 %v1320, %v1348
      %v1357 = vadd.f32 %v1323, %v1349
      %v1358 = vmul.f32 %v1350, 0.7978846
      %v1359 = vmul.f32 %v1351, 0.7978846
      %v1360 = vmul.f32 %v1352, 0.7978846
      %v1361 = vmul.f32 %v1353, 0.7978846
      %v1362 = vmul.f32 %v1354, 0.7978846
      %v1363 = vmul.f32 %v1355, 0.7978846
      %v1364 = vmul.f32 %v1356, 0.7978846
      %v1365 = vmul.f32 %v1357, 0.7978846
      %v1366 = vtanh.pop %v1358
      %v1367 = vtanh.pop %v1359
      %v1368 = vtanh.pop %v1360
      %v1369 = vtanh.pop %v1361
      %v1370 = vtanh.pop %v1362
      %v1371 = vtanh.pop %v1363
      %v1372 = vtanh.pop %v1364
      %v1373 = vtanh.pop %v1365
      %v1374 = vadd.f32 %v1366, 1.0
      %v1375 = vadd.f32 %v1367, 1.0
      %v1376 = vadd.f32 %v1368, 1.0
      %v1377 = vadd.f32 %v1369, 1.0
      %v1378 = vadd.f32 %v1370, 1.0
      %v1379 = vadd.f32 %v1371, 1.0
      %v1380 = vadd.f32 %v1372, 1.0
      %v1381 = vadd.f32 %v1373, 1.0
      %v1382 = vmul.f32 %v1374, 0.5
      %v1383 = vmul.f32 %v1375, 0.5
      %v1384 = vmul.f32 %v1376, 0.5
      %v1385 = vmul.f32 %v1377, 0.5
      %v1386 = vmul.f32 %v1378, 0.5
      %v1387 = vmul.f32 %v1379, 0.5
      %v1388 = vmul.f32 %v1380, 0.5
      %v1389 = vmul.f32 %v1381, 0.5
      %v1390 = vmul.f32 %v1296, %v1382
      %v1391 = vmul.f32 %v1299, %v1383
      %v1392 = vmul.f32 %v1304, %v1384
      %v1393 = vmul.f32 %v1307, %v1385
      %v1394 = vmul.f32 %v1312, %v1386
      %v1395 = vmul.f32 %v1315, %v1387
      %v1396 = vmul.f32 %v1320, %v1388
      %v1397 = vmul.f32 %v1323, %v1389
      %v1398 = vadd.f32 %v1390, %v469
      %v1399 = vadd.f32 %v1391, %v470
      %v1400 = vadd.f32 %v1392, %v471
      %v1401 = vadd.f32 %v1393, %v472
      %v1402 = vadd.f32 %v1394, %v473
      %v1403 = vadd.f32 %v1395, %v474
      %v1404 = vadd.f32 %v1396, %v475
      %v1405 = vadd.f32 %v1397, %v476
      %1406 = vst.msk [vmem:[#allocation2] sm:$0xff] %vm529, %v1398
      %1407 = vst.msk [vmem:[#allocation2 + $0x8] sm:$0xff] %vm529, %v1399
      %1408 = vst.msk [vmem:[#allocation2 + $0x10] sm:$0xff] %vm529, %v1400
      %1409 = vst.msk [vmem:[#allocation2 + $0x18] sm:$0xff] %vm529, %v1401
      %1410 = vst.msk [vmem:[#allocation2 + $0x20] sm:$0xff] %vm529, %v1402
      %1411 = vst.msk [vmem:[#allocation2 + $0x28] sm:$0xff] %vm529, %v1403
      %1412 = vst.msk [vmem:[#allocation2 + $0x30] sm:$0xff] %vm529, %v1404
      %1413 = vst.msk [vmem:[#allocation2 + $0x38] sm:$0xff] %vm529, %v1405
      %v1414 = vpack.c.bf16 %v1399, %v1398
      %v1415 = vpack.c.bf16 %v1401, %v1400
      %v1416 = vpack.c.bf16 %v1403, %v1402
      %v1417 = vpack.c.bf16 %v1405, %v1404
      %v1418 = vld [vmem:[%s433] sm:$0xff]
      %v1419 = vld [vmem:[%s433 + $0x8] sm:$0xff]
      %v1420 = vld [vmem:[%s433 + $0x10] sm:$0xff]
      %v1421 = vld [vmem:[%s433 + $0x18] sm:$0xff]
      %v1422 = vld [vmem:[%s433 + $0x20] sm:$0xff]
      %v1423 = vld [vmem:[%s433 + $0x28] sm:$0xff]
      %v1424 = vld [vmem:[%s433 + $0x30] sm:$0xff]
      %v1425 = vld [vmem:[%s433 + $0x38] sm:$0xff]
      %v1426 = vld [vmem:[%s437] sm:$0x3]
      %v1428 = vlaneseq
      %v1429 = vshrl.u32 %v1428, 7
      %v1430 = vsub.s32 0, %v1429
      %v1431 = vrot.slane %v1426, %v1430
      %v1432 = vlaneseq
      %v1433 = vshrl.u32 %v1432, 7
      %v1434 = vsub.s32 1, %v1433
      %v1435 = vrot.slane %v1426, %v1434
      %v1446 = vunpack.c.l.b16 %v1418
      %v1447 = vunpack.c.h.b16 %v1418
      %v1448 = vunpack.c.l.b16 %v1419
      %v1449 = vunpack.c.h.b16 %v1419
      %v1450 = vunpack.c.l.b16 %v1420
      %v1451 = vunpack.c.h.b16 %v1420
      %v1452 = vunpack.c.l.b16 %v1421
      %v1453 = vunpack.c.h.b16 %v1421
      %v1454 = vunpack.c.l.b16 %v1422
      %v1455 = vunpack.c.h.b16 %v1422
      %v1456 = vunpack.c.l.b16 %v1423
      %v1457 = vunpack.c.h.b16 %v1423
      %v1458 = vunpack.c.l.b16 %v1424
      %v1459 = vunpack.c.h.b16 %v1424
      %v1460 = vunpack.c.l.b16 %v1425
      %v1461 = vunpack.c.h.b16 %v1425
      %v1462 = vpack.c.b16 %v1448, %v1446
      %v1463 = vpack.c.b16 %v1449, %v1447
      %v1464 = vpack.c.b16 %v1452, %v1450
      %v1465 = vpack.c.b16 %v1453, %v1451
      %v1466 = vpack.c.b16 %v1456, %v1454
      %v1467 = vpack.c.b16 %v1457, %v1455
      %v1468 = vpack.c.b16 %v1460, %v1458
      %v1469 = vpack.c.b16 %v1461, %v1459
      %v1479 = vsel %vm529, %v1414, 0
      %v1482 = vsel %vm529, %v1415, 0
      %v1485 = vsel %vm529, %v1416, 0
      %v1488 = vsel %vm529, %v1417, 0
      %1490 = vmatprep.subr.bf16.mxu0 %v1463
      %1491 = vmatpush1.bf16.msra.mxu0 %v1462
      %1492 = vmatprep.subr.bf16.mxu0 %v1465
      %1493 = vmatpush1.bf16.msra.mxu0 %v1464
      %1494 = vmatprep.subr.bf16.mxu0 %v1467
      %1495 = vmatpush1.bf16.msra.mxu0 %v1466
      %1496 = vmatprep.subr.bf16.mxu0 %v1469
      %1497 = vmatpush1.bf16.msra.mxu0 %v1468
      %1498 = vmatprep.subr.bf16.mxu0 0
      %1499 = vmatpush1.bf16.msra.mxu0 0
      %1500 = vmatprep.subr.bf16.mxu0 0
      %1501 = vmatpush1.bf16.msra.mxu0 0
      %1502 = vmatprep.subr.bf16.mxu0 0
      %1503 = vmatpush1.bf16.msra.mxu0 0
      %1504 = vmatprep.subr.bf16.mxu0 0
      %1505 = vmatpush1.bf16.msra.mxu0 0
      %1506 = vmatprep.subr.bf16.mxu0 0
      %1507 = vmatpush1.bf16.msra.mxu0 0
      %1508 = vmatprep.subr.bf16.mxu0 0
      %1509 = vmatpush1.bf16.msra.mxu0 0
      %1510 = vmatprep.subr.bf16.mxu0 0
      %1511 = vmatpush1.bf16.msra.mxu0 0
      %1512 = vmatprep.subr.bf16.mxu0 0
      %1513 = vmatpush1.bf16.msra.mxu0 0
      %1514 = vmatprep.subr.bf16.mxu0 0
      %1515 = vmatpush1.bf16.msra.mxu0 0
      %1516 = vmatprep.subr.bf16.mxu0 0
      %1517 = vmatpush1.bf16.msra.mxu0 0
      %1518 = vmatprep.subr.bf16.mxu0 0
      %1519 = vmatpush1.bf16.msra.mxu0 0
      %1520 = vmatprep.subr.bf16.mxu0 0
      %1521 = vmatpush1.bf16.msra.mxu0 0
      %1522 = vmatprep.mubr.bf16.mxu0 0
      %1523 = vmatmul.mubr.bf16.gmra.mrb[0].mxu0 %v1479
      %v1524 = vpop.f32.mrb[0].mxu0
      %v1525 = vadd.f32 %v1431, %v1524
      %v1526 = vpop.f32.mrb[0].mxu0
      %v1527 = vadd.f32 %v1435, %v1526
      %v1528 = vpop.f32.mrb[0].mxu0
      %v1529 = vadd.f32 %v1431, %v1528
      %v1530 = vpop.f32.mrb[0].mxu0
      %v1531 = vadd.f32 %v1435, %v1530
      %1532 = vmatprep.mubr.bf16.mxu0 0
      %1533 = vmatmul.mubr.bf16.gmra.mrb[0].mxu0 %v1482
      %v1534 = vpop.f32.mrb[0].mxu0
      %v1535 = vadd.f32 %v1431, %v1534
      %v1536 = vpop.f32.mrb[0].mxu0
      %v1537 = vadd.f32 %v1435, %v1536
      %v1538 = vpop.f32.mrb[0].mxu0
      %v1539 = vadd.f32 %v1431, %v1538
      %v1540 = vpop.f32.mrb[0].mxu0
      %v1541 = vadd.f32 %v1435, %v1540
      %1542 = vmatprep.mubr.bf16.mxu0 0
      %1543 = vmatmul.mubr.bf16.gmra.mrb[0].mxu0 %v1485
      %v1544 = vpop.f32.mrb[0].mxu0
      %v1545 = vadd.f32 %v1431, %v1544
      %v1546 = vpop.f32.mrb[0].mxu0
      %v1547 = vadd.f32 %v1435, %v1546
      %v1548 = vpop.f32.mrb[0].mxu0
      %v1549 = vadd.f32 %v1431, %v1548
      %v1550 = vpop.f32.mrb[0].mxu0
      %v1551 = vadd.f32 %v1435, %v1550
      %1552 = vmatprep.mubr.bf16.mxu0 0
      %1553 = vmatmul.mubr.bf16.gmra.mrb[0].mxu0 %v1488
      %v1554 = vpop.f32.mrb[0].mxu0
      %v1555 = vadd.f32 %v1431, %v1554
      %v1556 = vpop.f32.mrb[0].mxu0
      %v1557 = vadd.f32 %v1435, %v1556
      %v1558 = vpop.f32.mrb[0].mxu0
      %v1559 = vadd.f32 %v1431, %v1558
      %v1560 = vpop.f32.mrb[0].mxu0
      %v1561 = vadd.f32 %v1435, %v1560
      %1562 = vdwg.mxu0
      %1563 = vst [vmem:[%s446] sm:$0xff] %v1525
      %1564 = vst [vmem:[%s446 + $0x8] sm:$0xff] %v1527
      %1565 = vst [vmem:[%s446 + $0x10] sm:$0xff] %v1529
      %1566 = vst [vmem:[%s446 + $0x18] sm:$0xff] %v1531
      %1567 = vst [vmem:[%s446 + $0x20] sm:$0xff] %v1535
      %1568 = vst [vmem:[%s446 + $0x28] sm:$0xff] %v1537
      %1569 = vst [vmem:[%s446 + $0x30] sm:$0xff] %v1539
      %1570 = vst [vmem:[%s446 + $0x38] sm:$0xff] %v1541
      %1571 = vst [vmem:[%s446 + $0x40] sm:$0xff] %v1545
      %1572 = vst [vmem:[%s446 + $0x48] sm:$0xff] %v1547
      %1573 = vst [vmem:[%s446 + $0x50] sm:$0xff] %v1549
      %1574 = vst [vmem:[%s446 + $0x58] sm:$0xff] %v1551
      %1575 = vst [vmem:[%s446 + $0x60] sm:$0xff] %v1555
      %1576 = vst [vmem:[%s446 + $0x68] sm:$0xff] %v1557
      %1577 = vst [vmem:[%s446 + $0x70] sm:$0xff] %v1559
      %1578 = vst [vmem:[%s446 + $0x78] sm:$0xff] %v1561
      %p1579 = scmp.lt.s32.totalorder %s23, 0
      %s1580 = scalar_select %p1579, %s23, 0
      %p1581 = scmp.lt.s32.totalorder %s24, 4
      %s1582 = scalar_select %p1581, %s24, 4
      %s1583 = smul.addr %s1582, 16
      %s1584 = smul.addr %s1580, 80
      %s1585 = sadd.s32 %s1583, %s1584
      %s1586 = smul.addr %s1585, 8
      %s1587 = scalar_lea.vmem %s8, %s1586
      // Predicated region
      $region57: #{tsmlrtas_forward.3} parent=51 // pred_check
        %p1588 = pneg %p259
      $region58: #{tsmlrtas_forward.3} parent=51 // pred_check_branch
        %1590 = sbr.rel (%p1588) target = $region60
      $region59: #{tsmlrtas_forward.3} parent=51 // pred_region
        _
      $region60: #{tsmlrtas_forward.3} parent=51 // pred_fallthru
        _
    $region52: #{tsmlrtas_forward.3} parent=5 // pred_fallthru
      _
    %p1591 = scmp.le.s32.totalorder 2, %s14
    // Predicated region
    $region61: #{tsmlrtas_forward.3} parent=5 // pred_check
      %p1592 = pneg %p1591
    $region62: #{tsmlrtas_forward.3} parent=5 // pred_check_branch
      %1594 = sbr.rel (%p1592) target = $region64
    $region63: #{tsmlrtas_forward.3} parent=5 // pred_region
      %s1595 = ssub.s32 %s14, 2
      // Predicated region
      $region65: #{tsmlrtas_forward.3} parent=63 // pred_check
        %p1596 = pneg %p265
      $region66: #{tsmlrtas_forward.3} parent=63 // pred_check_branch
        %1598 = sbr.rel (%p1596) target = $region68
      $region67: #{tsmlrtas_forward.3} parent=63 // pred_region
        %p1599 = scmp.lt.s32.totalorder %s25, 0
        %s1600 = scalar_select %p1599, %s25, 0
        %p1601 = scmp.lt.s32.totalorder %s26, 4
        %s1602 = scalar_select %p1601, %s26, 4
        %s1603 = smul.addr %s1602, 16
        %s1604 = smul.addr %s1600, 80
        %s1605 = sadd.s32 %s1603, %s1604
        %s1606 = smul.addr %s1605, 8
        %s1607 = scalar_lea.vmem %s8, %s1606
      $region68: #{tsmlrtas_forward.3} parent=63 // pred_fallthru
        _
    $region64: #{tsmlrtas_forward.3} parent=5 // pred_fallthru
      _
  $region6: #{tsmlrtas_forward.3} parent=0 // loop_footer
    %s18 = sadd.s32 1, %s14
  $region7: #{tsmlrtas_forward.3} parent=0 // loop_footer_branch
    %13 = sbr.rel target = $region3
  $region8: #{tsmlrtas_forward.3} parent=0 // loop_exit
    _

</llo_original>
